<compile_context>
chip_gen: v7x
topology: tpu7x:2x2x1
jax: 0.10.0
libtpu: 0.0.40
codegen_flags: <defaults>
</compile_context>

<pallas_src>
import functools
import math

import jax
import jax.numpy as jnp
from jax.experimental import pallas as pl
from jax.experimental.pallas import tpu as pltpu


def block_kernel(x_ref, ln1_g_ref, ln1_b_ref,
                 wqkv_ref, bqkv_ref, wap_ref, bap_ref,
                 ln2_g_ref, ln2_b_ref, wfc_ref, bfc_ref, wmp_ref, bmp_ref,
                 o_ref, ln1_scr, acc_scr, y_scr,
                 *, head_dim, heads_per_group, mlp_tile):
    f32 = jnp.float32
    bf16 = jnp.bfloat16
    eps = 1e-5
    D = head_dim
    Hb = heads_per_group
    HbD = Hb * D
    g = pl.program_id(1)                    # head-group index (reduction axis)
    T, C = x_ref.shape                      # batch dim is Squeezed -> (T, C)

    def layernorm(v, gamma, beta):
        mu = jnp.mean(v, axis=-1, keepdims=True)
        var = jnp.mean((v - mu) ** 2, axis=-1, keepdims=True)
        return (v - mu) * jax.lax.rsqrt(var + eps) * gamma + beta

    # ---- per-batch init (first head group): cache LN1(x) once, in bf16 ----
    @pl.when(g == 0)
    def _init():
        ln1 = layernorm(x_ref[...].astype(f32), ln1_g_ref[...], ln1_b_ref[...])
        ln1_scr[...] = ln1.astype(bf16)

    # ---- fused QKV projection for the whole head group: one wide MXU matmul ----
    ln1_lo = ln1_scr[...]                                            # (T, C) bf16
    qkv = jnp.dot(ln1_lo, wqkv_ref[...], preferred_element_type=f32) + bqkv_ref[...]
    q_all = qkv[:, 0 * HbD:1 * HbD] * (1.0 / math.sqrt(D))           # scale folded into q
    k_all = qkv[:, 1 * HbD:2 * HbD]
    v_all = qkv[:, 2 * HbD:3 * HbD]

    # causal mask computed once per grid step (shared by every head in the group)
    row = jax.lax.broadcasted_iota(jnp.int32, (T, T), 0)
    col = jax.lax.broadcasted_iota(jnp.int32, (T, T), 1)
    causal = col <= row

    # ---- per-head scores / softmax / PV (small unrolled loop over the group) ----
    for hh in range(Hb):
        lo = hh * D
        q_h = q_all[:, lo:lo + D].astype(bf16)
        k_h = k_all[:, lo:lo + D].astype(bf16)
        v_h = v_all[:, lo:lo + D].astype(bf16)
        # scores = q @ k^T without an explicit transpose: contract on the D axis
        s = jax.lax.dot_general(q_h, k_h, (((1,), (1,)), ((), ())),
                                preferred_element_type=f32)          # (T, T) f32
        s = jnp.where(causal, s, -1e30)
        s = s - jnp.max(s, axis=-1, keepdims=True)
        p = jnp.exp(s)
        p = p * pl.reciprocal(jnp.sum(p, axis=-1, keepdims=True), approx=True)
        y_h = jnp.dot(p.astype(bf16), v_h, preferred_element_type=f32)   # (T, D)
        y_scr[:, lo:lo + D] = y_h.astype(bf16)

    # ---- wide out-projection for the whole group (K-dim = Hb*D) ----
    proj = jnp.dot(y_scr[...], wap_ref[...], preferred_element_type=f32)  # (T, C) f32

    @pl.when(g == 0)
    def _seed():                            # direct write, seeded with the proj bias
        acc_scr[...] = proj + bap_ref[...]

    @pl.when(g > 0)
    def _accum():
        acc_scr[...] += proj

    # ---- finalize (last head group): residual + LN2 + tiled MLP + residual ----
    @pl.when(g == pl.num_programs(1) - 1)
    def _finish():
        x = x_ref[...].astype(f32)
        x1 = x + acc_scr[...]
        ln2 = layernorm(x1, ln2_g_ref[...], ln2_b_ref[...]).astype(bf16)
        hidden = wfc_ref.shape[-1]
        c0 = math.sqrt(2.0 / math.pi)
        m = jnp.zeros((T, C), f32)
        for t in range(hidden // mlp_tile):            # tile the 4C hidden dimension
            s0 = t * mlp_tile
            h_t = (jnp.dot(ln2, wfc_ref[:, s0:s0 + mlp_tile],
                           preferred_element_type=f32)
                   + bfc_ref[:, s0:s0 + mlp_tile])
            g_t = 0.5 * h_t * (1.0 + jnp.tanh(c0 * (h_t + 0.044715 * h_t * h_t * h_t)))
            m = m + jnp.dot(g_t.astype(bf16), wmp_ref[s0:s0 + mlp_tile, :],
                            preferred_element_type=f32)
        o_ref[...] = (x1 + m + bmp_ref[...]).astype(o_ref.dtype)


def _pick_group_size(n_head, head_dim):
    # Largest divisor of n_head whose group width head_dim*Hb stays <= 256 lanes.
    target = max(1, 256 // head_dim)
    hb = 1
    for cand in range(1, n_head + 1):
        if n_head % cand == 0 and cand <= target:
            hb = cand
    return hb


def _vmem_limit_bytes():
    # Generation-aware VMEM budget: ~3/4 of per-core capacity, capped at 100 MiB
    # (=> ~48 MiB on v7x, ~96 MiB on v5e/v6e).  None -> compiler default.
    try:
        cap = int(pltpu.get_tpu_info().vmem_capacity_bytes)
    except Exception:
        return None
    return min((cap * 3) // 4, 100 * 1024 * 1024)


def block_forward(x, params, n_head):
    (ln1_g, ln1_b, w_attn, b_attn, w_ap, b_ap,
     ln2_g, ln2_b, w_fc, b_fc, w_mp, b_mp) = params
    B, T, C = x.shape
    H = n_head
    D = C // H
    Hb = _pick_group_size(H, D)
    G = H // Hb
    HbD = Hb * D
    bf16 = jnp.bfloat16

    # ---- head-group weight re-arrangement + bf16 cast (pure JAX, outside kernel) ----
    def group_w(w):                                    # (C, C) -> (G, C, Hb*D)
        return jnp.transpose(w.reshape(C, G, HbD), (1, 0, 2))

    def group_b(b):                                    # (C,) -> (G, 1, Hb*D)
        return b.reshape(G, 1, HbD)

    w_qkv_g = jnp.concatenate(
        [group_w(w_attn[:, 0 * C:1 * C]),
         group_w(w_attn[:, 1 * C:2 * C]),
         group_w(w_attn[:, 2 * C:3 * C])], axis=-1).astype(bf16)     # (G, C, 3*Hb*D)
    b_qkv_g = jnp.concatenate(
        [group_b(b_attn[0, 0 * C:1 * C]),
         group_b(b_attn[0, 1 * C:2 * C]),
         group_b(b_attn[0, 2 * C:3 * C])], axis=-1)                  # (G, 1, 3*Hb*D) f32
    w_ap_g = w_ap.reshape(G, HbD, C).astype(bf16)                    # (G, Hb*D, C)
    w_fc_b = w_fc.astype(bf16)                                       # (C, 4C)
    w_mp_b = w_mp.astype(bf16)                                       # (4C, C)

    mlp_tile = min(4 * C, 512)
    assert (4 * C) % mlp_tile == 0

    kernel = functools.partial(block_kernel, head_dim=D,
                               heads_per_group=Hb, mlp_tile=mlp_tile)

    def run(single_buffer_consts):
        const_mode = {}
        if single_buffer_consts:
            # Constant index_map -> the default second pipeline buffer is dead VMEM.
            const_mode = dict(pipeline_mode=pl.Buffered(1))

        def const_spec(a):      # all constants are 2-D: (1, C), (C, 4C), ...
            return pl.BlockSpec(a.shape, lambda b, g: (0, 0), **const_mode)

        def grouped_spec(a):    # (G, ...) per-head-group operands
            return pl.BlockSpec((pl.Squeezed(),) + a.shape[1:], lambda b, g: (g, 0, 0))

        grid_spec = pltpu.PrefetchScalarGridSpec(
            num_scalar_prefetch=0,
            grid=(B, G),
            in_specs=[
                pl.BlockSpec((pl.Squeezed(), T, C), lambda b, g: (b, 0, 0)),   # x
                const_spec(ln1_g), const_spec(ln1_b),
                grouped_spec(w_qkv_g), grouped_spec(b_qkv_g), grouped_spec(w_ap_g),
                const_spec(b_ap),
                const_spec(ln2_g), const_spec(ln2_b),
                const_spec(w_fc_b), const_spec(b_fc),
                const_spec(w_mp_b), const_spec(b_mp),
            ],
            out_specs=pl.BlockSpec((pl.Squeezed(), T, C), lambda b, g: (b, 0, 0)),
            scratch_shapes=[
                pltpu.VMEM((T, C), jnp.bfloat16),     # cached LN1(x), bf16
                pltpu.VMEM((T, C), jnp.float32),      # attention out-proj accumulator
                pltpu.VMEM((T, HbD), jnp.bfloat16),   # per-group head outputs
            ],
        )
        return pl.pallas_call(
            kernel,
            out_shape=jax.ShapeDtypeStruct((B, T, C), x.dtype),
            grid_spec=grid_spec,
            compiler_params=pltpu.CompilerParams(
                dimension_semantics=("parallel", "arbitrary"),
                vmem_limit_bytes=_vmem_limit_bytes(),
            ),
        )(x, ln1_g, ln1_b, w_qkv_g, b_qkv_g, w_ap_g, b_ap,
          ln2_g, ln2_b, w_fc_b, b_fc, w_mp_b, b_mp)

    try:
        return run(True)
    except Exception:
        # pl.Buffered(1) rejected by this jax/mosaic build -> default pipeline buffers.
        return run(False)


def init_params(key, n_embd):
    ks = jax.random.split(key, 4)
    f32 = jnp.float32
    ln1_g = jnp.ones((1, n_embd), f32)
    ln1_b = jnp.zeros((1, n_embd), f32)
    w_attn = 0.02 * jax.random.normal(ks[0], (n_embd, 3 * n_embd), f32)
    b_attn = jnp.zeros((1, 3 * n_embd), f32)
    w_attn_proj = 0.02 * jax.random.normal(ks[1], (n_embd, n_embd), f32)
    b_attn_proj = jnp.zeros((1, n_embd), f32)
    ln2_g = jnp.ones((1, n_embd), f32)
    ln2_b = jnp.zeros((1, n_embd), f32)
    w_fc = 0.02 * jax.random.normal(ks[2], (n_embd, 4 * n_embd), f32)
    b_fc = jnp.zeros((1, 4 * n_embd), f32)
    w_mlp_proj = 0.02 * jax.random.normal(ks[3], (4 * n_embd, n_embd), f32)
    b_mlp_proj = jnp.zeros((1, n_embd), f32)
    return [ln1_g, ln1_b, w_attn, b_attn, w_attn_proj, b_attn_proj,
            ln2_g, ln2_b, w_fc, b_fc, w_mlp_proj, b_mlp_proj]


def block_reference(x, params, n_head):
    (ln1_g, ln1_b, w_attn, b_attn, w_ap, b_ap,
     ln2_g, ln2_b, w_fc, b_fc, w_mp, b_mp) = params
    B, T, C = x.shape
    D = C // n_head

    def ln(v, g, b):
        mu = jnp.mean(v, -1, keepdims=True)
        var = jnp.mean((v - mu) ** 2, -1, keepdims=True)
        return (v - mu) * jax.lax.rsqrt(var + 1e-5) * g + b

    h = ln(x, ln1_g[0], ln1_b[0])
    qkv = h @ w_attn + b_attn[0]
    q, k, v = jnp.split(qkv, 3, axis=-1)
    q = q.reshape(B, T, n_head, D).transpose(0, 2, 1, 3)
    k = k.reshape(B, T, n_head, D).transpose(0, 2, 1, 3)
    v = v.reshape(B, T, n_head, D).transpose(0, 2, 1, 3)
    s = jnp.einsum('bhqd,bhkd->bhqk', q, k) / math.sqrt(D)
    mask = jnp.tril(jnp.ones((T, T), bool))
    s = jnp.where(mask, s, -1e30)
    p = jax.nn.softmax(s, axis=-1)
    y = jnp.einsum('bhqk,bhkd->bhqd', p, v).transpose(0, 2, 1, 3).reshape(B, T, C)
    y = y @ w_ap + b_ap[0]
    x1 = x + y
    h2 = ln(x1, ln2_g[0], ln2_b[0])
    hf = h2 @ w_fc + b_fc[0]
    c0 = math.sqrt(2.0 / math.pi)
    g = 0.5 * hf * (1.0 + jnp.tanh(c0 * (hf + 0.044715 * hf ** 3)))
    return x1 + (g @ w_mp + b_mp[0])


if __name__ == "__main__":
    # Small but lane-aligned config: C multiple of 128, T multiple of 8.
    B, T, C, n_head = 2, 8, 128, 4      # block_size == T == 8, head_dim = 32
    key = jax.random.PRNGKey(0)
    kx, kp = jax.random.split(key)
    x = jax.random.normal(kx, (B, T, C), jnp.float32)
    params = init_params(kp, C)

    out = jax.block_until_ready(block_forward(x, params, n_head))
    ref = block_reference(x, params, n_head)

    assert out.shape == (B, T, C)
    max_err = float(jnp.max(jnp.abs(out - ref)))
    # bf16 matmul operands + approx reciprocal => slightly looser tolerance than pure f32
    assert jnp.allclose(out, ref, atol=2e-2, rtol=2e-2), max_err
    print("KERNEL_OK")
</pallas_src>

<mosaic_0001>
module attributes {stable_mosaic.version = 11 : i64} {
  func.func @block_kernel(%arg0: i32, %arg1: i32, %arg2: memref<1x8x128xf32, #tpu.memory_space<vmem>>, %arg3: memref<1x128xf32, #tpu.memory_space<vmem>>, %arg4: memref<1x128xf32, #tpu.memory_space<vmem>>, %arg5: memref<1x128x384xbf16, #tpu.memory_space<vmem>>, %arg6: memref<1x1x384xf32, #tpu.memory_space<vmem>>, %arg7: memref<1x128x128xbf16, #tpu.memory_space<vmem>>, %arg8: memref<1x128xf32, #tpu.memory_space<vmem>>, %arg9: memref<1x128xf32, #tpu.memory_space<vmem>>, %arg10: memref<1x128xf32, #tpu.memory_space<vmem>>, %arg11: memref<128x512xbf16, #tpu.memory_space<vmem>>, %arg12: memref<1x512xf32, #tpu.memory_space<vmem>>, %arg13: memref<512x128xbf16, #tpu.memory_space<vmem>>, %arg14: memref<1x128xf32, #tpu.memory_space<vmem>>, %arg15: memref<1x8x128xf32, #tpu.memory_space<vmem>>, %arg16: memref<8x128xbf16, #tpu.memory_space<vmem>>, %arg17: memref<8x128xf32, #tpu.memory_space<vmem>>, %arg18: memref<8x128xbf16, #tpu.memory_space<vmem>>) attributes {dimension_semantics = [#tpu.dimension_semantics<parallel>, #tpu.dimension_semantics<arbitrary>], iteration_bounds = array<i64: 2, 1>, scalar_prefetch = 0 : i64, scratch_operands = 3 : i64, tpu.core_type = #tpu.core_type<tc>, window_params = [{transform_indices = @transform_0, window_bounds = array<i64: 1, 8, 128>}, {pipeline_mode = #tpu.pipeline_mode<synchronous>, transform_indices = @transform_1, window_bounds = array<i64: 1, 128>}, {pipeline_mode = #tpu.pipeline_mode<synchronous>, transform_indices = @transform_2, window_bounds = array<i64: 1, 128>}, {transform_indices = @transform_3, window_bounds = array<i64: 1, 128, 384>}, {transform_indices = @transform_4, window_bounds = array<i64: 1, 1, 384>}, {transform_indices = @transform_5, window_bounds = array<i64: 1, 128, 128>}, {pipeline_mode = #tpu.pipeline_mode<synchronous>, transform_indices = @transform_6, window_bounds = array<i64: 1, 128>}, {pipeline_mode = #tpu.pipeline_mode<synchronous>, transform_indices = @transform_7, window_bounds = array<i64: 1, 128>}, {pipeline_mode = #tpu.pipeline_mode<synchronous>, transform_indices = @transform_8, window_bounds = array<i64: 1, 128>}, {pipeline_mode = #tpu.pipeline_mode<synchronous>, transform_indices = @transform_9, window_bounds = array<i64: 128, 512>}, {pipeline_mode = #tpu.pipeline_mode<synchronous>, transform_indices = @transform_10, window_bounds = array<i64: 1, 512>}, {pipeline_mode = #tpu.pipeline_mode<synchronous>, transform_indices = @transform_11, window_bounds = array<i64: 512, 128>}, {pipeline_mode = #tpu.pipeline_mode<synchronous>, transform_indices = @transform_12, window_bounds = array<i64: 1, 128>}, {transform_indices = @transform_13, window_bounds = array<i64: 1, 8, 128>}]} {
    %c0_i32 = arith.constant 0 : i32
    %0 = arith.cmpi eq, %arg1, %c0_i32 : i32
    %1 = arith.extui %0 : i1 to i32
    %c0_i32_0 = arith.constant 0 : i32
    %2 = arith.cmpi ne, %1, %c0_i32_0 : i32
    scf.if %2 {
      %c0_46 = arith.constant 0 : index
      %c0_47 = arith.constant 0 : index
      %c0_48 = arith.constant 0 : index
      %124 = vector.load %arg2[%c0_46, %c0_47, %c0_48] : memref<1x8x128xf32, #tpu.memory_space<vmem>>, vector<1x8x128xf32>
      %125 = vector.shape_cast %124 : vector<1x8x128xf32> to vector<8x128xf32>
      %c0_49 = arith.constant 0 : index
      %c0_50 = arith.constant 0 : index
      %126 = vector.load %arg3[%c0_49, %c0_50] : memref<1x128xf32, #tpu.memory_space<vmem>>, vector<1x128xf32>
      %c0_51 = arith.constant 0 : index
      %c0_52 = arith.constant 0 : index
      %127 = vector.load %arg4[%c0_51, %c0_52] : memref<1x128xf32, #tpu.memory_space<vmem>>, vector<1x128xf32>
      %cst_53 = arith.constant dense<0.000000e+00> : vector<8xf32>
      %128 = vector.multi_reduction <add>, %125, %cst_53 [1] : vector<8x128xf32> to vector<8xf32>
      %129 = vector.shape_cast %128 : vector<8xf32> to vector<8x1xf32>
      %cst_54 = arith.constant 1.280000e+02 : f32
      %130 = vector.broadcast %cst_54 : f32 to vector<8x1xf32>
      %131 = arith.divf %129, %130 : vector<8x1xf32>
      %132 = vector.broadcast %131 : vector<8x1xf32> to vector<8x128xf32>
      %133 = arith.subf %125, %132 : vector<8x128xf32>
      %134 = arith.mulf %133, %133 : vector<8x128xf32>
      %cst_55 = arith.constant dense<0.000000e+00> : vector<8xf32>
      %135 = vector.multi_reduction <add>, %134, %cst_55 [1] : vector<8x128xf32> to vector<8xf32>
      %136 = vector.shape_cast %135 : vector<8xf32> to vector<8x1xf32>
      %cst_56 = arith.constant 1.280000e+02 : f32
      %137 = vector.broadcast %cst_56 : f32 to vector<8x1xf32>
      %138 = arith.divf %136, %137 : vector<8x1xf32>
      %139 = vector.broadcast %131 : vector<8x1xf32> to vector<8x128xf32>
      %140 = arith.subf %125, %139 : vector<8x128xf32>
      %cst_57 = arith.constant 9.99999974E-6 : f32
      %141 = vector.broadcast %cst_57 : f32 to vector<8x1xf32>
      %142 = arith.addf %138, %141 : vector<8x1xf32>
      %143 = math.rsqrt %142 : vector<8x1xf32>
      %144 = vector.broadcast %143 : vector<8x1xf32> to vector<8x128xf32>
      %145 = arith.mulf %140, %144 : vector<8x128xf32>
      %146 = vector.broadcast %126 : vector<1x128xf32> to vector<8x128xf32>
      %147 = arith.mulf %145, %146 : vector<8x128xf32>
      %148 = vector.broadcast %127 : vector<1x128xf32> to vector<8x128xf32>
      %149 = arith.addf %147, %148 : vector<8x128xf32>
      %150 = arith.truncf %149 : vector<8x128xf32> to vector<8x128xbf16>
      %c0_58 = arith.constant 0 : index
      %c0_59 = arith.constant 0 : index
      %151 = vector.load %arg16[%c0_58, %c0_59] : memref<8x128xbf16, #tpu.memory_space<vmem>>, vector<8x128xbf16>
      tpu.vector_store %arg16[%c0_58, %c0_59], %150 {strides = array<i32>} : memref<8x128xbf16, #tpu.memory_space<vmem>>, vector<8x128xbf16>,
    } else {
    }
    %c0 = arith.constant 0 : index
    %c0_1 = arith.constant 0 : index
    %3 = vector.load %arg16[%c0, %c0_1] : memref<8x128xbf16, #tpu.memory_space<vmem>>, vector<8x128xbf16>
    %c0_2 = arith.constant 0 : index
    %c0_3 = arith.constant 0 : index
    %c0_4 = arith.constant 0 : index
    %4 = vector.load %arg5[%c0_2, %c0_3, %c0_4] : memref<1x128x384xbf16, #tpu.memory_space<vmem>>, vector<1x128x384xbf16>
    %5 = vector.shape_cast %4 : vector<1x128x384xbf16> to vector<128x384xbf16>
    %cst = arith.constant dense<0.000000e+00> : vector<8x384xf32>
    %6 = tpu.matmul %3, %5, %cst {dimension_numbers = #tpu.dot_dimension_numbers<[1], [0], [0], [1], [0, 0, 1, 1], [], []>} : vector<8x128xbf16>, vector<128x384xbf16>, vector<8x384xf32> -> vector<8x384xf32>
    %c0_5 = arith.constant 0 : index
    %c0_6 = arith.constant 0 : index
    %c0_7 = arith.constant 0 : index
    %7 = vector.load %arg6[%c0_5, %c0_6, %c0_7] : memref<1x1x384xf32, #tpu.memory_space<vmem>>, vector<1x1x384xf32>
    %8 = vector.shape_cast %7 : vector<1x1x384xf32> to vector<1x384xf32>
    %9 = vector.broadcast %8 : vector<1x384xf32> to vector<8x384xf32>
    %10 = arith.addf %6, %9 : vector<8x384xf32>
    %11 = vector.extract_strided_slice %10 {offsets = [0, 0], sizes = [8, 128], strides = [1, 1]} : vector<8x384xf32> to vector<8x128xf32>
    %cst_8 = arith.constant 0.176776692 : f32
    %12 = vector.broadcast %cst_8 : f32 to vector<8x128xf32>
    %13 = arith.mulf %11, %12 : vector<8x128xf32>
    %14 = vector.extract_strided_slice %10 {offsets = [0, 128], sizes = [8, 128], strides = [1, 1]} : vector<8x384xf32> to vector<8x128xf32>
    %15 = vector.extract_strided_slice %10 {offsets = [0, 256], sizes = [8, 128], strides = [1, 1]} : vector<8x384xf32> to vector<8x128xf32>
    %16 = tpu.iota {dimensions = array<i32: 0>} : vector<8x8xi32>
    %17 = tpu.iota {dimensions = array<i32: 1>} : vector<8x8xi32>
    %18 = arith.cmpi sle, %17, %16 : vector<8x8xi32>
    %19 = vector.extract_strided_slice %13 {offsets = [0, 0], sizes = [8, 32], strides = [1, 1]} : vector<8x128xf32> to vector<8x32xf32>
    %20 = arith.truncf %19 : vector<8x32xf32> to vector<8x32xbf16>
    %21 = vector.extract_strided_slice %14 {offsets = [0, 0], sizes = [8, 32], strides = [1, 1]} : vector<8x128xf32> to vector<8x32xf32>
    %22 = arith.truncf %21 : vector<8x32xf32> to vector<8x32xbf16>
    %23 = vector.extract_strided_slice %15 {offsets = [0, 0], sizes = [8, 32], strides = [1, 1]} : vector<8x128xf32> to vector<8x32xf32>
    %24 = arith.truncf %23 : vector<8x32xf32> to vector<8x32xbf16>
    %cst_9 = arith.constant dense<0.000000e+00> : vector<8x8xf32>
    %25 = tpu.matmul %20, %22, %cst_9 {dimension_numbers = #tpu.dot_dimension_numbers<[1], [1], [0], [0], [0, 0, 1, 0], [], []>} : vector<8x32xbf16>, vector<8x32xbf16>, vector<8x8xf32> -> vector<8x8xf32>
    %cst_10 = arith.constant -1.000000e+30 : f32
    %26 = vector.broadcast %cst_10 : f32 to vector<8x8xf32>
    %27 = arith.select %18, %25, %26 : vector<8x8xi1>, vector<8x8xf32>
    %cst_11 = arith.constant dense<0xFF800000> : vector<8xf32>
    %28 = vector.multi_reduction <maximumf>, %27, %cst_11 [1] : vector<8x8xf32> to vector<8xf32>
    %29 = vector.shape_cast %28 : vector<8xf32> to vector<8x1xf32>
    %30 = vector.broadcast %29 : vector<8x1xf32> to vector<8x8xf32>
    %31 = arith.subf %27, %30 : vector<8x8xf32>
    %32 = math.exp %31 : vector<8x8xf32>
    %cst_12 = arith.constant dense<0.000000e+00> : vector<8xf32>
    %33 = vector.multi_reduction <add>, %32, %cst_12 [1] : vector<8x8xf32> to vector<8xf32>
    %34 = vector.shape_cast %33 : vector<8xf32> to vector<8x1xf32>
    %35 = tpu.reciprocal %34 {approx = true} : vector<8x1xf32> -> vector<8x1xf32>
    %36 = vector.broadcast %35 : vector<8x1xf32> to vector<8x8xf32>
    %37 = arith.mulf %32, %36 : vector<8x8xf32>
    %38 = arith.truncf %37 : vector<8x8xf32> to vector<8x8xbf16>
    %cst_13 = arith.constant dense<0.000000e+00> : vector<8x32xf32>
    %39 = tpu.matmul %38, %24, %cst_13 {dimension_numbers = #tpu.dot_dimension_numbers<[1], [0], [0], [1], [0, 0, 1, 1], [], []>} : vector<8x8xbf16>, vector<8x32xbf16>, vector<8x32xf32> -> vector<8x32xf32>
    %40 = arith.truncf %39 : vector<8x32xf32> to vector<8x32xbf16>
    %c0_14 = arith.constant 0 : index
    %c0_15 = arith.constant 0 : index
    %41 = vector.load %arg18[%c0_14, %c0_15] : memref<8x128xbf16, #tpu.memory_space<vmem>>, vector<8x32xbf16>
    tpu.vector_store %arg18[%c0_14, %c0_15], %40 {strides = array<i32>} : memref<8x128xbf16, #tpu.memory_space<vmem>>, vector<8x32xbf16>,
    %42 = vector.extract_strided_slice %13 {offsets = [0, 32], sizes = [8, 32], strides = [1, 1]} : vector<8x128xf32> to vector<8x32xf32>
    %43 = arith.truncf %42 : vector<8x32xf32> to vector<8x32xbf16>
    %44 = vector.extract_strided_slice %14 {offsets = [0, 32], sizes = [8, 32], strides = [1, 1]} : vector<8x128xf32> to vector<8x32xf32>
    %45 = arith.truncf %44 : vector<8x32xf32> to vector<8x32xbf16>
    %46 = vector.extract_strided_slice %15 {offsets = [0, 32], sizes = [8, 32], strides = [1, 1]} : vector<8x128xf32> to vector<8x32xf32>
    %47 = arith.truncf %46 : vector<8x32xf32> to vector<8x32xbf16>
    %cst_16 = arith.constant dense<0.000000e+00> : vector<8x8xf32>
    %48 = tpu.matmul %43, %45, %cst_16 {dimension_numbers = #tpu.dot_dimension_numbers<[1], [1], [0], [0], [0, 0, 1, 0], [], []>} : vector<8x32xbf16>, vector<8x32xbf16>, vector<8x8xf32> -> vector<8x8xf32>
    %cst_17 = arith.constant -1.000000e+30 : f32
    %49 = vector.broadcast %cst_17 : f32 to vector<8x8xf32>
    %50 = arith.select %18, %48, %49 : vector<8x8xi1>, vector<8x8xf32>
    %cst_18 = arith.constant dense<0xFF800000> : vector<8xf32>
    %51 = vector.multi_reduction <maximumf>, %50, %cst_18 [1] : vector<8x8xf32> to vector<8xf32>
    %52 = vector.shape_cast %51 : vector<8xf32> to vector<8x1xf32>
    %53 = vector.broadcast %52 : vector<8x1xf32> to vector<8x8xf32>
    %54 = arith.subf %50, %53 : vector<8x8xf32>
    %55 = math.exp %54 : vector<8x8xf32>
    %cst_19 = arith.constant dense<0.000000e+00> : vector<8xf32>
    %56 = vector.multi_reduction <add>, %55, %cst_19 [1] : vector<8x8xf32> to vector<8xf32>
    %57 = vector.shape_cast %56 : vector<8xf32> to vector<8x1xf32>
    %58 = tpu.reciprocal %57 {approx = true} : vector<8x1xf32> -> vector<8x1xf32>
    %59 = vector.broadcast %58 : vector<8x1xf32> to vector<8x8xf32>
    %60 = arith.mulf %55, %59 : vector<8x8xf32>
    %61 = arith.truncf %60 : vector<8x8xf32> to vector<8x8xbf16>
    %cst_20 = arith.constant dense<0.000000e+00> : vector<8x32xf32>
    %62 = tpu.matmul %61, %47, %cst_20 {dimension_numbers = #tpu.dot_dimension_numbers<[1], [0], [0], [1], [0, 0, 1, 1], [], []>} : vector<8x8xbf16>, vector<8x32xbf16>, vector<8x32xf32> -> vector<8x32xf32>
    %63 = arith.truncf %62 : vector<8x32xf32> to vector<8x32xbf16>
    %c0_21 = arith.constant 0 : index
    %c32 = arith.constant 32 : index
    %64 = vector.load %arg18[%c0_21, %c32] : memref<8x128xbf16, #tpu.memory_space<vmem>>, vector<8x32xbf16>
    tpu.vector_store %arg18[%c0_21, %c32], %63 {strides = array<i32>} : memref<8x128xbf16, #tpu.memory_space<vmem>>, vector<8x32xbf16>,
    %65 = vector.extract_strided_slice %13 {offsets = [0, 64], sizes = [8, 32], strides = [1, 1]} : vector<8x128xf32> to vector<8x32xf32>
    %66 = arith.truncf %65 : vector<8x32xf32> to vector<8x32xbf16>
    %67 = vector.extract_strided_slice %14 {offsets = [0, 64], sizes = [8, 32], strides = [1, 1]} : vector<8x128xf32> to vector<8x32xf32>
    %68 = arith.truncf %67 : vector<8x32xf32> to vector<8x32xbf16>
    %69 = vector.extract_strided_slice %15 {offsets = [0, 64], sizes = [8, 32], strides = [1, 1]} : vector<8x128xf32> to vector<8x32xf32>
    %70 = arith.truncf %69 : vector<8x32xf32> to vector<8x32xbf16>
    %cst_22 = arith.constant dense<0.000000e+00> : vector<8x8xf32>
    %71 = tpu.matmul %66, %68, %cst_22 {dimension_numbers = #tpu.dot_dimension_numbers<[1], [1], [0], [0], [0, 0, 1, 0], [], []>} : vector<8x32xbf16>, vector<8x32xbf16>, vector<8x8xf32> -> vector<8x8xf32>
    %cst_23 = arith.constant -1.000000e+30 : f32
    %72 = vector.broadcast %cst_23 : f32 to vector<8x8xf32>
    %73 = arith.select %18, %71, %72 : vector<8x8xi1>, vector<8x8xf32>
    %cst_24 = arith.constant dense<0xFF800000> : vector<8xf32>
    %74 = vector.multi_reduction <maximumf>, %73, %cst_24 [1] : vector<8x8xf32> to vector<8xf32>
    %75 = vector.shape_cast %74 : vector<8xf32> to vector<8x1xf32>
    %76 = vector.broadcast %75 : vector<8x1xf32> to vector<8x8xf32>
    %77 = arith.subf %73, %76 : vector<8x8xf32>
    %78 = math.exp %77 : vector<8x8xf32>
    %cst_25 = arith.constant dense<0.000000e+00> : vector<8xf32>
    %79 = vector.multi_reduction <add>, %78, %cst_25 [1] : vector<8x8xf32> to vector<8xf32>
    %80 = vector.shape_cast %79 : vector<8xf32> to vector<8x1xf32>
    %81 = tpu.reciprocal %80 {approx = true} : vector<8x1xf32> -> vector<8x1xf32>
    %82 = vector.broadcast %81 : vector<8x1xf32> to vector<8x8xf32>
    %83 = arith.mulf %78, %82 : vector<8x8xf32>
    %84 = arith.truncf %83 : vector<8x8xf32> to vector<8x8xbf16>
    %cst_26 = arith.constant dense<0.000000e+00> : vector<8x32xf32>
    %85 = tpu.matmul %84, %70, %cst_26 {dimension_numbers = #tpu.dot_dimension_numbers<[1], [0], [0], [1], [0, 0, 1, 1], [], []>} : vector<8x8xbf16>, vector<8x32xbf16>, vector<8x32xf32> -> vector<8x32xf32>
    %86 = arith.truncf %85 : vector<8x32xf32> to vector<8x32xbf16>
    %c0_27 = arith.constant 0 : index
    %c64 = arith.constant 64 : index
    %87 = vector.load %arg18[%c0_27, %c64] : memref<8x128xbf16, #tpu.memory_space<vmem>>, vector<8x32xbf16>
    tpu.vector_store %arg18[%c0_27, %c64], %86 {strides = array<i32>} : memref<8x128xbf16, #tpu.memory_space<vmem>>, vector<8x32xbf16>,
    %88 = vector.extract_strided_slice %13 {offsets = [0, 96], sizes = [8, 32], strides = [1, 1]} : vector<8x128xf32> to vector<8x32xf32>
    %89 = arith.truncf %88 : vector<8x32xf32> to vector<8x32xbf16>
    %90 = vector.extract_strided_slice %14 {offsets = [0, 96], sizes = [8, 32], strides = [1, 1]} : vector<8x128xf32> to vector<8x32xf32>
    %91 = arith.truncf %90 : vector<8x32xf32> to vector<8x32xbf16>
    %92 = vector.extract_strided_slice %15 {offsets = [0, 96], sizes = [8, 32], strides = [1, 1]} : vector<8x128xf32> to vector<8x32xf32>
    %93 = arith.truncf %92 : vector<8x32xf32> to vector<8x32xbf16>
    %cst_28 = arith.constant dense<0.000000e+00> : vector<8x8xf32>
    %94 = tpu.matmul %89, %91, %cst_28 {dimension_numbers = #tpu.dot_dimension_numbers<[1], [1], [0], [0], [0, 0, 1, 0], [], []>} : vector<8x32xbf16>, vector<8x32xbf16>, vector<8x8xf32> -> vector<8x8xf32>
    %cst_29 = arith.constant -1.000000e+30 : f32
    %95 = vector.broadcast %cst_29 : f32 to vector<8x8xf32>
    %96 = arith.select %18, %94, %95 : vector<8x8xi1>, vector<8x8xf32>
    %cst_30 = arith.constant dense<0xFF800000> : vector<8xf32>
    %97 = vector.multi_reduction <maximumf>, %96, %cst_30 [1] : vector<8x8xf32> to vector<8xf32>
    %98 = vector.shape_cast %97 : vector<8xf32> to vector<8x1xf32>
    %99 = vector.broadcast %98 : vector<8x1xf32> to vector<8x8xf32>
    %100 = arith.subf %96, %99 : vector<8x8xf32>
    %101 = math.exp %100 : vector<8x8xf32>
    %cst_31 = arith.constant dense<0.000000e+00> : vector<8xf32>
    %102 = vector.multi_reduction <add>, %101, %cst_31 [1] : vector<8x8xf32> to vector<8xf32>
    %103 = vector.shape_cast %102 : vector<8xf32> to vector<8x1xf32>
    %104 = tpu.reciprocal %103 {approx = true} : vector<8x1xf32> -> vector<8x1xf32>
    %105 = vector.broadcast %104 : vector<8x1xf32> to vector<8x8xf32>
    %106 = arith.mulf %101, %105 : vector<8x8xf32>
    %107 = arith.truncf %106 : vector<8x8xf32> to vector<8x8xbf16>
    %cst_32 = arith.constant dense<0.000000e+00> : vector<8x32xf32>
    %108 = tpu.matmul %107, %93, %cst_32 {dimension_numbers = #tpu.dot_dimension_numbers<[1], [0], [0], [1], [0, 0, 1, 1], [], []>} : vector<8x8xbf16>, vector<8x32xbf16>, vector<8x32xf32> -> vector<8x32xf32>
    %109 = arith.truncf %108 : vector<8x32xf32> to vector<8x32xbf16>
    %c0_33 = arith.constant 0 : index
    %c96 = arith.constant 96 : index
    %110 = vector.load %arg18[%c0_33, %c96] : memref<8x128xbf16, #tpu.memory_space<vmem>>, vector<8x32xbf16>
    tpu.vector_store %arg18[%c0_33, %c96], %109 {strides = array<i32>} : memref<8x128xbf16, #tpu.memory_space<vmem>>, vector<8x32xbf16>,
    %c0_34 = arith.constant 0 : index
    %c0_35 = arith.constant 0 : index
    %111 = vector.load %arg18[%c0_34, %c0_35] : memref<8x128xbf16, #tpu.memory_space<vmem>>, vector<8x128xbf16>
    %c0_36 = arith.constant 0 : index
    %c0_37 = arith.constant 0 : index
    %c0_38 = arith.constant 0 : index
    %112 = vector.load %arg7[%c0_36, %c0_37, %c0_38] : memref<1x128x128xbf16, #tpu.memory_space<vmem>>, vector<1x128x128xbf16>
    %113 = vector.shape_cast %112 : vector<1x128x128xbf16> to vector<128x128xbf16>
    %cst_39 = arith.constant dense<0.000000e+00> : vector<8x128xf32>
    %114 = tpu.matmul %111, %113, %cst_39 {dimension_numbers = #tpu.dot_dimension_numbers<[1], [0], [0], [1], [0, 0, 1, 1], [], []>} : vector<8x128xbf16>, vector<128x128xbf16>, vector<8x128xf32> -> vector<8x128xf32>
    %c0_i32_40 = arith.constant 0 : i32
    %115 = arith.cmpi eq, %arg1, %c0_i32_40 : i32
    %116 = arith.extui %115 : i1 to i32
    %c0_i32_41 = arith.constant 0 : i32
    %117 = arith.cmpi ne, %116, %c0_i32_41 : i32
    scf.if %117 {
      %c0_46 = arith.constant 0 : index
      %c0_47 = arith.constant 0 : index
      %124 = vector.load %arg8[%c0_46, %c0_47] : memref<1x128xf32, #tpu.memory_space<vmem>>, vector<1x128xf32>
      %125 = vector.broadcast %124 : vector<1x128xf32> to vector<8x128xf32>
      %126 = arith.addf %114, %125 : vector<8x128xf32>
      %c0_48 = arith.constant 0 : index
      %c0_49 = arith.constant 0 : index
      %127 = vector.load %arg17[%c0_48, %c0_49] : memref<8x128xf32, #tpu.memory_space<vmem>>, vector<8x128xf32>
      tpu.vector_store %arg17[%c0_48, %c0_49], %126 {strides = array<i32>} : memref<8x128xf32, #tpu.memory_space<vmem>>, vector<8x128xf32>,
    } else {
    }
    %c0_i32_42 = arith.constant 0 : i32
    %118 = arith.cmpi sgt, %arg1, %c0_i32_42 : i32
    %119 = arith.extui %118 : i1 to i32
    %c0_i32_43 = arith.constant 0 : i32
    %120 = arith.cmpi ne, %119, %c0_i32_43 : i32
    scf.if %120 {
      %c0_46 = arith.constant 0 : index
      %c0_47 = arith.constant 0 : index
      %124 = vector.load %arg17[%c0_46, %c0_47] : memref<8x128xf32, #tpu.memory_space<vmem>>, vector<8x128xf32>
      %125 = arith.addf %124, %114 : vector<8x128xf32>
      %c0_48 = arith.constant 0 : index
      %c0_49 = arith.constant 0 : index
      %126 = vector.load %arg17[%c0_48, %c0_49] : memref<8x128xf32, #tpu.memory_space<vmem>>, vector<8x128xf32>
      tpu.vector_store %arg17[%c0_48, %c0_49], %125 {strides = array<i32>} : memref<8x128xf32, #tpu.memory_space<vmem>>, vector<8x128xf32>,
    } else {
    }
    %c0_i32_44 = arith.constant 0 : i32
    %121 = arith.cmpi eq, %arg1, %c0_i32_44 : i32
    %122 = arith.extui %121 : i1 to i32
    %c0_i32_45 = arith.constant 0 : i32
    %123 = arith.cmpi ne, %122, %c0_i32_45 : i32
    scf.if %123 {
      %c0_46 = arith.constant 0 : index
      %c0_47 = arith.constant 0 : index
      %c0_48 = arith.constant 0 : index
      %124 = vector.load %arg2[%c0_46, %c0_47, %c0_48] : memref<1x8x128xf32, #tpu.memory_space<vmem>>, vector<1x8x128xf32>
      %125 = vector.shape_cast %124 : vector<1x8x128xf32> to vector<8x128xf32>
      %c0_49 = arith.constant 0 : index
      %c0_50 = arith.constant 0 : index
      %126 = vector.load %arg17[%c0_49, %c0_50] : memref<8x128xf32, #tpu.memory_space<vmem>>, vector<8x128xf32>
      %127 = arith.addf %125, %126 : vector<8x128xf32>
      %c0_51 = arith.constant 0 : index
      %c0_52 = arith.constant 0 : index
      %128 = vector.load %arg9[%c0_51, %c0_52] : memref<1x128xf32, #tpu.memory_space<vmem>>, vector<1x128xf32>
      %c0_53 = arith.constant 0 : index
      %c0_54 = arith.constant 0 : index
      %129 = vector.load %arg10[%c0_53, %c0_54] : memref<1x128xf32, #tpu.memory_space<vmem>>, vector<1x128xf32>
      %cst_55 = arith.constant dense<0.000000e+00> : vector<8xf32>
      %130 = vector.multi_reduction <add>, %127, %cst_55 [1] : vector<8x128xf32> to vector<8xf32>
      %131 = vector.shape_cast %130 : vector<8xf32> to vector<8x1xf32>
      %cst_56 = arith.constant 1.280000e+02 : f32
      %132 = vector.broadcast %cst_56 : f32 to vector<8x1xf32>
      %133 = arith.divf %131, %132 : vector<8x1xf32>
      %134 = vector.broadcast %133 : vector<8x1xf32> to vector<8x128xf32>
      %135 = arith.subf %127, %134 : vector<8x128xf32>
      %136 = arith.mulf %135, %135 : vector<8x128xf32>
      %cst_57 = arith.constant dense<0.000000e+00> : vector<8xf32>
      %137 = vector.multi_reduction <add>, %136, %cst_57 [1] : vector<8x128xf32> to vector<8xf32>
      %138 = vector.shape_cast %137 : vector<8xf32> to vector<8x1xf32>
      %cst_58 = arith.constant 1.280000e+02 : f32
      %139 = vector.broadcast %cst_58 : f32 to vector<8x1xf32>
      %140 = arith.divf %138, %139 : vector<8x1xf32>
      %141 = vector.broadcast %133 : vector<8x1xf32> to vector<8x128xf32>
      %142 = arith.subf %127, %141 : vector<8x128xf32>
      %cst_59 = arith.constant 9.99999974E-6 : f32
      %143 = vector.broadcast %cst_59 : f32 to vector<8x1xf32>
      %144 = arith.addf %140, %143 : vector<8x1xf32>
      %145 = math.rsqrt %144 : vector<8x1xf32>
      %146 = vector.broadcast %145 : vector<8x1xf32> to vector<8x128xf32>
      %147 = arith.mulf %142, %146 : vector<8x128xf32>
      %148 = vector.broadcast %128 : vector<1x128xf32> to vector<8x128xf32>
      %149 = arith.mulf %147, %148 : vector<8x128xf32>
      %150 = vector.broadcast %129 : vector<1x128xf32> to vector<8x128xf32>
      %151 = arith.addf %149, %150 : vector<8x128xf32>
      %152 = arith.truncf %151 : vector<8x128xf32> to vector<8x128xbf16>
      %cst_60 = arith.constant 0.000000e+00 : f32
      %153 = vector.broadcast %cst_60 : f32 to vector<8x128xf32>
      %c0_61 = arith.constant 0 : index
      %c0_62 = arith.constant 0 : index
      %154 = vector.load %arg11[%c0_61, %c0_62] : memref<128x512xbf16, #tpu.memory_space<vmem>>, vector<128x512xbf16>
      %cst_63 = arith.constant dense<0.000000e+00> : vector<8x512xf32>
      %155 = tpu.matmul %152, %154, %cst_63 {dimension_numbers = #tpu.dot_dimension_numbers<[1], [0], [0], [1], [0, 0, 1, 1], [], []>} : vector<8x128xbf16>, vector<128x512xbf16>, vector<8x512xf32> -> vector<8x512xf32>
      %c0_64 = arith.constant 0 : index
      %c0_65 = arith.constant 0 : index
      %156 = vector.load %arg12[%c0_64, %c0_65] : memref<1x512xf32, #tpu.memory_space<vmem>>, vector<1x512xf32>
      %157 = vector.broadcast %156 : vector<1x512xf32> to vector<8x512xf32>
      %158 = arith.addf %155, %157 : vector<8x512xf32>
      %cst_66 = arith.constant 5.000000e-01 : f32
      %159 = vector.broadcast %cst_66 : f32 to vector<8x512xf32>
      %160 = arith.mulf %159, %158 : vector<8x512xf32>
      %cst_67 = arith.constant 4.471500e-02 : f32
      %161 = vector.broadcast %cst_67 : f32 to vector<8x512xf32>
      %162 = arith.mulf %161, %158 : vector<8x512xf32>
      %163 = arith.mulf %162, %158 : vector<8x512xf32>
      %164 = arith.mulf %163, %158 : vector<8x512xf32>
      %165 = arith.addf %158, %164 : vector<8x512xf32>
      %cst_68 = arith.constant 0.797884583 : f32
      %166 = vector.broadcast %cst_68 : f32 to vector<8x512xf32>
      %167 = arith.mulf %166, %165 : vector<8x512xf32>
      %168 = math.tanh %167 : vector<8x512xf32>
      %cst_69 = arith.constant 1.000000e+00 : f32
      %169 = vector.broadcast %cst_69 : f32 to vector<8x512xf32>
      %170 = arith.addf %169, %168 : vector<8x512xf32>
      %171 = arith.mulf %160, %170 : vector<8x512xf32>
      %172 = arith.truncf %171 : vector<8x512xf32> to vector<8x512xbf16>
      %c0_70 = arith.constant 0 : index
      %c0_71 = arith.constant 0 : index
      %173 = vector.load %arg13[%c0_70, %c0_71] : memref<512x128xbf16, #tpu.memory_space<vmem>>, vector<512x128xbf16>
      %cst_72 = arith.constant dense<0.000000e+00> : vector<8x128xf32>
      %174 = tpu.matmul %172, %173, %cst_72 {dimension_numbers = #tpu.dot_dimension_numbers<[1], [0], [0], [1], [0, 0, 1, 1], [], []>} : vector<8x512xbf16>, vector<512x128xbf16>, vector<8x128xf32> -> vector<8x128xf32>
      %175 = arith.addf %153, %174 : vector<8x128xf32>
      %176 = arith.addf %127, %175 : vector<8x128xf32>
      %c0_73 = arith.constant 0 : index
      %c0_74 = arith.constant 0 : index
      %177 = vector.load %arg14[%c0_73, %c0_74] : memref<1x128xf32, #tpu.memory_space<vmem>>, vector<1x128xf32>
      %178 = vector.broadcast %177 : vector<1x128xf32> to vector<8x128xf32>
      %179 = arith.addf %176, %178 : vector<8x128xf32>
      %c0_75 = arith.constant 0 : index
      %c0_76 = arith.constant 0 : index
      %c0_77 = arith.constant 0 : index
      %180 = vector.load %arg15[%c0_75, %c0_76, %c0_77] : memref<1x8x128xf32, #tpu.memory_space<vmem>>, vector<1x8x128xf32>
      %181 = vector.shape_cast %180 : vector<1x8x128xf32> to vector<8x128xf32>
      %182 = vector.shape_cast %179 : vector<8x128xf32> to vector<1x8x128xf32>
      tpu.vector_store %arg15[%c0_75, %c0_76, %c0_77], %182 {strides = array<i32>} : memref<1x8x128xf32, #tpu.memory_space<vmem>>, vector<1x8x128xf32>,
    } else {
    }
    return
  }
  func.func @transform_0(%arg0: i32, %arg1: i32) -> (i32, i32, i32) {
    %c0_i32 = arith.constant 0 : i32
    %c0_i32_0 = arith.constant 0 : i32
    %c0_i32_1 = arith.constant 0 : i32
    return %arg0, %c0_i32, %c0_i32_0 : i32, i32, i32
  }
  func.func @transform_1(%arg0: i32, %arg1: i32) -> (i32, i32) {
    %c0_i32 = arith.constant 0 : i32
    %c0_i32_0 = arith.constant 0 : i32
    %c0_i32_1 = arith.constant 0 : i32
    return %c0_i32, %c0_i32_0 : i32, i32
  }
  func.func @transform_2(%arg0: i32, %arg1: i32) -> (i32, i32) {
    %c0_i32 = arith.constant 0 : i32
    %c0_i32_0 = arith.constant 0 : i32
    %c0_i32_1 = arith.constant 0 : i32
    return %c0_i32, %c0_i32_0 : i32, i32
  }
  func.func @transform_3(%arg0: i32, %arg1: i32) -> (i32, i32, i32) {
    %c0_i32 = arith.constant 0 : i32
    %c0_i32_0 = arith.constant 0 : i32
    %c0_i32_1 = arith.constant 0 : i32
    return %arg1, %c0_i32, %c0_i32_0 : i32, i32, i32
  }
  func.func @transform_4(%arg0: i32, %arg1: i32) -> (i32, i32, i32) {
    %c0_i32 = arith.constant 0 : i32
    %c0_i32_0 = arith.constant 0 : i32
    %c0_i32_1 = arith.constant 0 : i32
    return %arg1, %c0_i32, %c0_i32_0 : i32, i32, i32
  }
  func.func @transform_5(%arg0: i32, %arg1: i32) -> (i32, i32, i32) {
    %c0_i32 = arith.constant 0 : i32
    %c0_i32_0 = arith.constant 0 : i32
    %c0_i32_1 = arith.constant 0 : i32
    return %arg1, %c0_i32, %c0_i32_0 : i32, i32, i32
  }
  func.func @transform_6(%arg0: i32, %arg1: i32) -> (i32, i32) {
    %c0_i32 = arith.constant 0 : i32
    %c0_i32_0 = arith.constant 0 : i32
    %c0_i32_1 = arith.constant 0 : i32
    return %c0_i32, %c0_i32_0 : i32, i32
  }
  func.func @transform_7(%arg0: i32, %arg1: i32) -> (i32, i32) {
    %c0_i32 = arith.constant 0 : i32
    %c0_i32_0 = arith.constant 0 : i32
    %c0_i32_1 = arith.constant 0 : i32
    return %c0_i32, %c0_i32_0 : i32, i32
  }
  func.func @transform_8(%arg0: i32, %arg1: i32) -> (i32, i32) {
    %c0_i32 = arith.constant 0 : i32
    %c0_i32_0 = arith.constant 0 : i32
    %c0_i32_1 = arith.constant 0 : i32
    return %c0_i32, %c0_i32_0 : i32, i32
  }
  func.func @transform_9(%arg0: i32, %arg1: i32) -> (i32, i32) {
    %c0_i32 = arith.constant 0 : i32
    %c0_i32_0 = arith.constant 0 : i32
    %c0_i32_1 = arith.constant 0 : i32
    return %c0_i32, %c0_i32_0 : i32, i32
  }
  func.func @transform_10(%arg0: i32, %arg1: i32) -> (i32, i32) {
    %c0_i32 = arith.constant 0 : i32
    %c0_i32_0 = arith.constant 0 : i32
    %c0_i32_1 = arith.constant 0 : i32
    return %c0_i32, %c0_i32_0 : i32, i32
  }
  func.func @transform_11(%arg0: i32, %arg1: i32) -> (i32, i32) {
    %c0_i32 = arith.constant 0 : i32
    %c0_i32_0 = arith.constant 0 : i32
    %c0_i32_1 = arith.constant 0 : i32
    return %c0_i32, %c0_i32_0 : i32, i32
  }
  func.func @transform_12(%arg0: i32, %arg1: i32) -> (i32, i32) {
    %c0_i32 = arith.constant 0 : i32
    %c0_i32_0 = arith.constant 0 : i32
    %c0_i32_1 = arith.constant 0 : i32
    return %c0_i32, %c0_i32_0 : i32, i32
  }
  func.func @transform_13(%arg0: i32, %arg1: i32) -> (i32, i32, i32) {
    %c0_i32 = arith.constant 0 : i32
    %c0_i32_0 = arith.constant 0 : i32
    %c0_i32_1 = arith.constant 0 : i32
    return %arg0, %c0_i32, %c0_i32_0 : i32, i32, i32
  }
}

module attributes {stable_mosaic.version = 11 : i64} {
  func.func @block_kernel(%arg0: i32, %arg1: i32, %arg2: memref<1x8x128xf32, #tpu.memory_space<vmem>>, %arg3: memref<1x128xf32, #tpu.memory_space<vmem>>, %arg4: memref<1x128xf32, #tpu.memory_space<vmem>>, %arg5: memref<1x128x384xbf16, #tpu.memory_space<vmem>>, %arg6: memref<1x1x384xf32, #tpu.memory_space<vmem>>, %arg7: memref<1x128x128xbf16, #tpu.memory_space<vmem>>, %arg8: memref<1x128xf32, #tpu.memory_space<vmem>>, %arg9: memref<1x128xf32, #tpu.memory_space<vmem>>, %arg10: memref<1x128xf32, #tpu.memory_space<vmem>>, %arg11: memref<128x512xbf16, #tpu.memory_space<vmem>>, %arg12: memref<1x512xf32, #tpu.memory_space<vmem>>, %arg13: memref<512x128xbf16, #tpu.memory_space<vmem>>, %arg14: memref<1x128xf32, #tpu.memory_space<vmem>>, %arg15: memref<1x8x128xf32, #tpu.memory_space<vmem>>, %arg16: memref<8x128xbf16, #tpu.memory_space<vmem>>, %arg17: memref<8x128xf32, #tpu.memory_space<vmem>>, %arg18: memref<8x128xbf16, #tpu.memory_space<vmem>>) attributes {dimension_semantics = [#tpu.dimension_semantics<parallel>, #tpu.dimension_semantics<arbitrary>], iteration_bounds = array<i64: 2, 1>, scalar_prefetch = 0 : i64, scratch_operands = 3 : i64, tpu.core_type = #tpu.core_type<tc>, window_params = [{transform_indices = @transform_0, window_bounds = array<i64: 1, 8, 128>}, {pipeline_mode = #tpu.pipeline_mode<synchronous>, transform_indices = @transform_1, window_bounds = array<i64: 1, 128>}, {pipeline_mode = #tpu.pipeline_mode<synchronous>, transform_indices = @transform_2, window_bounds = array<i64: 1, 128>}, {transform_indices = @transform_3, window_bounds = array<i64: 1, 128, 384>}, {transform_indices = @transform_4, window_bounds = array<i64: 1, 1, 384>}, {transform_indices = @transform_5, window_bounds = array<i64: 1, 128, 128>}, {pipeline_mode = #tpu.pipeline_mode<synchronous>, transform_indices = @transform_6, window_bounds = array<i64: 1, 128>}, {pipeline_mode = #tpu.pipeline_mode<synchronous>, transform_indices = @transform_7, window_bounds = array<i64: 1, 128>}, {pipeline_mode = #tpu.pipeline_mode<synchronous>, transform_indices = @transform_8, window_bounds = array<i64: 1, 128>}, {pipeline_mode = #tpu.pipeline_mode<synchronous>, transform_indices = @transform_9, window_bounds = array<i64: 128, 512>}, {pipeline_mode = #tpu.pipeline_mode<synchronous>, transform_indices = @transform_10, window_bounds = array<i64: 1, 512>}, {pipeline_mode = #tpu.pipeline_mode<synchronous>, transform_indices = @transform_11, window_bounds = array<i64: 512, 128>}, {pipeline_mode = #tpu.pipeline_mode<synchronous>, transform_indices = @transform_12, window_bounds = array<i64: 1, 128>}, {transform_indices = @transform_13, window_bounds = array<i64: 1, 8, 128>}]} {
    %c0_i32 = arith.constant 0 : i32
    %0 = arith.cmpi eq, %arg1, %c0_i32 : i32
    %1 = arith.extui %0 : i1 to i32
    %c0_i32_0 = arith.constant 0 : i32
    %2 = arith.cmpi ne, %1, %c0_i32_0 : i32
    scf.if %2 {
      %c0_46 = arith.constant 0 : index
      %c0_47 = arith.constant 0 : index
      %c0_48 = arith.constant 0 : index
      %124 = vector.load %arg2[%c0_46, %c0_47, %c0_48] : memref<1x8x128xf32, #tpu.memory_space<vmem>>, vector<1x8x128xf32>
      %125 = vector.shape_cast %124 : vector<1x8x128xf32> to vector<8x128xf32>
      %c0_49 = arith.constant 0 : index
      %c0_50 = arith.constant 0 : index
      %126 = vector.load %arg3[%c0_49, %c0_50] : memref<1x128xf32, #tpu.memory_space<vmem>>, vector<1x128xf32>
      %c0_51 = arith.constant 0 : index
      %c0_52 = arith.constant 0 : index
      %127 = vector.load %arg4[%c0_51, %c0_52] : memref<1x128xf32, #tpu.memory_space<vmem>>, vector<1x128xf32>
      %cst_53 = arith.constant dense<0.000000e+00> : vector<8xf32>
      %128 = vector.multi_reduction <add>, %125, %cst_53 [1] : vector<8x128xf32> to vector<8xf32>
      %129 = vector.shape_cast %128 : vector<8xf32> to vector<8x1xf32>
      %cst_54 = arith.constant 1.280000e+02 : f32
      %130 = vector.broadcast %cst_54 : f32 to vector<8x1xf32>
      %131 = arith.divf %129, %130 : vector<8x1xf32>
      %132 = vector.broadcast %131 : vector<8x1xf32> to vector<8x128xf32>
      %133 = arith.subf %125, %132 : vector<8x128xf32>
      %134 = arith.mulf %133, %133 : vector<8x128xf32>
      %cst_55 = arith.constant dense<0.000000e+00> : vector<8xf32>
      %135 = vector.multi_reduction <add>, %134, %cst_55 [1] : vector<8x128xf32> to vector<8xf32>
      %136 = vector.shape_cast %135 : vector<8xf32> to vector<8x1xf32>
      %cst_56 = arith.constant 1.280000e+02 : f32
      %137 = vector.broadcast %cst_56 : f32 to vector<8x1xf32>
      %138 = arith.divf %136, %137 : vector<8x1xf32>
      %139 = vector.broadcast %131 : vector<8x1xf32> to vector<8x128xf32>
      %140 = arith.subf %125, %139 : vector<8x128xf32>
      %cst_57 = arith.constant 9.99999974E-6 : f32
      %141 = vector.broadcast %cst_57 : f32 to vector<8x1xf32>
      %142 = arith.addf %138, %141 : vector<8x1xf32>
      %143 = math.rsqrt %142 : vector<8x1xf32>
      %144 = vector.broadcast %143 : vector<8x1xf32> to vector<8x128xf32>
      %145 = arith.mulf %140, %144 : vector<8x128xf32>
      %146 = vector.broadcast %126 : vector<1x128xf32> to vector<8x128xf32>
      %147 = arith.mulf %145, %146 : vector<8x128xf32>
      %148 = vector.broadcast %127 : vector<1x128xf32> to vector<8x128xf32>
      %149 = arith.addf %147, %148 : vector<8x128xf32>
      %150 = arith.truncf %149 : vector<8x128xf32> to vector<8x128xbf16>
      %c0_58 = arith.constant 0 : index
      %c0_59 = arith.constant 0 : index
      %151 = vector.load %arg16[%c0_58, %c0_59] : memref<8x128xbf16, #tpu.memory_space<vmem>>, vector<8x128xbf16>
      tpu.vector_store %arg16[%c0_58, %c0_59], %150 {strides = array<i32>} : memref<8x128xbf16, #tpu.memory_space<vmem>>, vector<8x128xbf16>,
    } else {
    }
    %c0 = arith.constant 0 : index
    %c0_1 = arith.constant 0 : index
    %3 = vector.load %arg16[%c0, %c0_1] : memref<8x128xbf16, #tpu.memory_space<vmem>>, vector<8x128xbf16>
    %c0_2 = arith.constant 0 : index
    %c0_3 = arith.constant 0 : index
    %c0_4 = arith.constant 0 : index
    %4 = vector.load %arg5[%c0_2, %c0_3, %c0_4] : memref<1x128x384xbf16, #tpu.memory_space<vmem>>, vector<1x128x384xbf16>
    %5 = vector.shape_cast %4 : vector<1x128x384xbf16> to vector<128x384xbf16>
    %cst = arith.constant dense<0.000000e+00> : vector<8x384xf32>
    %6 = tpu.matmul %3, %5, %cst {dimension_numbers = #tpu.dot_dimension_numbers<[1], [0], [0], [1], [0, 0, 1, 1], [], []>} : vector<8x128xbf16>, vector<128x384xbf16>, vector<8x384xf32> -> vector<8x384xf32>
    %c0_5 = arith.constant 0 : index
    %c0_6 = arith.constant 0 : index
    %c0_7 = arith.constant 0 : index
    %7 = vector.load %arg6[%c0_5, %c0_6, %c0_7] : memref<1x1x384xf32, #tpu.memory_space<vmem>>, vector<1x1x384xf32>
    %8 = vector.shape_cast %7 : vector<1x1x384xf32> to vector<1x384xf32>
    %9 = vector.broadcast %8 : vector<1x384xf32> to vector<8x384xf32>
    %10 = arith.addf %6, %9 : vector<8x384xf32>
    %11 = vector.extract_strided_slice %10 {offsets = [0, 0], sizes = [8, 128], strides = [1, 1]} : vector<8x384xf32> to vector<8x128xf32>
    %cst_8 = arith.constant 0.176776692 : f32
    %12 = vector.broadcast %cst_8 : f32 to vector<8x128xf32>
    %13 = arith.mulf %11, %12 : vector<8x128xf32>
    %14 = vector.extract_strided_slice %10 {offsets = [0, 128], sizes = [8, 128], strides = [1, 1]} : vector<8x384xf32> to vector<8x128xf32>
    %15 = vector.extract_strided_slice %10 {offsets = [0, 256], sizes = [8, 128], strides = [1, 1]} : vector<8x384xf32> to vector<8x128xf32>
    %16 = tpu.iota {dimensions = array<i32: 0>} : vector<8x8xi32>
    %17 = tpu.iota {dimensions = array<i32: 1>} : vector<8x8xi32>
    %18 = arith.cmpi sle, %17, %16 : vector<8x8xi32>
    %19 = vector.extract_strided_slice %13 {offsets = [0, 0], sizes = [8, 32], strides = [1, 1]} : vector<8x128xf32> to vector<8x32xf32>
    %20 = arith.truncf %19 : vector<8x32xf32> to vector<8x32xbf16>
    %21 = vector.extract_strided_slice %14 {offsets = [0, 0], sizes = [8, 32], strides = [1, 1]} : vector<8x128xf32> to vector<8x32xf32>
    %22 = arith.truncf %21 : vector<8x32xf32> to vector<8x32xbf16>
    %23 = vector.extract_strided_slice %15 {offsets = [0, 0], sizes = [8, 32], strides = [1, 1]} : vector<8x128xf32> to vector<8x32xf32>
    %24 = arith.truncf %23 : vector<8x32xf32> to vector<8x32xbf16>
    %cst_9 = arith.constant dense<0.000000e+00> : vector<8x8xf32>
    %25 = tpu.matmul %20, %22, %cst_9 {dimension_numbers = #tpu.dot_dimension_numbers<[1], [1], [0], [0], [0, 0, 1, 0], [], []>} : vector<8x32xbf16>, vector<8x32xbf16>, vector<8x8xf32> -> vector<8x8xf32>
    %cst_10 = arith.constant -1.000000e+30 : f32
    %26 = vector.broadcast %cst_10 : f32 to vector<8x8xf32>
    %27 = arith.select %18, %25, %26 : vector<8x8xi1>, vector<8x8xf32>
    %cst_11 = arith.constant dense<0xFF800000> : vector<8xf32>
    %28 = vector.multi_reduction <maximumf>, %27, %cst_11 [1] : vector<8x8xf32> to vector<8xf32>
    %29 = vector.shape_cast %28 : vector<8xf32> to vector<8x1xf32>
    %30 = vector.broadcast %29 : vector<8x1xf32> to vector<8x8xf32>
    %31 = arith.subf %27, %30 : vector<8x8xf32>
    %32 = math.exp %31 : vector<8x8xf32>
    %cst_12 = arith.constant dense<0.000000e+00> : vector<8xf32>
    %33 = vector.multi_reduction <add>, %32, %cst_12 [1] : vector<8x8xf32> to vector<8xf32>
    %34 = vector.shape_cast %33 : vector<8xf32> to vector<8x1xf32>
    %35 = tpu.reciprocal %34 {approx = true} : vector<8x1xf32> -> vector<8x1xf32>
    %36 = vector.broadcast %35 : vector<8x1xf32> to vector<8x8xf32>
    %37 = arith.mulf %32, %36 : vector<8x8xf32>
    %38 = arith.truncf %37 : vector<8x8xf32> to vector<8x8xbf16>
    %cst_13 = arith.constant dense<0.000000e+00> : vector<8x32xf32>
    %39 = tpu.matmul %38, %24, %cst_13 {dimension_numbers = #tpu.dot_dimension_numbers<[1], [0], [0], [1], [0, 0, 1, 1], [], []>} : vector<8x8xbf16>, vector<8x32xbf16>, vector<8x32xf32> -> vector<8x32xf32>
    %40 = arith.truncf %39 : vector<8x32xf32> to vector<8x32xbf16>
    %c0_14 = arith.constant 0 : index
    %c0_15 = arith.constant 0 : index
    %41 = vector.load %arg18[%c0_14, %c0_15] : memref<8x128xbf16, #tpu.memory_space<vmem>>, vector<8x32xbf16>
    tpu.vector_store %arg18[%c0_14, %c0_15], %40 {strides = array<i32>} : memref<8x128xbf16, #tpu.memory_space<vmem>>, vector<8x32xbf16>,
    %42 = vector.extract_strided_slice %13 {offsets = [0, 32], sizes = [8, 32], strides = [1, 1]} : vector<8x128xf32> to vector<8x32xf32>
    %43 = arith.truncf %42 : vector<8x32xf32> to vector<8x32xbf16>
    %44 = vector.extract_strided_slice %14 {offsets = [0, 32], sizes = [8, 32], strides = [1, 1]} : vector<8x128xf32> to vector<8x32xf32>
    %45 = arith.truncf %44 : vector<8x32xf32> to vector<8x32xbf16>
    %46 = vector.extract_strided_slice %15 {offsets = [0, 32], sizes = [8, 32], strides = [1, 1]} : vector<8x128xf32> to vector<8x32xf32>
    %47 = arith.truncf %46 : vector<8x32xf32> to vector<8x32xbf16>
    %cst_16 = arith.constant dense<0.000000e+00> : vector<8x8xf32>
    %48 = tpu.matmul %43, %45, %cst_16 {dimension_numbers = #tpu.dot_dimension_numbers<[1], [1], [0], [0], [0, 0, 1, 0], [], []>} : vector<8x32xbf16>, vector<8x32xbf16>, vector<8x8xf32> -> vector<8x8xf32>
    %cst_17 = arith.constant -1.000000e+30 : f32
    %49 = vector.broadcast %cst_17 : f32 to vector<8x8xf32>
    %50 = arith.select %18, %48, %49 : vector<8x8xi1>, vector<8x8xf32>
    %cst_18 = arith.constant dense<0xFF800000> : vector<8xf32>
    %51 = vector.multi_reduction <maximumf>, %50, %cst_18 [1] : vector<8x8xf32> to vector<8xf32>
    %52 = vector.shape_cast %51 : vector<8xf32> to vector<8x1xf32>
    %53 = vector.broadcast %52 : vector<8x1xf32> to vector<8x8xf32>
    %54 = arith.subf %50, %53 : vector<8x8xf32>
    %55 = math.exp %54 : vector<8x8xf32>
    %cst_19 = arith.constant dense<0.000000e+00> : vector<8xf32>
    %56 = vector.multi_reduction <add>, %55, %cst_19 [1] : vector<8x8xf32> to vector<8xf32>
    %57 = vector.shape_cast %56 : vector<8xf32> to vector<8x1xf32>
    %58 = tpu.reciprocal %57 {approx = true} : vector<8x1xf32> -> vector<8x1xf32>
    %59 = vector.broadcast %58 : vector<8x1xf32> to vector<8x8xf32>
    %60 = arith.mulf %55, %59 : vector<8x8xf32>
    %61 = arith.truncf %60 : vector<8x8xf32> to vector<8x8xbf16>
    %cst_20 = arith.constant dense<0.000000e+00> : vector<8x32xf32>
    %62 = tpu.matmul %61, %47, %cst_20 {dimension_numbers = #tpu.dot_dimension_numbers<[1], [0], [0], [1], [0, 0, 1, 1], [], []>} : vector<8x8xbf16>, vector<8x32xbf16>, vector<8x32xf32> -> vector<8x32xf32>
    %63 = arith.truncf %62 : vector<8x32xf32> to vector<8x32xbf16>
    %c0_21 = arith.constant 0 : index
    %c32 = arith.constant 32 : index
    %64 = vector.load %arg18[%c0_21, %c32] : memref<8x128xbf16, #tpu.memory_space<vmem>>, vector<8x32xbf16>
    tpu.vector_store %arg18[%c0_21, %c32], %63 {strides = array<i32>} : memref<8x128xbf16, #tpu.memory_space<vmem>>, vector<8x32xbf16>,
    %65 = vector.extract_strided_slice %13 {offsets = [0, 64], sizes = [8, 32], strides = [1, 1]} : vector<8x128xf32> to vector<8x32xf32>
    %66 = arith.truncf %65 : vector<8x32xf32> to vector<8x32xbf16>
    %67 = vector.extract_strided_slice %14 {offsets = [0, 64], sizes = [8, 32], strides = [1, 1]} : vector<8x128xf32> to vector<8x32xf32>
    %68 = arith.truncf %67 : vector<8x32xf32> to vector<8x32xbf16>
    %69 = vector.extract_strided_slice %15 {offsets = [0, 64], sizes = [8, 32], strides = [1, 1]} : vector<8x128xf32> to vector<8x32xf32>
    %70 = arith.truncf %69 : vector<8x32xf32> to vector<8x32xbf16>
    %cst_22 = arith.constant dense<0.000000e+00> : vector<8x8xf32>
    %71 = tpu.matmul %66, %68, %cst_22 {dimension_numbers = #tpu.dot_dimension_numbers<[1], [1], [0], [0], [0, 0, 1, 0], [], []>} : vector<8x32xbf16>, vector<8x32xbf16>, vector<8x8xf32> -> vector<8x8xf32>
    %cst_23 = arith.constant -1.000000e+30 : f32
    %72 = vector.broadcast %cst_23 : f32 to vector<8x8xf32>
    %73 = arith.select %18, %71, %72 : vector<8x8xi1>, vector<8x8xf32>
    %cst_24 = arith.constant dense<0xFF800000> : vector<8xf32>
    %74 = vector.multi_reduction <maximumf>, %73, %cst_24 [1] : vector<8x8xf32> to vector<8xf32>
    %75 = vector.shape_cast %74 : vector<8xf32> to vector<8x1xf32>
    %76 = vector.broadcast %75 : vector<8x1xf32> to vector<8x8xf32>
    %77 = arith.subf %73, %76 : vector<8x8xf32>
    %78 = math.exp %77 : vector<8x8xf32>
    %cst_25 = arith.constant dense<0.000000e+00> : vector<8xf32>
    %79 = vector.multi_reduction <add>, %78, %cst_25 [1] : vector<8x8xf32> to vector<8xf32>
    %80 = vector.shape_cast %79 : vector<8xf32> to vector<8x1xf32>
    %81 = tpu.reciprocal %80 {approx = true} : vector<8x1xf32> -> vector<8x1xf32>
    %82 = vector.broadcast %81 : vector<8x1xf32> to vector<8x8xf32>
    %83 = arith.mulf %78, %82 : vector<8x8xf32>
    %84 = arith.truncf %83 : vector<8x8xf32> to vector<8x8xbf16>
    %cst_26 = arith.constant dense<0.000000e+00> : vector<8x32xf32>
    %85 = tpu.matmul %84, %70, %cst_26 {dimension_numbers = #tpu.dot_dimension_numbers<[1], [0], [0], [1], [0, 0, 1, 1], [], []>} : vector<8x8xbf16>, vector<8x32xbf16>, vector<8x32xf32> -> vector<8x32xf32>
    %86 = arith.truncf %85 : vector<8x32xf32> to vector<8x32xbf16>
    %c0_27 = arith.constant 0 : index
    %c64 = arith.constant 64 : index
    %87 = vector.load %arg18[%c0_27, %c64] : memref<8x128xbf16, #tpu.memory_space<vmem>>, vector<8x32xbf16>
    tpu.vector_store %arg18[%c0_27, %c64], %86 {strides = array<i32>} : memref<8x128xbf16, #tpu.memory_space<vmem>>, vector<8x32xbf16>,
    %88 = vector.extract_strided_slice %13 {offsets = [0, 96], sizes = [8, 32], strides = [1, 1]} : vector<8x128xf32> to vector<8x32xf32>
    %89 = arith.truncf %88 : vector<8x32xf32> to vector<8x32xbf16>
    %90 = vector.extract_strided_slice %14 {offsets = [0, 96], sizes = [8, 32], strides = [1, 1]} : vector<8x128xf32> to vector<8x32xf32>
    %91 = arith.truncf %90 : vector<8x32xf32> to vector<8x32xbf16>
    %92 = vector.extract_strided_slice %15 {offsets = [0, 96], sizes = [8, 32], strides = [1, 1]} : vector<8x128xf32> to vector<8x32xf32>
    %93 = arith.truncf %92 : vector<8x32xf32> to vector<8x32xbf16>
    %cst_28 = arith.constant dense<0.000000e+00> : vector<8x8xf32>
    %94 = tpu.matmul %89, %91, %cst_28 {dimension_numbers = #tpu.dot_dimension_numbers<[1], [1], [0], [0], [0, 0, 1, 0], [], []>} : vector<8x32xbf16>, vector<8x32xbf16>, vector<8x8xf32> -> vector<8x8xf32>
    %cst_29 = arith.constant -1.000000e+30 : f32
    %95 = vector.broadcast %cst_29 : f32 to vector<8x8xf32>
    %96 = arith.select %18, %94, %95 : vector<8x8xi1>, vector<8x8xf32>
    %cst_30 = arith.constant dense<0xFF800000> : vector<8xf32>
    %97 = vector.multi_reduction <maximumf>, %96, %cst_30 [1] : vector<8x8xf32> to vector<8xf32>
    %98 = vector.shape_cast %97 : vector<8xf32> to vector<8x1xf32>
    %99 = vector.broadcast %98 : vector<8x1xf32> to vector<8x8xf32>
    %100 = arith.subf %96, %99 : vector<8x8xf32>
    %101 = math.exp %100 : vector<8x8xf32>
    %cst_31 = arith.constant dense<0.000000e+00> : vector<8xf32>
    %102 = vector.multi_reduction <add>, %101, %cst_31 [1] : vector<8x8xf32> to vector<8xf32>
    %103 = vector.shape_cast %102 : vector<8xf32> to vector<8x1xf32>
    %104 = tpu.reciprocal %103 {approx = true} : vector<8x1xf32> -> vector<8x1xf32>
    %105 = vector.broadcast %104 : vector<8x1xf32> to vector<8x8xf32>
    %106 = arith.mulf %101, %105 : vector<8x8xf32>
    %107 = arith.truncf %106 : vector<8x8xf32> to vector<8x8xbf16>
    %cst_32 = arith.constant dense<0.000000e+00> : vector<8x32xf32>
    %108 = tpu.matmul %107, %93, %cst_32 {dimension_numbers = #tpu.dot_dimension_numbers<[1], [0], [0], [1], [0, 0, 1, 1], [], []>} : vector<8x8xbf16>, vector<8x32xbf16>, vector<8x32xf32> -> vector<8x32xf32>
    %109 = arith.truncf %108 : vector<8x32xf32> to vector<8x32xbf16>
    %c0_33 = arith.constant 0 : index
    %c96 = arith.constant 96 : index
    %110 = vector.load %arg18[%c0_33, %c96] : memref<8x128xbf16, #tpu.memory_space<vmem>>, vector<8x32xbf16>
    tpu.vector_store %arg18[%c0_33, %c96], %109 {strides = array<i32>} : memref<8x128xbf16, #tpu.memory_space<vmem>>, vector<8x32xbf16>,
    %c0_34 = arith.constant 0 : index
    %c0_35 = arith.constant 0 : index
    %111 = vector.load %arg18[%c0_34, %c0_35] : memref<8x128xbf16, #tpu.memory_space<vmem>>, vector<8x128xbf16>
    %c0_36 = arith.constant 0 : index
    %c0_37 = arith.constant 0 : index
    %c0_38 = arith.constant 0 : index
    %112 = vector.load %arg7[%c0_36, %c0_37, %c0_38] : memref<1x128x128xbf16, #tpu.memory_space<vmem>>, vector<1x128x128xbf16>
    %113 = vector.shape_cast %112 : vector<1x128x128xbf16> to vector<128x128xbf16>
    %cst_39 = arith.constant dense<0.000000e+00> : vector<8x128xf32>
    %114 = tpu.matmul %111, %113, %cst_39 {dimension_numbers = #tpu.dot_dimension_numbers<[1], [0], [0], [1], [0, 0, 1, 1], [], []>} : vector<8x128xbf16>, vector<128x128xbf16>, vector<8x128xf32> -> vector<8x128xf32>
    %c0_i32_40 = arith.constant 0 : i32
    %115 = arith.cmpi eq, %arg1, %c0_i32_40 : i32
    %116 = arith.extui %115 : i1 to i32
    %c0_i32_41 = arith.constant 0 : i32
    %117 = arith.cmpi ne, %116, %c0_i32_41 : i32
    scf.if %117 {
      %c0_46 = arith.constant 0 : index
      %c0_47 = arith.constant 0 : index
      %124 = vector.load %arg8[%c0_46, %c0_47] : memref<1x128xf32, #tpu.memory_space<vmem>>, vector<1x128xf32>
      %125 = vector.broadcast %124 : vector<1x128xf32> to vector<8x128xf32>
      %126 = arith.addf %114, %125 : vector<8x128xf32>
      %c0_48 = arith.constant 0 : index
      %c0_49 = arith.constant 0 : index
      %127 = vector.load %arg17[%c0_48, %c0_49] : memref<8x128xf32, #tpu.memory_space<vmem>>, vector<8x128xf32>
      tpu.vector_store %arg17[%c0_48, %c0_49], %126 {strides = array<i32>} : memref<8x128xf32, #tpu.memory_space<vmem>>, vector<8x128xf32>,
    } else {
    }
    %c0_i32_42 = arith.constant 0 : i32
    %118 = arith.cmpi sgt, %arg1, %c0_i32_42 : i32
    %119 = arith.extui %118 : i1 to i32
    %c0_i32_43 = arith.constant 0 : i32
    %120 = arith.cmpi ne, %119, %c0_i32_43 : i32
    scf.if %120 {
      %c0_46 = arith.constant 0 : index
      %c0_47 = arith.constant 0 : index
      %124 = vector.load %arg17[%c0_46, %c0_47] : memref<8x128xf32, #tpu.memory_space<vmem>>, vector<8x128xf32>
      %125 = arith.addf %124, %114 : vector<8x128xf32>
      %c0_48 = arith.constant 0 : index
      %c0_49 = arith.constant 0 : index
      %126 = vector.load %arg17[%c0_48, %c0_49] : memref<8x128xf32, #tpu.memory_space<vmem>>, vector<8x128xf32>
      tpu.vector_store %arg17[%c0_48, %c0_49], %125 {strides = array<i32>} : memref<8x128xf32, #tpu.memory_space<vmem>>, vector<8x128xf32>,
    } else {
    }
    %c0_i32_44 = arith.constant 0 : i32
    %121 = arith.cmpi eq, %arg1, %c0_i32_44 : i32
    %122 = arith.extui %121 : i1 to i32
    %c0_i32_45 = arith.constant 0 : i32
    %123 = arith.cmpi ne, %122, %c0_i32_45 : i32
    scf.if %123 {
      %c0_46 = arith.constant 0 : index
      %c0_47 = arith.constant 0 : index
      %c0_48 = arith.constant 0 : index
      %124 = vector.load %arg2[%c0_46, %c0_47, %c0_48] : memref<1x8x128xf32, #tpu.memory_space<vmem>>, vector<1x8x128xf32>
      %125 = vector.shape_cast %124 : vector<1x8x128xf32> to vector<8x128xf32>
      %c0_49 = arith.constant 0 : index
      %c0_50 = arith.constant 0 : index
      %126 = vector.load %arg17[%c0_49, %c0_50] : memref<8x128xf32, #tpu.memory_space<vmem>>, vector<8x128xf32>
      %127 = arith.addf %125, %126 : vector<8x128xf32>
      %c0_51 = arith.constant 0 : index
      %c0_52 = arith.constant 0 : index
      %128 = vector.load %arg9[%c0_51, %c0_52] : memref<1x128xf32, #tpu.memory_space<vmem>>, vector<1x128xf32>
      %c0_53 = arith.constant 0 : index
      %c0_54 = arith.constant 0 : index
      %129 = vector.load %arg10[%c0_53, %c0_54] : memref<1x128xf32, #tpu.memory_space<vmem>>, vector<1x128xf32>
      %cst_55 = arith.constant dense<0.000000e+00> : vector<8xf32>
      %130 = vector.multi_reduction <add>, %127, %cst_55 [1] : vector<8x128xf32> to vector<8xf32>
      %131 = vector.shape_cast %130 : vector<8xf32> to vector<8x1xf32>
      %cst_56 = arith.constant 1.280000e+02 : f32
      %132 = vector.broadcast %cst_56 : f32 to vector<8x1xf32>
      %133 = arith.divf %131, %132 : vector<8x1xf32>
      %134 = vector.broadcast %133 : vector<8x1xf32> to vector<8x128xf32>
      %135 = arith.subf %127, %134 : vector<8x128xf32>
      %136 = arith.mulf %135, %135 : vector<8x128xf32>
      %cst_57 = arith.constant dense<0.000000e+00> : vector<8xf32>
      %137 = vector.multi_reduction <add>, %136, %cst_57 [1] : vector<8x128xf32> to vector<8xf32>
      %138 = vector.shape_cast %137 : vector<8xf32> to vector<8x1xf32>
      %cst_58 = arith.constant 1.280000e+02 : f32
      %139 = vector.broadcast %cst_58 : f32 to vector<8x1xf32>
      %140 = arith.divf %138, %139 : vector<8x1xf32>
      %141 = vector.broadcast %133 : vector<8x1xf32> to vector<8x128xf32>
      %142 = arith.subf %127, %141 : vector<8x128xf32>
      %cst_59 = arith.constant 9.99999974E-6 : f32
      %143 = vector.broadcast %cst_59 : f32 to vector<8x1xf32>
      %144 = arith.addf %140, %143 : vector<8x1xf32>
      %145 = math.rsqrt %144 : vector<8x1xf32>
      %146 = vector.broadcast %145 : vector<8x1xf32> to vector<8x128xf32>
      %147 = arith.mulf %142, %146 : vector<8x128xf32>
      %148 = vector.broadcast %128 : vector<1x128xf32> to vector<8x128xf32>
      %149 = arith.mulf %147, %148 : vector<8x128xf32>
      %150 = vector.broadcast %129 : vector<1x128xf32> to vector<8x128xf32>
      %151 = arith.addf %149, %150 : vector<8x128xf32>
      %152 = arith.truncf %151 : vector<8x128xf32> to vector<8x128xbf16>
      %cst_60 = arith.constant 0.000000e+00 : f32
      %153 = vector.broadcast %cst_60 : f32 to vector<8x128xf32>
      %c0_61 = arith.constant 0 : index
      %c0_62 = arith.constant 0 : index
      %154 = vector.load %arg11[%c0_61, %c0_62] : memref<128x512xbf16, #tpu.memory_space<vmem>>, vector<128x512xbf16>
      %cst_63 = arith.constant dense<0.000000e+00> : vector<8x512xf32>
      %155 = tpu.matmul %152, %154, %cst_63 {dimension_numbers = #tpu.dot_dimension_numbers<[1], [0], [0], [1], [0, 0, 1, 1], [], []>} : vector<8x128xbf16>, vector<128x512xbf16>, vector<8x512xf32> -> vector<8x512xf32>
      %c0_64 = arith.constant 0 : index
      %c0_65 = arith.constant 0 : index
      %156 = vector.load %arg12[%c0_64, %c0_65] : memref<1x512xf32, #tpu.memory_space<vmem>>, vector<1x512xf32>
      %157 = vector.broadcast %156 : vector<1x512xf32> to vector<8x512xf32>
      %158 = arith.addf %155, %157 : vector<8x512xf32>
      %cst_66 = arith.constant 5.000000e-01 : f32
      %159 = vector.broadcast %cst_66 : f32 to vector<8x512xf32>
      %160 = arith.mulf %159, %158 : vector<8x512xf32>
      %cst_67 = arith.constant 4.471500e-02 : f32
      %161 = vector.broadcast %cst_67 : f32 to vector<8x512xf32>
      %162 = arith.mulf %161, %158 : vector<8x512xf32>
      %163 = arith.mulf %162, %158 : vector<8x512xf32>
      %164 = arith.mulf %163, %158 : vector<8x512xf32>
      %165 = arith.addf %158, %164 : vector<8x512xf32>
      %cst_68 = arith.constant 0.797884583 : f32
      %166 = vector.broadcast %cst_68 : f32 to vector<8x512xf32>
      %167 = arith.mulf %166, %165 : vector<8x512xf32>
      %168 = math.tanh %167 : vector<8x512xf32>
      %cst_69 = arith.constant 1.000000e+00 : f32
      %169 = vector.broadcast %cst_69 : f32 to vector<8x512xf32>
      %170 = arith.addf %169, %168 : vector<8x512xf32>
      %171 = arith.mulf %160, %170 : vector<8x512xf32>
      %172 = arith.truncf %171 : vector<8x512xf32> to vector<8x512xbf16>
      %c0_70 = arith.constant 0 : index
      %c0_71 = arith.constant 0 : index
      %173 = vector.load %arg13[%c0_70, %c0_71] : memref<512x128xbf16, #tpu.memory_space<vmem>>, vector<512x128xbf16>
      %cst_72 = arith.constant dense<0.000000e+00> : vector<8x128xf32>
      %174 = tpu.matmul %172, %173, %cst_72 {dimension_numbers = #tpu.dot_dimension_numbers<[1], [0], [0], [1], [0, 0, 1, 1], [], []>} : vector<8x512xbf16>, vector<512x128xbf16>, vector<8x128xf32> -> vector<8x128xf32>
      %175 = arith.addf %153, %174 : vector<8x128xf32>
      %176 = arith.addf %127, %175 : vector<8x128xf32>
      %c0_73 = arith.constant 0 : index
      %c0_74 = arith.constant 0 : index
      %177 = vector.load %arg14[%c0_73, %c0_74] : memref<1x128xf32, #tpu.memory_space<vmem>>, vector<1x128xf32>
      %178 = vector.broadcast %177 : vector<1x128xf32> to vector<8x128xf32>
      %179 = arith.addf %176, %178 : vector<8x128xf32>
      %c0_75 = arith.constant 0 : index
      %c0_76 = arith.constant 0 : index
      %c0_77 = arith.constant 0 : index
      %180 = vector.load %arg15[%c0_75, %c0_76, %c0_77] : memref<1x8x128xf32, #tpu.memory_space<vmem>>, vector<1x8x128xf32>
      %181 = vector.shape_cast %180 : vector<1x8x128xf32> to vector<8x128xf32>
      %182 = vector.shape_cast %179 : vector<8x128xf32> to vector<1x8x128xf32>
      tpu.vector_store %arg15[%c0_75, %c0_76, %c0_77], %182 {strides = array<i32>} : memref<1x8x128xf32, #tpu.memory_space<vmem>>, vector<1x8x128xf32>,
    } else {
    }
    return
  }
  func.func @transform_0(%arg0: i32, %arg1: i32) -> (i32, i32, i32) {
    %c0_i32 = arith.constant 0 : i32
    %c0_i32_0 = arith.constant 0 : i32
    %c0_i32_1 = arith.constant 0 : i32
    return %arg0, %c0_i32, %c0_i32_0 : i32, i32, i32
  }
  func.func @transform_1(%arg0: i32, %arg1: i32) -> (i32, i32) {
    %c0_i32 = arith.constant 0 : i32
    %c0_i32_0 = arith.constant 0 : i32
    %c0_i32_1 = arith.constant 0 : i32
    return %c0_i32, %c0_i32_0 : i32, i32
  }
  func.func @transform_2(%arg0: i32, %arg1: i32) -> (i32, i32) {
    %c0_i32 = arith.constant 0 : i32
    %c0_i32_0 = arith.constant 0 : i32
    %c0_i32_1 = arith.constant 0 : i32
    return %c0_i32, %c0_i32_0 : i32, i32
  }
  func.func @transform_3(%arg0: i32, %arg1: i32) -> (i32, i32, i32) {
    %c0_i32 = arith.constant 0 : i32
    %c0_i32_0 = arith.constant 0 : i32
    %c0_i32_1 = arith.constant 0 : i32
    return %arg1, %c0_i32, %c0_i32_0 : i32, i32, i32
  }
  func.func @transform_4(%arg0: i32, %arg1: i32) -> (i32, i32, i32) {
    %c0_i32 = arith.constant 0 : i32
    %c0_i32_0 = arith.constant 0 : i32
    %c0_i32_1 = arith.constant 0 : i32
    return %arg1, %c0_i32, %c0_i32_0 : i32, i32, i32
  }
  func.func @transform_5(%arg0: i32, %arg1: i32) -> (i32, i32, i32) {
    %c0_i32 = arith.constant 0 : i32
    %c0_i32_0 = arith.constant 0 : i32
    %c0_i32_1 = arith.constant 0 : i32
    return %arg1, %c0_i32, %c0_i32_0 : i32, i32, i32
  }
  func.func @transform_6(%arg0: i32, %arg1: i32) -> (i32, i32) {
    %c0_i32 = arith.constant 0 : i32
    %c0_i32_0 = arith.constant 0 : i32
    %c0_i32_1 = arith.constant 0 : i32
    return %c0_i32, %c0_i32_0 : i32, i32
  }
  func.func @transform_7(%arg0: i32, %arg1: i32) -> (i32, i32) {
    %c0_i32 = arith.constant 0 : i32
    %c0_i32_0 = arith.constant 0 : i32
    %c0_i32_1 = arith.constant 0 : i32
    return %c0_i32, %c0_i32_0 : i32, i32
  }
  func.func @transform_8(%arg0: i32, %arg1: i32) -> (i32, i32) {
    %c0_i32 = arith.constant 0 : i32
    %c0_i32_0 = arith.constant 0 : i32
    %c0_i32_1 = arith.constant 0 : i32
    return %c0_i32, %c0_i32_0 : i32, i32
  }
  func.func @transform_9(%arg0: i32, %arg1: i32) -> (i32, i32) {
    %c0_i32 = arith.constant 0 : i32
    %c0_i32_0 = arith.constant 0 : i32
    %c0_i32_1 = arith.constant 0 : i32
    return %c0_i32, %c0_i32_0 : i32, i32
  }
  func.func @transform_10(%arg0: i32, %arg1: i32) -> (i32, i32) {
    %c0_i32 = arith.constant 0 : i32
    %c0_i32_0 = arith.constant 0 : i32
    %c0_i32_1 = arith.constant 0 : i32
    return %c0_i32, %c0_i32_0 : i32, i32
  }
  func.func @transform_11(%arg0: i32, %arg1: i32) -> (i32, i32) {
    %c0_i32 = arith.constant 0 : i32
    %c0_i32_0 = arith.constant 0 : i32
    %c0_i32_1 = arith.constant 0 : i32
    return %c0_i32, %c0_i32_0 : i32, i32
  }
  func.func @transform_12(%arg0: i32, %arg1: i32) -> (i32, i32) {
    %c0_i32 = arith.constant 0 : i32
    %c0_i32_0 = arith.constant 0 : i32
    %c0_i32_1 = arith.constant 0 : i32
    return %c0_i32, %c0_i32_0 : i32, i32
  }
  func.func @transform_13(%arg0: i32, %arg1: i32) -> (i32, i32, i32) {
    %c0_i32 = arith.constant 0 : i32
    %c0_i32_0 = arith.constant 0 : i32
    %c0_i32_1 = arith.constant 0 : i32
    return %arg0, %c0_i32, %c0_i32_0 : i32, i32, i32
  }
}

</mosaic_0001>

<llo_original>
// kernel: tpu_custom_call.1
$region0: #{tpu_custom_call.1}
  #allocation0 [shape = 'u32[]', space=smem, size = 0x4, offset = 0x4, fixed_abs, tag = 'smem constant byte address 0x4 - core index']
  #allocation1 [shape = 'u32[144,128]{1,0:T(1,128)}', space=vmem, size = 0x12000, scoped, tag = 'internal scratch']
  #allocation2 [shape = 'bf16[8,128]{1,0:T(8,128)(2,1)}', space=vmem, size = 0x800, scoped, tag = 'scratch operand']
  #allocation3 [shape = 'f32[8,128]{1,0:T(8,128)}', space=vmem, size = 0x1000, scoped, tag = 'scratch operand']
  #allocation4 [shape = 'bf16[8,128]{1,0:T(8,128)(2,1)}', space=vmem, size = 0x800, scoped, tag = 'scratch operand']
  %s0 = inlined_call_operand.hbm [shape: f32[2,8,128], index: 0, kind: input, shape index: {}]
  %s1 = inlined_call_operand.hbm [shape: f32[1,128], index: 1, kind: input, shape index: {}]
  %s2 = inlined_call_operand.hbm [shape: f32[1,128], index: 2, kind: input, shape index: {}]
  %s3 = inlined_call_operand.hbm [shape: bf16[1,128,384], index: 3, kind: input, shape index: {}]
  %s4 = inlined_call_operand.vmem [shape: f32[1,1,384], index: 4, kind: input, shape index: {}]
  %s5 = inlined_call_operand.hbm [shape: bf16[1,128,128], index: 5, kind: input, shape index: {}]
  %s6 = inlined_call_operand.vmem [shape: f32[1,128], index: 6, kind: input, shape index: {}]
  %s7 = inlined_call_operand.vmem [shape: f32[1,128], index: 7, kind: input, shape index: {}]
  %s8 = inlined_call_operand.vmem [shape: f32[1,128], index: 8, kind: input, shape index: {}]
  %s9 = inlined_call_operand.hbm [shape: bf16[128,512], index: 9, kind: input, shape index: {}]
  %s10 = inlined_call_operand.vmem [shape: f32[1,512], index: 10, kind: input, shape index: {}]
  %s11 = inlined_call_operand.hbm [shape: bf16[512,128], index: 11, kind: input, shape index: {}]
  %s12 = inlined_call_operand.vmem [shape: f32[1,128], index: 12, kind: input, shape index: {}]
  %s13 = inlined_call_operand.hbm [shape: f32[2,8,128], index: 13, kind: output, shape index: {}]
  %s14 = sld [smem:[#allocation0]]
  $region129: #{tpu_custom_call.1} parent=0
    _
  %s16 = ssub.s32 1, %s14
  %s17 = scalar_select 0, %s16, %s14
  $region1: #{tpu_custom_call.1} parent=0
    #allocation5 [shape = 'u8[8192]{0}', space=vmem, size = 0x2000, scoped, tag = 'input window, operand 0']
    #allocation6 [shape = 's32[2]{0}', space=sflag, size = 0x8, scoped, tag = 'scoped memory for tpu_custom_call.1']
    #allocation7 [shape = 's32[2]{0}', space=sflag, size = 0x8, scoped, tag = 'scoped memory for tpu_custom_call.1']
    #allocation8 [shape = 'u8[512]{0}', space=vmem, size = 0x400, scoped, tag = 'input window, operand 1, single buffered']
    #allocation9 [shape = 's32[1]{0}', space=sflag, size = 0x4, scoped, tag = 'scoped memory for tpu_custom_call.1']
    #allocation10 [shape = 'u8[512]{0}', space=vmem, size = 0x400, scoped, tag = 'input window, operand 2, single buffered']
    #allocation11 [shape = 'u8[98304]{0}', space=vmem, size = 0x18000, scoped, tag = 'input window, operand 3, single buffered']
    #allocation12 [shape = 's32[1]{0}', space=sflag, size = 0x4, scoped, tag = 'scoped memory for tpu_custom_call.1']
    #allocation13 [shape = 'u8[32768]{0}', space=vmem, size = 0x8000, scoped, tag = 'input window, operand 5, single buffered']
    #allocation14 [shape = 'u8[131072]{0}', space=vmem, size = 0x20000, scoped, tag = 'input window, operand 9, single buffered']
    #allocation15 [shape = 's32[1]{0}', space=sflag, size = 0x4, scoped, tag = 'scoped memory for tpu_custom_call.1']
    #allocation16 [shape = 'u8[131072]{0}', space=vmem, size = 0x20000, scoped, tag = 'input window, operand 11, single buffered']
    #allocation17 [shape = 'u8[8192]{0}', space=vmem, size = 0x2000, scoped, tag = 'output window, operand 0']
    %18 = vsyncpa [#allocation6], 0
    %s19 = scalar_lea.sflag [#allocation6], 1
    %20 = vsyncpa %s19, 0
    %21 = vsyncpa [#allocation9], 0
    %22 = vsyncpa [#allocation12], 0
    %23 = vsyncpa [#allocation15], 0
    %24 = vsyncpa [#allocation7], 0
    %s25 = scalar_lea.sflag [#allocation7], 1
    %26 = vsyncpa %s25, 0
    loop: start=0, step=1, limit=4
    $region2: #{tpu_custom_call.1} parent=1 // loop_pre_header
      _
    $region3: #{tpu_custom_call.1} parent=1 // loop_header
      %s28 = sphi 0, %s32
      %p29 = scmp.ge.s32.totalorder %s28, 4
      %s35 = sphi 0, %s47
      %s36 = sphi 0, %s43
      %s37 = sphi 0, %s35
      %s38 = sphi 0, %s36
      %s39 = sphi 0, %s37
      %s40 = sphi 0, %s38
      %s50 = sphi 0, %s52
      %s53 = sphi 0, %s50
      %s54 = sphi 0, %s53
      %s70 = sphi 0, %s54
      %s74 = sphi 0, %s74
      %s76 = sphi 0, %s74
      %s77 = sphi 0, %s76
      %s91 = sphi 0, %s77
      %s95 = sphi 0, %s95
      %s97 = sphi 0, %s95
      %s98 = sphi 0, %s97
      %s112 = sphi 0, %s98
      %s118 = sphi 0, %s120
      %s121 = sphi 0, %s118
      %s122 = sphi 0, %s121
      %s138 = sphi 0, %s122
      %s144 = sphi 0, %s146
      %s147 = sphi 0, %s144
      %s148 = sphi 0, %s147
      %s164 = sphi 0, %s148
      %s170 = sphi 0, %s172
      %s173 = sphi 0, %s170
      %s174 = sphi 0, %s173
      %s190 = sphi 0, %s174
      %s194 = sphi 0, %s194
      %s196 = sphi 0, %s194
      %s197 = sphi 0, %s196
      %s211 = sphi 0, %s197
      %s215 = sphi 0, %s215
      %s217 = sphi 0, %s215
      %s218 = sphi 0, %s217
      %s232 = sphi 0, %s218
      %s236 = sphi 0, %s236
      %s238 = sphi 0, %s236
      %s239 = sphi 0, %s238
      %s253 = sphi 0, %s239
      %s257 = sphi 0, %s257
      %s259 = sphi 0, %s257
      %s260 = sphi 0, %s259
      %s274 = sphi 0, %s260
      %s278 = sphi 0, %s278
      %s280 = sphi 0, %s278
      %s281 = sphi 0, %s280
      %s295 = sphi 0, %s281
      %s299 = sphi 0, %s299
      %s301 = sphi 0, %s299
      %s302 = sphi 0, %s301
      %s316 = sphi 0, %s302
      %s320 = sphi 0, %s320
      %s322 = sphi 0, %s320
      %s323 = sphi 0, %s322
      %s337 = sphi 0, %s323
      %s343 = sphi 0, %s345
      %s346 = sphi 0, %s343
      %s347 = sphi 0, %s346
      %s363 = sphi 0, %s347
    $region4: #{tpu_custom_call.1} parent=1 // loop_header_branch
      %31 = sbr.rel (%p29) target = $region8
    $region5: #{tpu_custom_call.1} parent=1 // loop_body
      %s33 = ssub.s32 %s28, 1
      %s34 = ssub.s32 %s28, 2
      %s41 = sadd.s32 1, %s36
      %p42 = scmp.ge.s32.totalorder %s41, 1
      %s43 = scalar_select %p42, 0, %s41
      %s44 = sadd.s32 1, %s35
      %s45 = scalar_select %p42, %s44, %s35
      %p46 = scmp.ge.s32.totalorder %s45, 2
      %s47 = scalar_select %p46, 0, %s45
      %s48 = ssub.s32 %s35, %s47
      %p49 = scmp.eq.s32.totalorder %s48, 0
      %s51 = sadd.s32 %s50, 1
      %s52 = scalar_select %p49, %s50, %s51
      %p55 = pneg %p49
      %p56 = scmp.eq.s32.totalorder %s28, 1
      %p57 = por %p55, %p56
      %p58 = scmp.ne.s32.totalorder %s50, %s53
      %p59 = scmp.eq.s32.totalorder %s28, 0
      %p60 = por %p58, %p59
      %p61 = scmp.ne.s32.totalorder %s50, %s53
      %p62 = scmp.eq.s32.totalorder %s33, 1
      %p63 = por %p61, %p62
      %p64 = scmp.ne.s32.totalorder %s53, %s54
      %p65 = scmp.eq.s32.totalorder %s33, 0
      %p66 = por %p64, %p65
      %p67 = scmp.ne.s32.totalorder %s53, %s54
      %p68 = scmp.eq.s32.totalorder %s34, 1
      %p69 = por %p67, %p68
      %p71 = scmp.ne.s32.totalorder %s54, %s70
      %p72 = scmp.eq.s32.totalorder %s34, 0
      %p73 = por %p71, %p72
      %s75 = sadd.s32 %s74, 1
      %p78 = scmp.eq.s32.totalorder %s28, 1
      %p79 = scmp.ne.s32.totalorder %s74, %s76
      %p80 = scmp.eq.s32.totalorder %s28, 0
      %p81 = por %p79, %p80
      %p82 = scmp.ne.s32.totalorder %s74, %s76
      %p83 = scmp.eq.s32.totalorder %s33, 1
      %p84 = por %p82, %p83
      %p85 = scmp.ne.s32.totalorder %s76, %s77
      %p86 = scmp.eq.s32.totalorder %s33, 0
      %p87 = por %p85, %p86
      %p88 = scmp.ne.s32.totalorder %s76, %s77
      %p89 = scmp.eq.s32.totalorder %s34, 1
      %p90 = por %p88, %p89
      %p92 = scmp.ne.s32.totalorder %s77, %s91
      %p93 = scmp.eq.s32.totalorder %s34, 0
      %p94 = por %p92, %p93
      %s96 = sadd.s32 %s95, 1
      %p99 = scmp.eq.s32.totalorder %s28, 1
      %p100 = scmp.ne.s32.totalorder %s95, %s97
      %p101 = scmp.eq.s32.totalorder %s28, 0
      %p102 = por %p100, %p101
      %p103 = scmp.ne.s32.totalorder %s95, %s97
      %p104 = scmp.eq.s32.totalorder %s33, 1
      %p105 = por %p103, %p104
      %p106 = scmp.ne.s32.totalorder %s97, %s98
      %p107 = scmp.eq.s32.totalorder %s33, 0
      %p108 = por %p106, %p107
      %p109 = scmp.ne.s32.totalorder %s97, %s98
      %p110 = scmp.eq.s32.totalorder %s34, 1
      %p111 = por %p109, %p110
      %p113 = scmp.ne.s32.totalorder %s98, %s112
      %p114 = scmp.eq.s32.totalorder %s34, 0
      %p115 = por %p113, %p114
      %s116 = ssub.s32 %s36, %s43
      %p117 = scmp.eq.s32.totalorder %s116, 0
      %s119 = sadd.s32 %s118, 1
      %s120 = scalar_select %p117, %s118, %s119
      %p123 = pneg %p117
      %p124 = scmp.eq.s32.totalorder %s28, 1
      %p125 = por %p123, %p124
      %p126 = scmp.ne.s32.totalorder %s118, %s121
      %p127 = scmp.eq.s32.totalorder %s28, 0
      %p128 = por %p126, %p127
      %p129 = scmp.ne.s32.totalorder %s118, %s121
      %p130 = scmp.eq.s32.totalorder %s33, 1
      %p131 = por %p129, %p130
      %p132 = scmp.ne.s32.totalorder %s121, %s122
      %p133 = scmp.eq.s32.totalorder %s33, 0
      %p134 = por %p132, %p133
      %p135 = scmp.ne.s32.totalorder %s121, %s122
      %p136 = scmp.eq.s32.totalorder %s34, 1
      %p137 = por %p135, %p136
      %p139 = scmp.ne.s32.totalorder %s122, %s138
      %p140 = scmp.eq.s32.totalorder %s34, 0
      %p141 = por %p139, %p140
      %s142 = ssub.s32 %s36, %s43
      %p143 = scmp.eq.s32.totalorder %s142, 0
      %s145 = sadd.s32 %s144, 1
      %s146 = scalar_select %p143, %s144, %s145
      %p149 = pneg %p143
      %p150 = scmp.eq.s32.totalorder %s28, 1
      %p151 = por %p149, %p150
      %p152 = scmp.ne.s32.totalorder %s144, %s147
      %p153 = scmp.eq.s32.totalorder %s28, 0
      %p154 = por %p152, %p153
      %p155 = scmp.ne.s32.totalorder %s144, %s147
      %p156 = scmp.eq.s32.totalorder %s33, 1
      %p157 = por %p155, %p156
      %p158 = scmp.ne.s32.totalorder %s147, %s148
      %p159 = scmp.eq.s32.totalorder %s33, 0
      %p160 = por %p158, %p159
      %p161 = scmp.ne.s32.totalorder %s147, %s148
      %p162 = scmp.eq.s32.totalorder %s34, 1
      %p163 = por %p161, %p162
      %p165 = scmp.ne.s32.totalorder %s148, %s164
      %p166 = scmp.eq.s32.totalorder %s34, 0
      %p167 = por %p165, %p166
      %s168 = ssub.s32 %s36, %s43
      %p169 = scmp.eq.s32.totalorder %s168, 0
      %s171 = sadd.s32 %s170, 1
      %s172 = scalar_select %p169, %s170, %s171
      %p175 = pneg %p169
      %p176 = scmp.eq.s32.totalorder %s28, 1
      %p177 = por %p175, %p176
      %p178 = scmp.ne.s32.totalorder %s170, %s173
      %p179 = scmp.eq.s32.totalorder %s28, 0
      %p180 = por %p178, %p179
      %p181 = scmp.ne.s32.totalorder %s170, %s173
      %p182 = scmp.eq.s32.totalorder %s33, 1
      %p183 = por %p181, %p182
      %p184 = scmp.ne.s32.totalorder %s173, %s174
      %p185 = scmp.eq.s32.totalorder %s33, 0
      %p186 = por %p184, %p185
      %p187 = scmp.ne.s32.totalorder %s173, %s174
      %p188 = scmp.eq.s32.totalorder %s34, 1
      %p189 = por %p187, %p188
      %p191 = scmp.ne.s32.totalorder %s174, %s190
      %p192 = scmp.eq.s32.totalorder %s34, 0
      %p193 = por %p191, %p192
      %s195 = sadd.s32 %s194, 1
      %p198 = scmp.eq.s32.totalorder %s28, 1
      %p199 = scmp.ne.s32.totalorder %s194, %s196
      %p200 = scmp.eq.s32.totalorder %s28, 0
      %p201 = por %p199, %p200
      %p202 = scmp.ne.s32.totalorder %s194, %s196
      %p203 = scmp.eq.s32.totalorder %s33, 1
      %p204 = por %p202, %p203
      %p205 = scmp.ne.s32.totalorder %s196, %s197
      %p206 = scmp.eq.s32.totalorder %s33, 0
      %p207 = por %p205, %p206
      %p208 = scmp.ne.s32.totalorder %s196, %s197
      %p209 = scmp.eq.s32.totalorder %s34, 1
      %p210 = por %p208, %p209
      %p212 = scmp.ne.s32.totalorder %s197, %s211
      %p213 = scmp.eq.s32.totalorder %s34, 0
      %p214 = por %p212, %p213
      %s216 = sadd.s32 %s215, 1
      %p219 = scmp.eq.s32.totalorder %s28, 1
      %p220 = scmp.ne.s32.totalorder %s215, %s217
      %p221 = scmp.eq.s32.totalorder %s28, 0
      %p222 = por %p220, %p221
      %p223 = scmp.ne.s32.totalorder %s215, %s217
      %p224 = scmp.eq.s32.totalorder %s33, 1
      %p225 = por %p223, %p224
      %p226 = scmp.ne.s32.totalorder %s217, %s218
      %p227 = scmp.eq.s32.totalorder %s33, 0
      %p228 = por %p226, %p227
      %p229 = scmp.ne.s32.totalorder %s217, %s218
      %p230 = scmp.eq.s32.totalorder %s34, 1
      %p231 = por %p229, %p230
      %p233 = scmp.ne.s32.totalorder %s218, %s232
      %p234 = scmp.eq.s32.totalorder %s34, 0
      %p235 = por %p233, %p234
      %s237 = sadd.s32 %s236, 1
      %p240 = scmp.eq.s32.totalorder %s28, 1
      %p241 = scmp.ne.s32.totalorder %s236, %s238
      %p242 = scmp.eq.s32.totalorder %s28, 0
      %p243 = por %p241, %p242
      %p244 = scmp.ne.s32.totalorder %s236, %s238
      %p245 = scmp.eq.s32.totalorder %s33, 1
      %p246 = por %p244, %p245
      %p247 = scmp.ne.s32.totalorder %s238, %s239
      %p248 = scmp.eq.s32.totalorder %s33, 0
      %p249 = por %p247, %p248
      %p250 = scmp.ne.s32.totalorder %s238, %s239
      %p251 = scmp.eq.s32.totalorder %s34, 1
      %p252 = por %p250, %p251
      %p254 = scmp.ne.s32.totalorder %s239, %s253
      %p255 = scmp.eq.s32.totalorder %s34, 0
      %p256 = por %p254, %p255
      %s258 = sadd.s32 %s257, 1
      %p261 = scmp.eq.s32.totalorder %s28, 1
      %p262 = scmp.ne.s32.totalorder %s257, %s259
      %p263 = scmp.eq.s32.totalorder %s28, 0
      %p264 = por %p262, %p263
      %p265 = scmp.ne.s32.totalorder %s257, %s259
      %p266 = scmp.eq.s32.totalorder %s33, 1
      %p267 = por %p265, %p266
      %p268 = scmp.ne.s32.totalorder %s259, %s260
      %p269 = scmp.eq.s32.totalorder %s33, 0
      %p270 = por %p268, %p269
      %p271 = scmp.ne.s32.totalorder %s259, %s260
      %p272 = scmp.eq.s32.totalorder %s34, 1
      %p273 = por %p271, %p272
      %p275 = scmp.ne.s32.totalorder %s260, %s274
      %p276 = scmp.eq.s32.totalorder %s34, 0
      %p277 = por %p275, %p276
      %s279 = sadd.s32 %s278, 1
      %p282 = scmp.eq.s32.totalorder %s28, 1
      %p283 = scmp.ne.s32.totalorder %s278, %s280
      %p284 = scmp.eq.s32.totalorder %s28, 0
      %p285 = por %p283, %p284
      %p286 = scmp.ne.s32.totalorder %s278, %s280
      %p287 = scmp.eq.s32.totalorder %s33, 1
      %p288 = por %p286, %p287
      %p289 = scmp.ne.s32.totalorder %s280, %s281
      %p290 = scmp.eq.s32.totalorder %s33, 0
      %p291 = por %p289, %p290
      %p292 = scmp.ne.s32.totalorder %s280, %s281
      %p293 = scmp.eq.s32.totalorder %s34, 1
      %p294 = por %p292, %p293
      %p296 = scmp.ne.s32.totalorder %s281, %s295
      %p297 = scmp.eq.s32.totalorder %s34, 0
      %p298 = por %p296, %p297
      %s300 = sadd.s32 %s299, 1
      %p303 = scmp.eq.s32.totalorder %s28, 1
      %p304 = scmp.ne.s32.totalorder %s299, %s301
      %p305 = scmp.eq.s32.totalorder %s28, 0
      %p306 = por %p304, %p305
      %p307 = scmp.ne.s32.totalorder %s299, %s301
      %p308 = scmp.eq.s32.totalorder %s33, 1
      %p309 = por %p307, %p308
      %p310 = scmp.ne.s32.totalorder %s301, %s302
      %p311 = scmp.eq.s32.totalorder %s33, 0
      %p312 = por %p310, %p311
      %p313 = scmp.ne.s32.totalorder %s301, %s302
      %p314 = scmp.eq.s32.totalorder %s34, 1
      %p315 = por %p313, %p314
      %p317 = scmp.ne.s32.totalorder %s302, %s316
      %p318 = scmp.eq.s32.totalorder %s34, 0
      %p319 = por %p317, %p318
      %s321 = sadd.s32 %s320, 1
      %p324 = scmp.eq.s32.totalorder %s28, 1
      %p325 = scmp.ne.s32.totalorder %s320, %s322
      %p326 = scmp.eq.s32.totalorder %s28, 0
      %p327 = por %p325, %p326
      %p328 = scmp.ne.s32.totalorder %s320, %s322
      %p329 = scmp.eq.s32.totalorder %s33, 1
      %p330 = por %p328, %p329
      %p331 = scmp.ne.s32.totalorder %s322, %s323
      %p332 = scmp.eq.s32.totalorder %s33, 0
      %p333 = por %p331, %p332
      %p334 = scmp.ne.s32.totalorder %s322, %s323
      %p335 = scmp.eq.s32.totalorder %s34, 1
      %p336 = por %p334, %p335
      %p338 = scmp.ne.s32.totalorder %s323, %s337
      %p339 = scmp.eq.s32.totalorder %s34, 0
      %p340 = por %p338, %p339
      %s341 = ssub.s32 %s35, %s47
      %p342 = scmp.eq.s32.totalorder %s341, 0
      %s344 = sadd.s32 %s343, 1
      %s345 = scalar_select %p342, %s343, %s344
      %p348 = pneg %p342
      %p349 = scmp.eq.s32.totalorder %s28, 1
      %p350 = por %p348, %p349
      %p351 = scmp.ne.s32.totalorder %s343, %s346
      %p352 = scmp.eq.s32.totalorder %s28, 0
      %p353 = por %p351, %p352
      %p354 = scmp.ne.s32.totalorder %s343, %s346
      %p355 = scmp.eq.s32.totalorder %s33, 1
      %p356 = por %p354, %p355
      %p357 = scmp.ne.s32.totalorder %s346, %s347
      %p358 = scmp.eq.s32.totalorder %s33, 0
      %p359 = por %p357, %p358
      %p360 = scmp.ne.s32.totalorder %s346, %s347
      %p361 = scmp.eq.s32.totalorder %s34, 1
      %p362 = por %p360, %p361
      %p364 = scmp.ne.s32.totalorder %s347, %s363
      %p365 = scmp.eq.s32.totalorder %s34, 0
      %p366 = por %p364, %p365
      %p367 = scmp.le.s32.totalorder 1, %s28
      %p368 = scmp.lt.s32.totalorder %s28, 3
      %p369 = pnand %p367, %p368
      %p370 = pneg %p369
      // Predicated region
      $region9: #{tpu_custom_call.1} parent=5 // pred_check
        _
      $region10: #{tpu_custom_call.1} parent=5 // pred_check_branch
        %372 = sbr.rel (%p369) target = $region12
      $region11: #{tpu_custom_call.1} parent=5 // pred_region
        %s373 = ssub.s32 %s28, 1
        // Predicated region
        $region13: #{tpu_custom_call.1} parent=11 // pred_check
          %p374 = pneg %p87
        $region14: #{tpu_custom_call.1} parent=11 // pred_check_branch
          %376 = sbr.rel (%p374) target = $region16
        $region15: #{tpu_custom_call.1} parent=11 // pred_region
          %s378 = ssub.s32 16, 16
          %379 = vsyncadd [#allocation9], %s378
          %s381 = sshll.u32 [#allocation8], 4
          %s382 = int_to_ptr.vmem [resolvable:$true] %s381
          %384 = dma.hbm_to_vmem [thread:$0]  %s1, 16, %s382, [#allocation9]
        $region16: #{tpu_custom_call.1} parent=11 // pred_fallthru
          _
        // Predicated region
        $region17: #{tpu_custom_call.1} parent=11 // pred_check
          %p385 = pneg %p108
        $region18: #{tpu_custom_call.1} parent=11 // pred_check_branch
          %387 = sbr.rel (%p385) target = $region20
        $region19: #{tpu_custom_call.1} parent=11 // pred_region
          %s389 = ssub.s32 16, 16
          %390 = vsyncadd [#allocation9], %s389
          %s392 = sshll.u32 [#allocation10], 4
          %s393 = int_to_ptr.vmem [resolvable:$true] %s392
          %395 = dma.hbm_to_vmem [thread:$0]  %s2, 16, %s393, [#allocation9]
        $region20: #{tpu_custom_call.1} parent=11 // pred_fallthru
          _
        // Predicated region
        $region21: #{tpu_custom_call.1} parent=11 // pred_check
          %p396 = pneg %p134
        $region22: #{tpu_custom_call.1} parent=11 // pred_check_branch
          %398 = sbr.rel (%p396) target = $region24
        $region23: #{tpu_custom_call.1} parent=11 // pred_region
          %s400 = ssub.s32 3072, 3072
          %401 = vsyncadd [#allocation12], %s400
          %s402 = smul.addr %s38, 48
          %s403 = smul.addr %s402, 64
          %s404 = scalar_lea.hbm %s3, %s403
          %s405 = sshll.u32 [#allocation11], 4
          %s406 = int_to_ptr.vmem [resolvable:$true] %s405
          %411 = dma.hbm_to_vmem [thread:$0]  %s404, 3072, %s406, [#allocation12], 192, 192, 12
        $region24: #{tpu_custom_call.1} parent=11 // pred_fallthru
          _
        // Predicated region
        $region25: #{tpu_custom_call.1} parent=11 // pred_check
          %p412 = pneg %p160
        $region26: #{tpu_custom_call.1} parent=11 // pred_check_branch
          %414 = sbr.rel (%p412) target = $region28
        $region27: #{tpu_custom_call.1} parent=11 // pred_region
          %p415 = scmp.lt.s32.totalorder %s38, 0
          %s416 = scalar_select %p415, %s38, 0
          %s417 = smul.addr %s416, 3
          %s418 = scalar_lea.vmem %s4, %s417
        $region28: #{tpu_custom_call.1} parent=11 // pred_fallthru
          _
        // Predicated region
        $region29: #{tpu_custom_call.1} parent=11 // pred_check
          %p419 = pneg %p186
        $region30: #{tpu_custom_call.1} parent=11 // pred_check_branch
          %421 = sbr.rel (%p419) target = $region32
        $region31: #{tpu_custom_call.1} parent=11 // pred_region
          %s423 = ssub.s32 1024, 1024
          %424 = vsyncadd [#allocation12], %s423
          %s425 = smul.addr %s38, 16
          %s426 = smul.addr %s425, 64
          %s427 = scalar_lea.hbm %s5, %s426
          %s428 = sshll.u32 [#allocation13], 4
          %s429 = int_to_ptr.vmem [resolvable:$true] %s428
          %434 = dma.hbm_to_vmem [thread:$0]  %s427, 1024, %s429, [#allocation12], 64, 64, 4
        $region32: #{tpu_custom_call.1} parent=11 // pred_fallthru
          _
        // Predicated region
        $region33: #{tpu_custom_call.1} parent=11 // pred_check
          %p435 = pneg %p207
        $region34: #{tpu_custom_call.1} parent=11 // pred_check_branch
          %437 = sbr.rel (%p435) target = $region36
        $region35: #{tpu_custom_call.1} parent=11 // pred_region
          _
        $region36: #{tpu_custom_call.1} parent=11 // pred_fallthru
          _
        // Predicated region
        $region37: #{tpu_custom_call.1} parent=11 // pred_check
          %p438 = pneg %p228
        $region38: #{tpu_custom_call.1} parent=11 // pred_check_branch
          %440 = sbr.rel (%p438) target = $region40
        $region39: #{tpu_custom_call.1} parent=11 // pred_region
          _
        $region40: #{tpu_custom_call.1} parent=11 // pred_fallthru
          _
        // Predicated region
        $region41: #{tpu_custom_call.1} parent=11 // pred_check
          %p441 = pneg %p249
        $region42: #{tpu_custom_call.1} parent=11 // pred_check_branch
          %443 = sbr.rel (%p441) target = $region44
        $region43: #{tpu_custom_call.1} parent=11 // pred_region
          _
        $region44: #{tpu_custom_call.1} parent=11 // pred_fallthru
          _
        // Predicated region
        $region45: #{tpu_custom_call.1} parent=11 // pred_check
          %p444 = pneg %p270
        $region46: #{tpu_custom_call.1} parent=11 // pred_check_branch
          %446 = sbr.rel (%p444) target = $region48
        $region47: #{tpu_custom_call.1} parent=11 // pred_region
          %s448 = ssub.s32 4096, 4096
          %449 = vsyncadd [#allocation15], %s448
          %s450 = sshll.u32 [#allocation14], 4
          %s451 = int_to_ptr.vmem [resolvable:$true] %s450
          %456 = dma.hbm_to_vmem [thread:$0]  %s9, 4096, %s451, [#allocation15], 256, 256, 16
        $region48: #{tpu_custom_call.1} parent=11 // pred_fallthru
          _
        // Predicated region
        $region49: #{tpu_custom_call.1} parent=11 // pred_check
          %p457 = pneg %p291
        $region50: #{tpu_custom_call.1} parent=11 // pred_check_branch
          %459 = sbr.rel (%p457) target = $region52
        $region51: #{tpu_custom_call.1} parent=11 // pred_region
          _
        $region52: #{tpu_custom_call.1} parent=11 // pred_fallthru
          _
        // Predicated region
        $region53: #{tpu_custom_call.1} parent=11 // pred_check
          %p460 = pneg %p312
        $region54: #{tpu_custom_call.1} parent=11 // pred_check_branch
          %462 = sbr.rel (%p460) target = $region56
        $region55: #{tpu_custom_call.1} parent=11 // pred_region
          %s464 = ssub.s32 4096, 4096
          %465 = vsyncadd [#allocation15], %s464
          %s466 = sshll.u32 [#allocation16], 4
          %s467 = int_to_ptr.vmem [resolvable:$true] %s466
          %472 = dma.hbm_to_vmem [thread:$0]  %s11, 4096, %s467, [#allocation15], 64, 64, 4
        $region56: #{tpu_custom_call.1} parent=11 // pred_fallthru
          _
        // Predicated region
        $region57: #{tpu_custom_call.1} parent=11 // pred_check
          %p473 = pneg %p333
        $region58: #{tpu_custom_call.1} parent=11 // pred_check_branch
          %475 = sbr.rel (%p473) target = $region60
        $region59: #{tpu_custom_call.1} parent=11 // pred_region
          _
        $region60: #{tpu_custom_call.1} parent=11 // pred_fallthru
          _
      $region12: #{tpu_custom_call.1} parent=5 // pred_fallthru
        _
      %p476 = scmp.lt.s32.totalorder %s28, 2
      // Predicated region
      $region61: #{tpu_custom_call.1} parent=5 // pred_check
        %p477 = pneg %p476
      $region62: #{tpu_custom_call.1} parent=5 // pred_check_branch
        %479 = sbr.rel (%p477) target = $region64
      $region63: #{tpu_custom_call.1} parent=5 // pred_region
        // Predicated region
        $region65: #{tpu_custom_call.1} parent=63 // pred_check
          %p480 = pneg %p60
        $region66: #{tpu_custom_call.1} parent=63 // pred_check_branch
          %482 = sbr.rel (%p480) target = $region68
        $region67: #{tpu_custom_call.1} parent=63 // pred_region
          %s483 = sand.u32 %s50, 1
          %s484 = scalar_lea.sflag [#allocation6], %s483
          %s485 = sand.u32 %s50, 1
          %s486 = smul.addr %s485, 8
          %s487 = scalar_lea.vmem [#allocation5], %s486
          %s489 = ssub.s32 128, 128
          %490 = vsyncadd %s484, %s489
          %s491 = smul.addr %s35, 128
          %s492 = scalar_lea.hbm %s0, %s491
          %s494 = sshll.u32 %s487, 4
          %s495 = int_to_ptr.vmem [resolvable:$true] %s494
          %497 = dma.hbm_to_vmem [thread:$0]  %s492, 128, %s495, %s484
        $region68: #{tpu_custom_call.1} parent=63 // pred_fallthru
          _
      $region64: #{tpu_custom_call.1} parent=5 // pred_fallthru
        _
      %p498 = scmp.le.s32.totalorder 1, %s28
      %p499 = scmp.lt.s32.totalorder %s28, 3
      %p500 = pnand %p498, %p499
      %p501 = pneg %p500
      // Predicated region
      $region69: #{tpu_custom_call.1} parent=5 // pred_check
        _
      $region70: #{tpu_custom_call.1} parent=5 // pred_check_branch
        %503 = sbr.rel (%p500) target = $region72
      $region71: #{tpu_custom_call.1} parent=5 // pred_region
        %s504 = ssub.s32 %s28, 1
        %s505 = sand.u32 %s53, 1
        %s506 = scalar_lea.sflag [#allocation6], %s505
        %s507 = sand.u32 %s53, 1
        %s508 = smul.addr %s507, 8
        %s509 = scalar_lea.vmem [#allocation5], %s508
        // Predicated region
        $region73: #{tpu_custom_call.1} parent=71 // pred_check
          %p510 = pneg %p66
        $region74: #{tpu_custom_call.1} parent=71 // pred_check_branch
          %512 = sbr.rel (%p510) target = $region76
        $region75: #{tpu_custom_call.1} parent=71 // pred_region
          %513 = dma.done %s506, 128
        $region76: #{tpu_custom_call.1} parent=71 // pred_fallthru
          _
        // Predicated region
        $region77: #{tpu_custom_call.1} parent=71 // pred_check
          %p514 = pneg %p87
        $region78: #{tpu_custom_call.1} parent=71 // pred_check_branch
          %516 = sbr.rel (%p514) target = $region80
        $region79: #{tpu_custom_call.1} parent=71 // pred_region
          %517 = dma.done [#allocation9], 16
        $region80: #{tpu_custom_call.1} parent=71 // pred_fallthru
          _
        // Predicated region
        $region81: #{tpu_custom_call.1} parent=71 // pred_check
          %p518 = pneg %p108
        $region82: #{tpu_custom_call.1} parent=71 // pred_check_branch
          %520 = sbr.rel (%p518) target = $region84
        $region83: #{tpu_custom_call.1} parent=71 // pred_region
          %521 = dma.done [#allocation9], 16
        $region84: #{tpu_custom_call.1} parent=71 // pred_fallthru
          _
        // Predicated region
        $region85: #{tpu_custom_call.1} parent=71 // pred_check
          %p522 = pneg %p134
        $region86: #{tpu_custom_call.1} parent=71 // pred_check_branch
          %524 = sbr.rel (%p522) target = $region88
        $region87: #{tpu_custom_call.1} parent=71 // pred_region
          %525 = dma.done [#allocation12], 3072
        $region88: #{tpu_custom_call.1} parent=71 // pred_fallthru
          _
        // Predicated region
        $region89: #{tpu_custom_call.1} parent=71 // pred_check
          %p526 = pneg %p186
        $region90: #{tpu_custom_call.1} parent=71 // pred_check_branch
          %528 = sbr.rel (%p526) target = $region92
        $region91: #{tpu_custom_call.1} parent=71 // pred_region
          %529 = dma.done [#allocation12], 1024
        $region92: #{tpu_custom_call.1} parent=71 // pred_fallthru
          _
        // Predicated region
        $region93: #{tpu_custom_call.1} parent=71 // pred_check
          %p530 = pneg %p270
        $region94: #{tpu_custom_call.1} parent=71 // pred_check_branch
          %532 = sbr.rel (%p530) target = $region96
        $region95: #{tpu_custom_call.1} parent=71 // pred_region
          %533 = dma.done [#allocation15], 4096
        $region96: #{tpu_custom_call.1} parent=71 // pred_fallthru
          _
        // Predicated region
        $region97: #{tpu_custom_call.1} parent=71 // pred_check
          %p534 = pneg %p312
        $region98: #{tpu_custom_call.1} parent=71 // pred_check_branch
          %536 = sbr.rel (%p534) target = $region100
        $region99: #{tpu_custom_call.1} parent=71 // pred_region
          %537 = dma.done [#allocation15], 4096
        $region100: #{tpu_custom_call.1} parent=71 // pred_fallthru
          _
        %s538 = sand.u32 %s53, 1
        %s539 = scalar_lea.sflag [#allocation6], %s538
        %s540 = sand.u32 %s53, 1
        %s541 = smul.addr %s540, 8
        %s542 = scalar_lea.vmem [#allocation5], %s541
        %p543 = pneg %p66
        %p544 = pneg %p63
        %p545 = pneg %p87
        %p546 = pneg %p84
        %p547 = pneg %p108
        %p548 = pneg %p105
        %p549 = pneg %p134
        %p550 = pneg %p131
        %p551 = scmp.lt.s32.totalorder %s38, 0
        %s552 = scalar_select %p551, %s38, 0
        %s553 = smul.addr %s552, 3
        %s554 = scalar_lea.vmem %s4, %s553
        %p555 = pneg %p160
        %p556 = pneg %p157
        %p557 = pneg %p186
        %p558 = pneg %p183
        %p559 = pneg %p207
        %p560 = pneg %p204
        %p561 = pneg %p228
        %p562 = pneg %p225
        %p563 = pneg %p249
        %p564 = pneg %p246
        %p565 = pneg %p270
        %p566 = pneg %p267
        %p567 = pneg %p291
        %p568 = pneg %p288
        %p569 = pneg %p312
        %p570 = pneg %p309
        %p571 = pneg %p333
        %p572 = pneg %p330
        %p573 = pneg %p359
        %p574 = pneg %p356
        %s575 = sand.u32 %s346, 1
        %s576 = scalar_lea.sflag [#allocation7], %s575
        %s577 = sand.u32 %s346, 1
        %s578 = smul.addr %s577, 8
        %s579 = scalar_lea.vmem [#allocation17], %s578
        %p580 = scmp.lt.s32.totalorder %s38, 0
        %s581 = scalar_select %p580, %s38, 0
        %s582 = smul.addr %s581, 3
        %s583 = scalar_lea.vmem %s4, %s582
        %p585 = scmp.eq.s32.totalorder %s38, 0
        // Predicated region
        $region101: #{tpu_custom_call.1} parent=71 // pred_check
          %p586 = pneg %p585
        $region102: #{tpu_custom_call.1} parent=71 // pred_check_branch
          %588 = sbr.rel (%p586) target = $region104
        $region103: #{tpu_custom_call.1} parent=71 // pred_region
          %v589 = vld [vmem:[%s509] sm:$0xff]
          %v590 = vld [vmem:[#allocation8] sm:$0x1]
          %v591 = vld [vmem:[#allocation10] sm:$0x1]
          %592 = vadd.xlane.f32.xlu0 %v589
          %v593 = vpop.xlane.xlu0 %592
          %v594 = vrcp.pop 128.0
          %v595 = vmul.f32 %v593, %v594
          %v596 = vsub.f32 %v589, %v595
          %v597 = vmul.f32 %v596, %v596
          %598 = vadd.xlane.f32.xlu0 %v597
          %v599 = vpop.xlane.xlu0 %598
          %v600 = vmul.f32 %v599, %v594
          %v601 = vadd.f32 %v600, 1e-05
          %v602 = vrsqrt.pop %v601
          %v603 = vmul.f32 %v596, %v602
          %v605 = vlaneseq
          %v606 = vshrl.u32 %v605, 7
          %v607 = vsub.s32 0, %v606
          %v608 = vrot.slane %v590, %v607
          %v610 = vmul.f32 %v603, %v608
          %v612 = vlaneseq
          %v613 = vshrl.u32 %v612, 7
          %v614 = vsub.s32 0, %v613
          %v615 = vrot.slane %v591, %v614
          %v617 = vadd.f32 %v610, %v615
          %v618 = vpack.c.bf16 %v617, %v617
          %619 = vst [vmem:[#allocation2] sm:$0xf] %v618
        $region104: #{tpu_custom_call.1} parent=71 // pred_fallthru
          _
        %v620 = vld [vmem:[#allocation2] sm:$0xf]
        %v621 = vld [vmem:[#allocation11] sm:$0xff]
        %v622 = vld [vmem:[#allocation11 + $0x8] sm:$0xf]
        %v623 = vld [vmem:[#allocation11 + $0xc] sm:$0xff]
        %v624 = vld [vmem:[#allocation11 + $0x14] sm:$0xf]
        %v625 = vld [vmem:[#allocation11 + $0x18] sm:$0xff]
        %v626 = vld [vmem:[#allocation11 + $0x20] sm:$0xf]
        %v627 = vld [vmem:[#allocation11 + $0x24] sm:$0xff]
        %v628 = vld [vmem:[#allocation11 + $0x2c] sm:$0xf]
        %v629 = vld [vmem:[#allocation11 + $0x30] sm:$0xff]
        %v630 = vld [vmem:[#allocation11 + $0x38] sm:$0xf]
        %v631 = vld [vmem:[#allocation11 + $0x3c] sm:$0xff]
        %v632 = vld [vmem:[#allocation11 + $0x44] sm:$0xf]
        %v633 = vld [vmem:[#allocation11 + $0x48] sm:$0xff]
        %v634 = vld [vmem:[#allocation11 + $0x50] sm:$0xf]
        %v635 = vld [vmem:[#allocation11 + $0x54] sm:$0xff]
        %v636 = vld [vmem:[#allocation11 + $0x5c] sm:$0xf]
        %v637 = vld [vmem:[#allocation11 + $0x60] sm:$0xff]
        %v638 = vld [vmem:[#allocation11 + $0x68] sm:$0xf]
        %v639 = vld [vmem:[#allocation11 + $0x6c] sm:$0xff]
        %v640 = vld [vmem:[#allocation11 + $0x74] sm:$0xf]
        %v641 = vld [vmem:[#allocation11 + $0x78] sm:$0xff]
        %v642 = vld [vmem:[#allocation11 + $0x80] sm:$0xf]
        %v643 = vld [vmem:[#allocation11 + $0x84] sm:$0xff]
        %v644 = vld [vmem:[#allocation11 + $0x8c] sm:$0xf]
        %v645 = vld [vmem:[#allocation11 + $0x90] sm:$0xff]
        %v646 = vld [vmem:[#allocation11 + $0x98] sm:$0xf]
        %v647 = vld [vmem:[#allocation11 + $0x9c] sm:$0xff]
        %v648 = vld [vmem:[#allocation11 + $0xa4] sm:$0xf]
        %v649 = vld [vmem:[#allocation11 + $0xa8] sm:$0xff]
        %v650 = vld [vmem:[#allocation11 + $0xb0] sm:$0xf]
        %v651 = vld [vmem:[#allocation11 + $0xb4] sm:$0xff]
        %v652 = vld [vmem:[#allocation11 + $0xbc] sm:$0xf]
        %v653 = vld [vmem:[%s583] sm:$0x7]
        %v655 = vlaneseq
        %v656 = vshrl.u32 %v655, 7
        %v657 = vsub.s32 0, %v656
        %v658 = vrot.slane %v653, %v657
        %v659 = vlaneseq
        %v660 = vshrl.u32 %v659, 7
        %v661 = vsub.s32 1, %v660
        %v662 = vrot.slane %v653, %v661
        %v663 = vlaneseq
        %v664 = vshrl.u32 %v663, 7
        %v665 = vsub.s32 2, %v664
        %v666 = vrot.slane %v653, %v665
        %v702 = vunpack.c.l.b16 %v621
        %v703 = vunpack.c.h.b16 %v621
        %v704 = vunpack.c.l.b16 %v622
        %v705 = vunpack.c.l.b16 %v623
        %v706 = vunpack.c.h.b16 %v623
        %v707 = vunpack.c.l.b16 %v624
        %v708 = vunpack.c.l.b16 %v625
        %v709 = vunpack.c.h.b16 %v625
        %v710 = vunpack.c.l.b16 %v626
        %v711 = vunpack.c.l.b16 %v627
        %v712 = vunpack.c.h.b16 %v627
        %v713 = vunpack.c.l.b16 %v628
        %v714 = vunpack.c.l.b16 %v629
        %v715 = vunpack.c.h.b16 %v629
        %v716 = vunpack.c.l.b16 %v630
        %v717 = vunpack.c.l.b16 %v631
        %v718 = vunpack.c.h.b16 %v631
        %v719 = vunpack.c.l.b16 %v632
        %v720 = vunpack.c.l.b16 %v633
        %v721 = vunpack.c.h.b16 %v633
        %v722 = vunpack.c.l.b16 %v634
        %v723 = vunpack.c.l.b16 %v635
        %v724 = vunpack.c.h.b16 %v635
        %v725 = vunpack.c.l.b16 %v636
        %v726 = vunpack.c.l.b16 %v637
        %v727 = vunpack.c.h.b16 %v637
        %v728 = vunpack.c.l.b16 %v638
        %v729 = vunpack.c.l.b16 %v639
        %v730 = vunpack.c.h.b16 %v639
        %v731 = vunpack.c.l.b16 %v640
        %v732 = vunpack.c.l.b16 %v641
        %v733 = vunpack.c.h.b16 %v641
        %v734 = vunpack.c.l.b16 %v642
        %v735 = vunpack.c.l.b16 %v643
        %v736 = vunpack.c.h.b16 %v643
        %v737 = vunpack.c.l.b16 %v644
        %v738 = vunpack.c.l.b16 %v645
        %v739 = vunpack.c.h.b16 %v645
        %v740 = vunpack.c.l.b16 %v646
        %v741 = vunpack.c.l.b16 %v647
        %v742 = vunpack.c.h.b16 %v647
        %v743 = vunpack.c.l.b16 %v648
        %v744 = vunpack.c.l.b16 %v649
        %v745 = vunpack.c.h.b16 %v649
        %v746 = vunpack.c.l.b16 %v650
        %v747 = vunpack.c.l.b16 %v651
        %v748 = vunpack.c.h.b16 %v651
        %v749 = vunpack.c.l.b16 %v652
        %v750 = vpack.c.b16 %v705, %v702
        %v751 = vpack.c.b16 %v706, %v703
        %v752 = vpack.c.b16 %v707, %v704
        %v753 = vpack.c.b16 %v711, %v708
        %v754 = vpack.c.b16 %v712, %v709
        %v755 = vpack.c.b16 %v713, %v710
        %v756 = vpack.c.b16 %v717, %v714
        %v757 = vpack.c.b16 %v718, %v715
        %v758 = vpack.c.b16 %v719, %v716
        %v759 = vpack.c.b16 %v723, %v720
        %v760 = vpack.c.b16 %v724, %v721
        %v761 = vpack.c.b16 %v725, %v722
        %v762 = vpack.c.b16 %v729, %v726
        %v763 = vpack.c.b16 %v730, %v727
        %v764 = vpack.c.b16 %v731, %v728
        %v765 = vpack.c.b16 %v735, %v732
        %v766 = vpack.c.b16 %v736, %v733
        %v767 = vpack.c.b16 %v737, %v734
        %v768 = vpack.c.b16 %v741, %v738
        %v769 = vpack.c.b16 %v742, %v739
        %v770 = vpack.c.b16 %v743, %v740
        %v771 = vpack.c.b16 %v747, %v744
        %v772 = vpack.c.b16 %v748, %v745
        %v773 = vpack.c.b16 %v749, %v746
        %798 = vmatprep.subr.bf16.mxu0 %v751
        %799 = vmatpush1.bf16.msra.mxu0 %v750
        %800 = vmatprep.subr.bf16.mxu0 %v754
        %801 = vmatpush1.bf16.msra.mxu0 %v753
        %802 = vmatprep.subr.bf16.mxu0 %v757
        %803 = vmatpush1.bf16.msra.mxu0 %v756
        %804 = vmatprep.subr.bf16.mxu0 %v760
        %805 = vmatpush1.bf16.msra.mxu0 %v759
        %806 = vmatprep.subr.bf16.mxu0 %v763
        %807 = vmatpush1.bf16.msra.mxu0 %v762
        %808 = vmatprep.subr.bf16.mxu0 %v766
        %809 = vmatpush1.bf16.msra.mxu0 %v765
        %810 = vmatprep.subr.bf16.mxu0 %v769
        %811 = vmatpush1.bf16.msra.mxu0 %v768
        %812 = vmatprep.subr.bf16.mxu0 %v772
        %813 = vmatpush1.bf16.msra.mxu0 %v771
        %814 = vmatprep.subr.bf16.mxu0 0
        %815 = vmatpush1.bf16.msra.mxu0 0
        %816 = vmatprep.subr.bf16.mxu0 0
        %817 = vmatpush1.bf16.msra.mxu0 0
        %818 = vmatprep.subr.bf16.mxu0 0
        %819 = vmatpush1.bf16.msra.mxu0 0
        %820 = vmatprep.subr.bf16.mxu0 0
        %821 = vmatpush1.bf16.msra.mxu0 0
        %822 = vmatprep.subr.bf16.mxu0 0
        %823 = vmatpush1.bf16.msra.mxu0 0
        %824 = vmatprep.subr.bf16.mxu0 0
        %825 = vmatpush1.bf16.msra.mxu0 0
        %826 = vmatprep.subr.bf16.mxu0 0
        %827 = vmatpush1.bf16.msra.mxu0 0
        %828 = vmatprep.subr.bf16.mxu0 0
        %829 = vmatpush1.bf16.msra.mxu0 0
        %830 = vmatprep.mubr.bf16.mxu0 0
        %831 = vmatmul.mubr.bf16.gmra.mrb[0].mxu0 %v620
        %v832 = vpop.f32.mrb[0].mxu0
        %v833 = vadd.f32 %v658, %v832
        %v834 = vpop.f32.mrb[0].mxu0
        %v835 = vadd.f32 %v662, %v834
        %v836 = vpop.f32.mrb[0].mxu0
        %v837 = vpop.f32.mrb[0].mxu0
        %838 = vdwg.mxu0
        %839 = vmatprep.subr.bf16.mxu0 0
        %840 = vmatpush1.bf16.msra.mxu0 %v752
        %841 = vmatprep.subr.bf16.mxu0 0
        %842 = vmatpush1.bf16.msra.mxu0 %v755
        %843 = vmatprep.subr.bf16.mxu0 0
        %844 = vmatpush1.bf16.msra.mxu0 %v758
        %845 = vmatprep.subr.bf16.mxu0 0
        %846 = vmatpush1.bf16.msra.mxu0 %v761
        %847 = vmatprep.subr.bf16.mxu0 0
        %848 = vmatpush1.bf16.msra.mxu0 %v764
        %849 = vmatprep.subr.bf16.mxu0 0
        %850 = vmatpush1.bf16.msra.mxu0 %v767
        %851 = vmatprep.subr.bf16.mxu0 0
        %852 = vmatpush1.bf16.msra.mxu0 %v770
        %853 = vmatprep.subr.bf16.mxu0 0
        %854 = vmatpush1.bf16.msra.mxu0 %v773
        %855 = vmatprep.subr.bf16.mxu0 0
        %856 = vmatpush1.bf16.msra.mxu0 0
        %857 = vmatprep.subr.bf16.mxu0 0
        %858 = vmatpush1.bf16.msra.mxu0 0
        %859 = vmatprep.subr.bf16.mxu0 0
        %860 = vmatpush1.bf16.msra.mxu0 0
        %861 = vmatprep.subr.bf16.mxu0 0
        %862 = vmatpush1.bf16.msra.mxu0 0
        %863 = vmatprep.subr.bf16.mxu0 0
        %864 = vmatpush1.bf16.msra.mxu0 0
        %865 = vmatprep.subr.bf16.mxu0 0
        %866 = vmatpush1.bf16.msra.mxu0 0
        %867 = vmatprep.subr.bf16.mxu0 0
        %868 = vmatpush1.bf16.msra.mxu0 0
        %869 = vmatprep.subr.bf16.mxu0 0
        %870 = vmatpush1.bf16.msra.mxu0 0
        %871 = vmatprep.mubr.bf16.mxu0 0
        %872 = vmatmul.mubr.bf16.gmra.mrb[0].mxu0 %v620
        %v873 = vpop.f32.mrb[0].mxu0
        %v874 = vadd.f32 %v666, %v873
        %v875 = vpop.f32.mrb[0].mxu0
        %v876 = vpop.f32.mrb[0].mxu0
        %v877 = vpop.f32.mrb[0].mxu0
        %878 = vdwg.mxu0
        %v879 = vmul.f32 %v833, 0.17677669
        %v880 = vlaneseq
        %v881 = vshrl.u32 %v880, 7
        %v882 = vlaneseq
        %v883 = vand.u32 %v882, 127
        %vm884 = vcmp.le.s32.totalorder %v883, %v881
        %v885 = vpack.c.bf16 %v879, %v879
        %v886 = vpack.c.bf16 %v835, %v835
        %v887 = vpack.c.bf16 %v874, %v874
        %vm888 = vcmask 261120
        %v890 = vsel %vm888, %v885, 0
        %v893 = vsel %vm888, %v886, 0
        %895 = vmatprep.subr.bf16.mxu0 0
        %896 = vmatpush1.bf16.xpose.msra.mxu0 %v893
        %897 = vmatprep.subr.bf16.mxu0 0
        %898 = vmatpush1.bf16.xpose.msra.mxu0 0
        %899 = vmatprep.subr.bf16.mxu0 0
        %900 = vmatpush1.bf16.xpose.msra.mxu0 0
        %901 = vmatprep.subr.bf16.mxu0 0
        %902 = vmatpush1.bf16.xpose.msra.mxu0 0
        %903 = vmatprep.subr.bf16.mxu0 0
        %904 = vmatpush1.bf16.xpose.msra.mxu0 0
        %905 = vmatprep.subr.bf16.mxu0 0
        %906 = vmatpush1.bf16.xpose.msra.mxu0 0
        %907 = vmatprep.subr.bf16.mxu0 0
        %908 = vmatpush1.bf16.xpose.msra.mxu0 0
        %909 = vmatprep.subr.bf16.mxu0 0
        %910 = vmatpush1.bf16.xpose.msra.mxu0 0
        %911 = vmatprep.subr.bf16.mxu0 0
        %912 = vmatpush1.bf16.xpose.msra.mxu0 0
        %913 = vmatprep.subr.bf16.mxu0 0
        %914 = vmatpush1.bf16.xpose.msra.mxu0 0
        %915 = vmatprep.subr.bf16.mxu0 0
        %916 = vmatpush1.bf16.xpose.msra.mxu0 0
        %917 = vmatprep.subr.bf16.mxu0 0
        %918 = vmatpush1.bf16.xpose.msra.mxu0 0
        %919 = vmatprep.subr.bf16.mxu0 0
        %920 = vmatpush1.bf16.xpose.msra.mxu0 0
        %921 = vmatprep.subr.bf16.mxu0 0
        %922 = vmatpush1.bf16.xpose.msra.mxu0 0
        %923 = vmatprep.subr.bf16.mxu0 0
        %924 = vmatpush1.bf16.xpose.msra.mxu0 0
        %925 = vmatprep.subr.bf16.mxu0 0
        %926 = vmatpush1.bf16.xpose.msra.mxu0 0
        %927 = vmatprep.mubr.bf16.mxu0 0
        %928 = vmatmul.mubr.bf16.gmra.mrb[0].mxu0 %v890
        %v929 = vpop.f32.mrb[0].mxu0
        %v930 = vadd.f32 0.0, %v929
        %v931 = vpop.f32.mrb[0].mxu0
        %v932 = vpop.f32.mrb[0].mxu0
        %v933 = vpop.f32.mrb[0].mxu0
        %934 = vdwg.mxu0
        %v935 = vsel %vm884, %v930, -1e+30
        %vm936 = vcmask 64512
        %v937 = vsel %vm936, %v935, -inf
        %938 = vmax.xlane.f32.xlu0 %v937
        %v939 = vpop.xlane.xlu0 %938
        %v940 = vsub.f32 %v935, %v939
        %v941 = vmul.f32 %v940, 1.442695
        %v942 = vpow.pop %v941
        %v943 = vsel %vm936, %v942, 0.0
        %944 = vadd.xlane.f32.xlu0 %v943
        %v945 = vpop.xlane.xlu0 %944
        %v946 = vrcp.pop %v945
        %v947 = vmul.f32 %v942, %v946
        %v948 = vpack.c.bf16 %v947, %v947
        %v950 = vsel %vm936, %v948, 0
        %vm952 = vcmask 1043456
        %v954 = vsel %vm952, %v887, 0
        %956 = vmatprep.subr.bf16.mxu0 0
        %957 = vmatpush1.bf16.msra.mxu0 %v954
        %958 = vmatprep.subr.bf16.mxu0 0
        %959 = vmatpush1.bf16.msra.mxu0 0
        %960 = vmatprep.subr.bf16.mxu0 0
        %961 = vmatpush1.bf16.msra.mxu0 0
        %962 = vmatprep.subr.bf16.mxu0 0
        %963 = vmatpush1.bf16.msra.mxu0 0
        %964 = vmatprep.subr.bf16.mxu0 0
        %965 = vmatpush1.bf16.msra.mxu0 0
        %966 = vmatprep.subr.bf16.mxu0 0
        %967 = vmatpush1.bf16.msra.mxu0 0
        %968 = vmatprep.subr.bf16.mxu0 0
        %969 = vmatpush1.bf16.msra.mxu0 0
        %970 = vmatprep.subr.bf16.mxu0 0
        %971 = vmatpush1.bf16.msra.mxu0 0
        %972 = vmatprep.subr.bf16.mxu0 0
        %973 = vmatpush1.bf16.msra.mxu0 0
        %974 = vmatprep.subr.bf16.mxu0 0
        %975 = vmatpush1.bf16.msra.mxu0 0
        %976 = vmatprep.subr.bf16.mxu0 0
        %977 = vmatpush1.bf16.msra.mxu0 0
        %978 = vmatprep.subr.bf16.mxu0 0
        %979 = vmatpush1.bf16.msra.mxu0 0
        %980 = vmatprep.subr.bf16.mxu0 0
        %981 = vmatpush1.bf16.msra.mxu0 0
        %982 = vmatprep.subr.bf16.mxu0 0
        %983 = vmatpush1.bf16.msra.mxu0 0
        %984 = vmatprep.subr.bf16.mxu0 0
        %985 = vmatpush1.bf16.msra.mxu0 0
        %986 = vmatprep.subr.bf16.mxu0 0
        %987 = vmatpush1.bf16.msra.mxu0 0
        %988 = vmatprep.mubr.bf16.mxu0 0
        %989 = vmatmul.mubr.bf16.gmra.mrb[0].mxu0 %v950
        %v990 = vpop.f32.mrb[0].mxu0
        %v991 = vadd.f32 0.0, %v990
        %v992 = vpop.f32.mrb[0].mxu0
        %v993 = vpop.f32.mrb[0].mxu0
        %v994 = vpop.f32.mrb[0].mxu0
        %995 = vdwg.mxu0
        %v996 = vpack.c.bf16 %v991, %v991
        %vm997 = vcmask 257024
        %998 = vst.msk [vmem:[#allocation4] sm:$0xf] %vm997, %v996
        %1000 = vrot.lane.b32.xlu0 %v885, 96
        %v1001 = vpop.permute.xlu0 %1000
        %1003 = vrot.lane.b32.xlu0 %v886, 96
        %v1004 = vpop.permute.xlu0 %1003
        %v1006 = vsel %vm888, %v1001, 0
        %v1009 = vsel %vm888, %v1004, 0
        %1011 = vmatprep.subr.bf16.mxu0 0
        %1012 = vmatpush1.bf16.xpose.msra.mxu0 %v1009
        %1013 = vmatprep.subr.bf16.mxu0 0
        %1014 = vmatpush1.bf16.xpose.msra.mxu0 0
        %1015 = vmatprep.subr.bf16.mxu0 0
        %1016 = vmatpush1.bf16.xpose.msra.mxu0 0
        %1017 = vmatprep.subr.bf16.mxu0 0
        %1018 = vmatpush1.bf16.xpose.msra.mxu0 0
        %1019 = vmatprep.subr.bf16.mxu0 0
        %1020 = vmatpush1.bf16.xpose.msra.mxu0 0
        %1021 = vmatprep.subr.bf16.mxu0 0
        %1022 = vmatpush1.bf16.xpose.msra.mxu0 0
        %1023 = vmatprep.subr.bf16.mxu0 0
        %1024 = vmatpush1.bf16.xpose.msra.mxu0 0
        %1025 = vmatprep.subr.bf16.mxu0 0
        %1026 = vmatpush1.bf16.xpose.msra.mxu0 0
        %1027 = vmatprep.subr.bf16.mxu0 0
        %1028 = vmatpush1.bf16.xpose.msra.mxu0 0
        %1029 = vmatprep.subr.bf16.mxu0 0
        %1030 = vmatpush1.bf16.xpose.msra.mxu0 0
        %1031 = vmatprep.subr.bf16.mxu0 0
        %1032 = vmatpush1.bf16.xpose.msra.mxu0 0
        %1033 = vmatprep.subr.bf16.mxu0 0
        %1034 = vmatpush1.bf16.xpose.msra.mxu0 0
        %1035 = vmatprep.subr.bf16.mxu0 0
        %1036 = vmatpush1.bf16.xpose.msra.mxu0 0
        %1037 = vmatprep.subr.bf16.mxu0 0
        %1038 = vmatpush1.bf16.xpose.msra.mxu0 0
        %1039 = vmatprep.subr.bf16.mxu0 0
        %1040 = vmatpush1.bf16.xpose.msra.mxu0 0
        %1041 = vmatprep.subr.bf16.mxu0 0
        %1042 = vmatpush1.bf16.xpose.msra.mxu0 0
        %1043 = vmatprep.mubr.bf16.mxu0 0
        %1044 = vmatmul.mubr.bf16.gmra.mrb[0].mxu0 %v1006
        %v1045 = vpop.f32.mrb[0].mxu0
        %v1046 = vadd.f32 0.0, %v1045
        %v1047 = vpop.f32.mrb[0].mxu0
        %v1048 = vpop.f32.mrb[0].mxu0
        %v1049 = vpop.f32.mrb[0].mxu0
        %1050 = vdwg.mxu0
        %v1051 = vsel %vm884, %v1046, -1e+30
        %v1052 = vsel %vm936, %v1051, -inf
        %1053 = vmax.xlane.f32.xlu0 %v1052
        %v1054 = vpop.xlane.xlu0 %1053
        %v1055 = vsub.f32 %v1051, %v1054
        %v1056 = vmul.f32 %v1055, 1.442695
        %v1057 = vpow.pop %v1056
        %v1058 = vsel %vm936, %v1057, 0.0
        %1059 = vadd.xlane.f32.xlu0 %v1058
        %v1060 = vpop.xlane.xlu0 %1059
        %v1061 = vrcp.pop %v1060
        %v1062 = vmul.f32 %v1057, %v1061
        %v1063 = vpack.c.bf16 %v1062, %v1062
        %1065 = vrot.lane.b32.xlu0 %v887, 96
        %v1066 = vpop.permute.xlu0 %1065
        %v1068 = vsel %vm936, %v1063, 0
        %v1071 = vsel %vm952, %v1066, 0
        %1073 = vmatprep.subr.bf16.mxu0 0
        %1074 = vmatpush1.bf16.msra.mxu0 %v1071
        %1075 = vmatprep.subr.bf16.mxu0 0
        %1076 = vmatpush1.bf16.msra.mxu0 0
        %1077 = vmatprep.subr.bf16.mxu0 0
        %1078 = vmatpush1.bf16.msra.mxu0 0
        %1079 = vmatprep.subr.bf16.mxu0 0
        %1080 = vmatpush1.bf16.msra.mxu0 0
        %1081 = vmatprep.subr.bf16.mxu0 0
        %1082 = vmatpush1.bf16.msra.mxu0 0
        %1083 = vmatprep.subr.bf16.mxu0 0
        %1084 = vmatpush1.bf16.msra.mxu0 0
        %1085 = vmatprep.subr.bf16.mxu0 0
        %1086 = vmatpush1.bf16.msra.mxu0 0
        %1087 = vmatprep.subr.bf16.mxu0 0
        %1088 = vmatpush1.bf16.msra.mxu0 0
        %1089 = vmatprep.subr.bf16.mxu0 0
        %1090 = vmatpush1.bf16.msra.mxu0 0
        %1091 = vmatprep.subr.bf16.mxu0 0
        %1092 = vmatpush1.bf16.msra.mxu0 0
        %1093 = vmatprep.subr.bf16.mxu0 0
        %1094 = vmatpush1.bf16.msra.mxu0 0
        %1095 = vmatprep.subr.bf16.mxu0 0
        %1096 = vmatpush1.bf16.msra.mxu0 0
        %1097 = vmatprep.subr.bf16.mxu0 0
        %1098 = vmatpush1.bf16.msra.mxu0 0
        %1099 = vmatprep.subr.bf16.mxu0 0
        %1100 = vmatpush1.bf16.msra.mxu0 0
        %1101 = vmatprep.subr.bf16.mxu0 0
        %1102 = vmatpush1.bf16.msra.mxu0 0
        %1103 = vmatprep.subr.bf16.mxu0 0
        %1104 = vmatpush1.bf16.msra.mxu0 0
        %1105 = vmatprep.mubr.bf16.mxu0 0
        %1106 = vmatmul.mubr.bf16.gmra.mrb[0].mxu0 %v1068
        %v1107 = vpop.f32.mrb[0].mxu0
        %v1108 = vadd.f32 0.0, %v1107
        %v1109 = vpop.f32.mrb[0].mxu0
        %v1110 = vpop.f32.mrb[0].mxu0
        %v1111 = vpop.f32.mrb[0].mxu0
        %1112 = vdwg.mxu0
        %v1113 = vpack.c.bf16 %v1108, %v1108
        %v1115 = vunpack.c.l.b16 %v1113
        %v1116 = vpack.c.b16 %v1115, %v1115
        %1117 = vrot.lane.b32.xlu0 %v1116, 32
        %v1118 = vpop.permute.xlu0 %1117
        %vm1120 = vcmask 519424
        %1121 = vst.msk [vmem:[#allocation4] sm:$0xf] %vm1120, %v1118
        %1122 = vrot.lane.b32.xlu0 %v885, 64
        %v1123 = vpop.permute.xlu0 %1122
        %1124 = vrot.lane.b32.xlu0 %v886, 64
        %v1125 = vpop.permute.xlu0 %1124
        %v1127 = vsel %vm888, %v1123, 0
        %v1130 = vsel %vm888, %v1125, 0
        %1132 = vmatprep.subr.bf16.mxu0 0
        %1133 = vmatpush1.bf16.xpose.msra.mxu0 %v1130
        %1134 = vmatprep.subr.bf16.mxu0 0
        %1135 = vmatpush1.bf16.xpose.msra.mxu0 0
        %1136 = vmatprep.subr.bf16.mxu0 0
        %1137 = vmatpush1.bf16.xpose.msra.mxu0 0
        %1138 = vmatprep.subr.bf16.mxu0 0
        %1139 = vmatpush1.bf16.xpose.msra.mxu0 0
        %1140 = vmatprep.subr.bf16.mxu0 0
        %1141 = vmatpush1.bf16.xpose.msra.mxu0 0
        %1142 = vmatprep.subr.bf16.mxu0 0
        %1143 = vmatpush1.bf16.xpose.msra.mxu0 0
        %1144 = vmatprep.subr.bf16.mxu0 0
        %1145 = vmatpush1.bf16.xpose.msra.mxu0 0
        %1146 = vmatprep.subr.bf16.mxu0 0
        %1147 = vmatpush1.bf16.xpose.msra.mxu0 0
        %1148 = vmatprep.subr.bf16.mxu0 0
        %1149 = vmatpush1.bf16.xpose.msra.mxu0 0
        %1150 = vmatprep.subr.bf16.mxu0 0
        %1151 = vmatpush1.bf16.xpose.msra.mxu0 0
        %1152 = vmatprep.subr.bf16.mxu0 0
        %1153 = vmatpush1.bf16.xpose.msra.mxu0 0
        %1154 = vmatprep.subr.bf16.mxu0 0
        %1155 = vmatpush1.bf16.xpose.msra.mxu0 0
        %1156 = vmatprep.subr.bf16.mxu0 0
        %1157 = vmatpush1.bf16.xpose.msra.mxu0 0
        %1158 = vmatprep.subr.bf16.mxu0 0
        %1159 = vmatpush1.bf16.xpose.msra.mxu0 0
        %1160 = vmatprep.subr.bf16.mxu0 0
        %1161 = vmatpush1.bf16.xpose.msra.mxu0 0
        %1162 = vmatprep.subr.bf16.mxu0 0
        %1163 = vmatpush1.bf16.xpose.msra.mxu0 0
        %1164 = vmatprep.mubr.bf16.mxu0 0
        %1165 = vmatmul.mubr.bf16.gmra.mrb[0].mxu0 %v1127
        %v1166 = vpop.f32.mrb[0].mxu0
        %v1167 = vadd.f32 0.0, %v1166
        %v1168 = vpop.f32.mrb[0].mxu0
        %v1169 = vpop.f32.mrb[0].mxu0
        %v1170 = vpop.f32.mrb[0].mxu0
        %1171 = vdwg.mxu0
        %v1172 = vsel %vm884, %v1167, -1e+30
        %v1173 = vsel %vm936, %v1172, -inf
        %1174 = vmax.xlane.f32.xlu0 %v1173
        %v1175 = vpop.xlane.xlu0 %1174
        %v1176 = vsub.f32 %v1172, %v1175
        %v1177 = vmul.f32 %v1176, 1.442695
        %v1178 = vpow.pop %v1177
        %v1179 = vsel %vm936, %v1178, 0.0
        %1180 = vadd.xlane.f32.xlu0 %v1179
        %v1181 = vpop.xlane.xlu0 %1180
        %v1182 = vrcp.pop %v1181
        %v1183 = vmul.f32 %v1178, %v1182
        %v1184 = vpack.c.bf16 %v1183, %v1183
        %1185 = vrot.lane.b32.xlu0 %v887, 64
        %v1186 = vpop.permute.xlu0 %1185
        %v1188 = vsel %vm936, %v1184, 0
        %v1191 = vsel %vm952, %v1186, 0
        %1193 = vmatprep.subr.bf16.mxu0 0
        %1194 = vmatpush1.bf16.msra.mxu0 %v1191
        %1195 = vmatprep.subr.bf16.mxu0 0
        %1196 = vmatpush1.bf16.msra.mxu0 0
        %1197 = vmatprep.subr.bf16.mxu0 0
        %1198 = vmatpush1.bf16.msra.mxu0 0
        %1199 = vmatprep.subr.bf16.mxu0 0
        %1200 = vmatpush1.bf16.msra.mxu0 0
        %1201 = vmatprep.subr.bf16.mxu0 0
        %1202 = vmatpush1.bf16.msra.mxu0 0
        %1203 = vmatprep.subr.bf16.mxu0 0
        %1204 = vmatpush1.bf16.msra.mxu0 0
        %1205 = vmatprep.subr.bf16.mxu0 0
        %1206 = vmatpush1.bf16.msra.mxu0 0
        %1207 = vmatprep.subr.bf16.mxu0 0
        %1208 = vmatpush1.bf16.msra.mxu0 0
        %1209 = vmatprep.subr.bf16.mxu0 0
        %1210 = vmatpush1.bf16.msra.mxu0 0
        %1211 = vmatprep.subr.bf16.mxu0 0
        %1212 = vmatpush1.bf16.msra.mxu0 0
        %1213 = vmatprep.subr.bf16.mxu0 0
        %1214 = vmatpush1.bf16.msra.mxu0 0
        %1215 = vmatprep.subr.bf16.mxu0 0
        %1216 = vmatpush1.bf16.msra.mxu0 0
        %1217 = vmatprep.subr.bf16.mxu0 0
        %1218 = vmatpush1.bf16.msra.mxu0 0
        %1219 = vmatprep.subr.bf16.mxu0 0
        %1220 = vmatpush1.bf16.msra.mxu0 0
        %1221 = vmatprep.subr.bf16.mxu0 0
        %1222 = vmatpush1.bf16.msra.mxu0 0
        %1223 = vmatprep.subr.bf16.mxu0 0
        %1224 = vmatpush1.bf16.msra.mxu0 0
        %1225 = vmatprep.mubr.bf16.mxu0 0
        %1226 = vmatmul.mubr.bf16.gmra.mrb[0].mxu0 %v1188
        %v1227 = vpop.f32.mrb[0].mxu0
        %v1228 = vadd.f32 0.0, %v1227
        %v1229 = vpop.f32.mrb[0].mxu0
        %v1230 = vpop.f32.mrb[0].mxu0
        %v1231 = vpop.f32.mrb[0].mxu0
        %1232 = vdwg.mxu0
        %v1233 = vpack.c.bf16 %v1228, %v1228
        %v1235 = vunpack.c.l.b16 %v1233
        %v1236 = vpack.c.b16 %v1235, %v1235
        %1237 = vrot.lane.b32.xlu0 %v1236, 64
        %v1238 = vpop.permute.xlu0 %1237
        %vm1240 = vcmask 781824
        %1241 = vst.msk [vmem:[#allocation4] sm:$0xf] %vm1240, %v1238
        %1242 = vrot.lane.b32.xlu0 %v885, 32
        %v1243 = vpop.permute.xlu0 %1242
        %1244 = vrot.lane.b32.xlu0 %v886, 32
        %v1245 = vpop.permute.xlu0 %1244
        %v1247 = vsel %vm888, %v1243, 0
        %v1250 = vsel %vm888, %v1245, 0
        %1252 = vmatprep.subr.bf16.mxu0 0
        %1253 = vmatpush1.bf16.xpose.msra.mxu0 %v1250
        %1254 = vmatprep.subr.bf16.mxu0 0
        %1255 = vmatpush1.bf16.xpose.msra.mxu0 0
        %1256 = vmatprep.subr.bf16.mxu0 0
        %1257 = vmatpush1.bf16.xpose.msra.mxu0 0
        %1258 = vmatprep.subr.bf16.mxu0 0
        %1259 = vmatpush1.bf16.xpose.msra.mxu0 0
        %1260 = vmatprep.subr.bf16.mxu0 0
        %1261 = vmatpush1.bf16.xpose.msra.mxu0 0
        %1262 = vmatprep.subr.bf16.mxu0 0
        %1263 = vmatpush1.bf16.xpose.msra.mxu0 0
        %1264 = vmatprep.subr.bf16.mxu0 0
        %1265 = vmatpush1.bf16.xpose.msra.mxu0 0
        %1266 = vmatprep.subr.bf16.mxu0 0
        %1267 = vmatpush1.bf16.xpose.msra.mxu0 0
        %1268 = vmatprep.subr.bf16.mxu0 0
        %1269 = vmatpush1.bf16.xpose.msra.mxu0 0
        %1270 = vmatprep.subr.bf16.mxu0 0
        %1271 = vmatpush1.bf16.xpose.msra.mxu0 0
        %1272 = vmatprep.subr.bf16.mxu0 0
        %1273 = vmatpush1.bf16.xpose.msra.mxu0 0
        %1274 = vmatprep.subr.bf16.mxu0 0
        %1275 = vmatpush1.bf16.xpose.msra.mxu0 0
        %1276 = vmatprep.subr.bf16.mxu0 0
        %1277 = vmatpush1.bf16.xpose.msra.mxu0 0
        %1278 = vmatprep.subr.bf16.mxu0 0
        %1279 = vmatpush1.bf16.xpose.msra.mxu0 0
        %1280 = vmatprep.subr.bf16.mxu0 0
        %1281 = vmatpush1.bf16.xpose.msra.mxu0 0
        %1282 = vmatprep.subr.bf16.mxu0 0
        %1283 = vmatpush1.bf16.xpose.msra.mxu0 0
        %1284 = vmatprep.mubr.bf16.mxu0 0
        %1285 = vmatmul.mubr.bf16.gmra.mrb[0].mxu0 %v1247
        %v1286 = vpop.f32.mrb[0].mxu0
        %v1287 = vadd.f32 0.0, %v1286
        %v1288 = vpop.f32.mrb[0].mxu0
        %v1289 = vpop.f32.mrb[0].mxu0
        %v1290 = vpop.f32.mrb[0].mxu0
        %1291 = vdwg.mxu0
        %v1292 = vsel %vm884, %v1287, -1e+30
        %v1293 = vsel %vm936, %v1292, -inf
        %1294 = vmax.xlane.f32.xlu0 %v1293
        %v1295 = vpop.xlane.xlu0 %1294
        %v1296 = vsub.f32 %v1292, %v1295
        %v1297 = vmul.f32 %v1296, 1.442695
        %v1298 = vpow.pop %v1297
        %v1299 = vsel %vm936, %v1298, 0.0
        %1300 = vadd.xlane.f32.xlu0 %v1299
        %v1301 = vpop.xlane.xlu0 %1300
        %v1302 = vrcp.pop %v1301
        %v1303 = vmul.f32 %v1298, %v1302
        %v1304 = vpack.c.bf16 %v1303, %v1303
        %1305 = vrot.lane.b32.xlu0 %v887, 32
        %v1306 = vpop.permute.xlu0 %1305
        %v1308 = vsel %vm936, %v1304, 0
        %v1311 = vsel %vm952, %v1306, 0
        %1313 = vmatprep.subr.bf16.mxu0 0
        %1314 = vmatpush1.bf16.msra.mxu0 %v1311
        %1315 = vmatprep.subr.bf16.mxu0 0
        %1316 = vmatpush1.bf16.msra.mxu0 0
        %1317 = vmatprep.subr.bf16.mxu0 0
        %1318 = vmatpush1.bf16.msra.mxu0 0
        %1319 = vmatprep.subr.bf16.mxu0 0
        %1320 = vmatpush1.bf16.msra.mxu0 0
        %1321 = vmatprep.subr.bf16.mxu0 0
        %1322 = vmatpush1.bf16.msra.mxu0 0
        %1323 = vmatprep.subr.bf16.mxu0 0
        %1324 = vmatpush1.bf16.msra.mxu0 0
        %1325 = vmatprep.subr.bf16.mxu0 0
        %1326 = vmatpush1.bf16.msra.mxu0 0
        %1327 = vmatprep.subr.bf16.mxu0 0
        %1328 = vmatpush1.bf16.msra.mxu0 0
        %1329 = vmatprep.subr.bf16.mxu0 0
        %1330 = vmatpush1.bf16.msra.mxu0 0
        %1331 = vmatprep.subr.bf16.mxu0 0
        %1332 = vmatpush1.bf16.msra.mxu0 0
        %1333 = vmatprep.subr.bf16.mxu0 0
        %1334 = vmatpush1.bf16.msra.mxu0 0
        %1335 = vmatprep.subr.bf16.mxu0 0
        %1336 = vmatpush1.bf16.msra.mxu0 0
        %1337 = vmatprep.subr.bf16.mxu0 0
        %1338 = vmatpush1.bf16.msra.mxu0 0
        %1339 = vmatprep.subr.bf16.mxu0 0
        %1340 = vmatpush1.bf16.msra.mxu0 0
        %1341 = vmatprep.subr.bf16.mxu0 0
        %1342 = vmatpush1.bf16.msra.mxu0 0
        %1343 = vmatprep.subr.bf16.mxu0 0
        %1344 = vmatpush1.bf16.msra.mxu0 0
        %1345 = vmatprep.mubr.bf16.mxu0 0
        %1346 = vmatmul.mubr.bf16.gmra.mrb[0].mxu0 %v1308
        %v1347 = vpop.f32.mrb[0].mxu0
        %v1348 = vadd.f32 0.0, %v1347
        %v1349 = vpop.f32.mrb[0].mxu0
        %v1350 = vpop.f32.mrb[0].mxu0
        %v1351 = vpop.f32.mrb[0].mxu0
        %1352 = vdwg.mxu0
        %v1353 = vpack.c.bf16 %v1348, %v1348
        %v1355 = vunpack.c.l.b16 %v1353
        %v1356 = vpack.c.b16 %v1355, %v1355
        %1357 = vrot.lane.b32.xlu0 %v1356, 96
        %v1358 = vpop.permute.xlu0 %1357
        %vm1360 = vcmask 1044224
        %1361 = vst.msk [vmem:[#allocation4] sm:$0xf] %vm1360, %v1358
        %v1362 = vld [vmem:[#allocation4] sm:$0xf]
        %v1363 = vld [vmem:[#allocation13] sm:$0xf]
        %v1364 = vld [vmem:[#allocation13 + $0x4] sm:$0xf]
        %v1365 = vld [vmem:[#allocation13 + $0x8] sm:$0xf]
        %v1366 = vld [vmem:[#allocation13 + $0xc] sm:$0xf]
        %v1367 = vld [vmem:[#allocation13 + $0x10] sm:$0xf]
        %v1368 = vld [vmem:[#allocation13 + $0x14] sm:$0xf]
        %v1369 = vld [vmem:[#allocation13 + $0x18] sm:$0xf]
        %v1370 = vld [vmem:[#allocation13 + $0x1c] sm:$0xf]
        %v1371 = vld [vmem:[#allocation13 + $0x20] sm:$0xf]
        %v1372 = vld [vmem:[#allocation13 + $0x24] sm:$0xf]
        %v1373 = vld [vmem:[#allocation13 + $0x28] sm:$0xf]
        %v1374 = vld [vmem:[#allocation13 + $0x2c] sm:$0xf]
        %v1375 = vld [vmem:[#allocation13 + $0x30] sm:$0xf]
        %v1376 = vld [vmem:[#allocation13 + $0x34] sm:$0xf]
        %v1377 = vld [vmem:[#allocation13 + $0x38] sm:$0xf]
        %v1378 = vld [vmem:[#allocation13 + $0x3c] sm:$0xf]
        %v1395 = vunpack.c.l.b16 %v1363
        %v1396 = vunpack.c.l.b16 %v1364
        %v1397 = vunpack.c.l.b16 %v1365
        %v1398 = vunpack.c.l.b16 %v1366
        %v1399 = vunpack.c.l.b16 %v1367
        %v1400 = vunpack.c.l.b16 %v1368
        %v1401 = vunpack.c.l.b16 %v1369
        %v1402 = vunpack.c.l.b16 %v1370
        %v1403 = vunpack.c.l.b16 %v1371
        %v1404 = vunpack.c.l.b16 %v1372
        %v1405 = vunpack.c.l.b16 %v1373
        %v1406 = vunpack.c.l.b16 %v1374
        %v1407 = vunpack.c.l.b16 %v1375
        %v1408 = vunpack.c.l.b16 %v1376
        %v1409 = vunpack.c.l.b16 %v1377
        %v1410 = vunpack.c.l.b16 %v1378
        %v1411 = vpack.c.b16 %v1396, %v1395
        %v1412 = vpack.c.b16 %v1398, %v1397
        %v1413 = vpack.c.b16 %v1400, %v1399
        %v1414 = vpack.c.b16 %v1402, %v1401
        %v1415 = vpack.c.b16 %v1404, %v1403
        %v1416 = vpack.c.b16 %v1406, %v1405
        %v1417 = vpack.c.b16 %v1408, %v1407
        %v1418 = vpack.c.b16 %v1410, %v1409
        %1427 = vmatprep.subr.bf16.mxu0 0
        %1428 = vmatpush1.bf16.msra.mxu0 %v1411
        %1429 = vmatprep.subr.bf16.mxu0 0
        %1430 = vmatpush1.bf16.msra.mxu0 %v1412
        %1431 = vmatprep.subr.bf16.mxu0 0
        %1432 = vmatpush1.bf16.msra.mxu0 %v1413
        %1433 = vmatprep.subr.bf16.mxu0 0
        %1434 = vmatpush1.bf16.msra.mxu0 %v1414
        %1435 = vmatprep.subr.bf16.mxu0 0
        %1436 = vmatpush1.bf16.msra.mxu0 %v1415
        %1437 = vmatprep.subr.bf16.mxu0 0
        %1438 = vmatpush1.bf16.msra.mxu0 %v1416
        %1439 = vmatprep.subr.bf16.mxu0 0
        %1440 = vmatpush1.bf16.msra.mxu0 %v1417
        %1441 = vmatprep.subr.bf16.mxu0 0
        %1442 = vmatpush1.bf16.msra.mxu0 %v1418
        %1443 = vmatprep.subr.bf16.mxu0 0
        %1444 = vmatpush1.bf16.msra.mxu0 0
        %1445 = vmatprep.subr.bf16.mxu0 0
        %1446 = vmatpush1.bf16.msra.mxu0 0
        %1447 = vmatprep.subr.bf16.mxu0 0
        %1448 = vmatpush1.bf16.msra.mxu0 0
        %1449 = vmatprep.subr.bf16.mxu0 0
        %1450 = vmatpush1.bf16.msra.mxu0 0
        %1451 = vmatprep.subr.bf16.mxu0 0
        %1452 = vmatpush1.bf16.msra.mxu0 0
        %1453 = vmatprep.subr.bf16.mxu0 0
        %1454 = vmatpush1.bf16.msra.mxu0 0
        %1455 = vmatprep.subr.bf16.mxu0 0
        %1456 = vmatpush1.bf16.msra.mxu0 0
        %1457 = vmatprep.subr.bf16.mxu0 0
        %1458 = vmatpush1.bf16.msra.mxu0 0
        %1459 = vmatprep.mubr.bf16.mxu0 0
        %1460 = vmatmul.mubr.bf16.gmra.mrb[0].mxu0 %v1362
        %v1461 = vpop.f32.mrb[0].mxu0
        %v1462 = vadd.f32 0.0, %v1461
        %v1463 = vpop.f32.mrb[0].mxu0
        %v1464 = vpop.f32.mrb[0].mxu0
        %v1465 = vpop.f32.mrb[0].mxu0
        %1466 = vdwg.mxu0
        // Predicated region
        $region105: #{tpu_custom_call.1} parent=71 // pred_check
          %p1467 = pneg %p585
        $region106: #{tpu_custom_call.1} parent=71 // pred_check_branch
          %1469 = sbr.rel (%p1467) target = $region108
        $region107: #{tpu_custom_call.1} parent=71 // pred_region
          %v1470 = vld [vmem:[%s6] sm:$0x1]
          %v1472 = vlaneseq
          %v1473 = vshrl.u32 %v1472, 7
          %v1474 = vsub.s32 0, %v1473
          %v1475 = vrot.slane %v1470, %v1474
          %v1477 = vadd.f32 %v1462, %v1475
          %1478 = vst [vmem:[#allocation3] sm:$0xff] %v1477
        $region108: #{tpu_custom_call.1} parent=71 // pred_fallthru
          _
        %p1479 = scmp.gt.s32.totalorder %s38, 0
        // Predicated region
        $region109: #{tpu_custom_call.1} parent=71 // pred_check
          %p1480 = pneg %p1479
        $region110: #{tpu_custom_call.1} parent=71 // pred_check_branch
          %1482 = sbr.rel (%p1480) target = $region112
        $region111: #{tpu_custom_call.1} parent=71 // pred_region
          %v1483 = vld [vmem:[#allocation3] sm:$0xff]
          %v1484 = vadd.f32 %v1483, %v1462
          %1485 = vst [vmem:[#allocation3] sm:$0xff] %v1484
        $region112: #{tpu_custom_call.1} parent=71 // pred_fallthru
          _
        // Predicated region
        $region113: #{tpu_custom_call.1} parent=71 // pred_check
          %p1486 = pneg %p585
        $region114: #{tpu_custom_call.1} parent=71 // pred_check_branch
          %1488 = sbr.rel (%p1486) target = $region116
        $region115: #{tpu_custom_call.1} parent=71 // pred_region
          %v1489 = vld [vmem:[%s509] sm:$0xff]
          %v1490 = vld [vmem:[#allocation3] sm:$0xff]
          %v1491 = vadd.f32 %v1489, %v1490
          %v1492 = vld [vmem:[%s7] sm:$0x1]
          %v1493 = vld [vmem:[%s8] sm:$0x1]
          %1494 = vadd.xlane.f32.xlu0 %v1491
          %v1495 = vpop.xlane.xlu0 %1494
          %v1496 = vrcp.pop 128.0
          %v1497 = vmul.f32 %v1495, %v1496
          %v1498 = vsub.f32 %v1491, %v1497
          %v1499 = vmul.f32 %v1498, %v1498
          %1500 = vadd.xlane.f32.xlu0 %v1499
          %v1501 = vpop.xlane.xlu0 %1500
          %v1502 = vmul.f32 %v1501, %v1496
          %v1503 = vadd.f32 %v1502, 1e-05
          %v1504 = vrsqrt.pop %v1503
          %v1505 = vmul.f32 %v1498, %v1504
          %v1507 = vlaneseq
          %v1508 = vshrl.u32 %v1507, 7
          %v1509 = vsub.s32 0, %v1508
          %v1510 = vrot.slane %v1492, %v1509
          %v1512 = vmul.f32 %v1505, %v1510
          %v1514 = vlaneseq
          %v1515 = vshrl.u32 %v1514, 7
          %v1516 = vsub.s32 0, %v1515
          %v1517 = vrot.slane %v1493, %v1516
          %v1519 = vadd.f32 %v1512, %v1517
          %v1520 = vpack.c.bf16 %v1519, %v1519
          %v1521 = vld [vmem:[#allocation14] sm:$0xff]
          %v1522 = vld [vmem:[#allocation14 + $0x8] sm:$0xff]
          %v1523 = vld [vmem:[#allocation14 + $0x10] sm:$0xff]
          %v1524 = vld [vmem:[#allocation14 + $0x18] sm:$0xff]
          %v1525 = vld [vmem:[#allocation14 + $0x20] sm:$0xff]
          %v1526 = vld [vmem:[#allocation14 + $0x28] sm:$0xff]
          %v1527 = vld [vmem:[#allocation14 + $0x30] sm:$0xff]
          %v1528 = vld [vmem:[#allocation14 + $0x38] sm:$0xff]
          %v1529 = vld [vmem:[#allocation14 + $0x40] sm:$0xff]
          %v1530 = vld [vmem:[#allocation14 + $0x48] sm:$0xff]
          %v1531 = vld [vmem:[#allocation14 + $0x50] sm:$0xff]
          %v1532 = vld [vmem:[#allocation14 + $0x58] sm:$0xff]
          %v1533 = vld [vmem:[#allocation14 + $0x60] sm:$0xff]
          %v1534 = vld [vmem:[#allocation14 + $0x68] sm:$0xff]
          %v1535 = vld [vmem:[#allocation14 + $0x70] sm:$0xff]
          %v1536 = vld [vmem:[#allocation14 + $0x78] sm:$0xff]
          %v1537 = vld [vmem:[#allocation14 + $0x80] sm:$0xff]
          %v1538 = vld [vmem:[#allocation14 + $0x88] sm:$0xff]
          %v1539 = vld [vmem:[#allocation14 + $0x90] sm:$0xff]
          %v1540 = vld [vmem:[#allocation14 + $0x98] sm:$0xff]
          %v1541 = vld [vmem:[#allocation14 + $0xa0] sm:$0xff]
          %v1542 = vld [vmem:[#allocation14 + $0xa8] sm:$0xff]
          %v1543 = vld [vmem:[#allocation14 + $0xb0] sm:$0xff]
          %v1544 = vld [vmem:[#allocation14 + $0xb8] sm:$0xff]
          %v1545 = vld [vmem:[#allocation14 + $0xc0] sm:$0xff]
          %v1546 = vld [vmem:[#allocation14 + $0xc8] sm:$0xff]
          %v1547 = vld [vmem:[#allocation14 + $0xd0] sm:$0xff]
          %v1548 = vld [vmem:[#allocation14 + $0xd8] sm:$0xff]
          %v1549 = vld [vmem:[#allocation14 + $0xe0] sm:$0xff]
          %v1550 = vld [vmem:[#allocation14 + $0xe8] sm:$0xff]
          %v1551 = vld [vmem:[#allocation14 + $0xf0] sm:$0xff]
          %v1552 = vld [vmem:[#allocation14 + $0xf8] sm:$0xff]
          %v1553 = vld [vmem:[%s10] sm:$0xf]
          %v1555 = vlaneseq
          %v1556 = vshrl.u32 %v1555, 7
          %v1557 = vsub.s32 0, %v1556
          %v1558 = vrot.slane %v1553, %v1557
          %v1559 = vlaneseq
          %v1560 = vshrl.u32 %v1559, 7
          %v1561 = vsub.s32 1, %v1560
          %v1562 = vrot.slane %v1553, %v1561
          %v1563 = vlaneseq
          %v1564 = vshrl.u32 %v1563, 7
          %v1565 = vsub.s32 2, %v1564
          %v1566 = vrot.slane %v1553, %v1565
          %v1567 = vlaneseq
          %v1568 = vshrl.u32 %v1567, 7
          %v1569 = vsub.s32 3, %v1568
          %v1570 = vrot.slane %v1553, %v1569
          %v1607 = vunpack.c.l.b16 %v1521
          %v1608 = vunpack.c.h.b16 %v1521
          %v1609 = vunpack.c.l.b16 %v1522
          %v1610 = vunpack.c.h.b16 %v1522
          %v1611 = vunpack.c.l.b16 %v1523
          %v1612 = vunpack.c.h.b16 %v1523
          %v1613 = vunpack.c.l.b16 %v1524
          %v1614 = vunpack.c.h.b16 %v1524
          %v1615 = vunpack.c.l.b16 %v1525
          %v1616 = vunpack.c.h.b16 %v1525
          %v1617 = vunpack.c.l.b16 %v1526
          %v1618 = vunpack.c.h.b16 %v1526
          %v1619 = vunpack.c.l.b16 %v1527
          %v1620 = vunpack.c.h.b16 %v1527
          %v1621 = vunpack.c.l.b16 %v1528
          %v1622 = vunpack.c.h.b16 %v1528
          %v1623 = vunpack.c.l.b16 %v1529
          %v1624 = vunpack.c.h.b16 %v1529
          %v1625 = vunpack.c.l.b16 %v1530
          %v1626 = vunpack.c.h.b16 %v1530
          %v1627 = vunpack.c.l.b16 %v1531
          %v1628 = vunpack.c.h.b16 %v1531
          %v1629 = vunpack.c.l.b16 %v1532
          %v1630 = vunpack.c.h.b16 %v1532
          %v1631 = vunpack.c.l.b16 %v1533
          %v1632 = vunpack.c.h.b16 %v1533
          %v1633 = vunpack.c.l.b16 %v1534
          %v1634 = vunpack.c.h.b16 %v1534
          %v1635 = vunpack.c.l.b16 %v1535
          %v1636 = vunpack.c.h.b16 %v1535
          %v1637 = vunpack.c.l.b16 %v1536
          %v1638 = vunpack.c.h.b16 %v1536
          %v1639 = vunpack.c.l.b16 %v1537
          %v1640 = vunpack.c.h.b16 %v1537
          %v1641 = vunpack.c.l.b16 %v1538
          %v1642 = vunpack.c.h.b16 %v1538
          %v1643 = vunpack.c.l.b16 %v1539
          %v1644 = vunpack.c.h.b16 %v1539
          %v1645 = vunpack.c.l.b16 %v1540
          %v1646 = vunpack.c.h.b16 %v1540
          %v1647 = vunpack.c.l.b16 %v1541
          %v1648 = vunpack.c.h.b16 %v1541
          %v1649 = vunpack.c.l.b16 %v1542
          %v1650 = vunpack.c.h.b16 %v1542
          %v1651 = vunpack.c.l.b16 %v1543
          %v1652 = vunpack.c.h.b16 %v1543
          %v1653 = vunpack.c.l.b16 %v1544
          %v1654 = vunpack.c.h.b16 %v1544
          %v1655 = vunpack.c.l.b16 %v1545
          %v1656 = vunpack.c.h.b16 %v1545
          %v1657 = vunpack.c.l.b16 %v1546
          %v1658 = vunpack.c.h.b16 %v1546
          %v1659 = vunpack.c.l.b16 %v1547
          %v1660 = vunpack.c.h.b16 %v1547
          %v1661 = vunpack.c.l.b16 %v1548
          %v1662 = vunpack.c.h.b16 %v1548
          %v1663 = vunpack.c.l.b16 %v1549
          %v1664 = vunpack.c.h.b16 %v1549
          %v1665 = vunpack.c.l.b16 %v1550
          %v1666 = vunpack.c.h.b16 %v1550
          %v1667 = vunpack.c.l.b16 %v1551
          %v1668 = vunpack.c.h.b16 %v1551
          %v1669 = vunpack.c.l.b16 %v1552
          %v1670 = vunpack.c.h.b16 %v1552
          %v1671 = vpack.c.b16 %v1611, %v1607
          %v1672 = vpack.c.b16 %v1612, %v1608
          %v1673 = vpack.c.b16 %v1613, %v1609
          %v1674 = vpack.c.b16 %v1614, %v1610
          %v1675 = vpack.c.b16 %v1619, %v1615
          %v1676 = vpack.c.b16 %v1620, %v1616
          %v1677 = vpack.c.b16 %v1621, %v1617
          %v1678 = vpack.c.b16 %v1622, %v1618
          %v1679 = vpack.c.b16 %v1627, %v1623
          %v1680 = vpack.c.b16 %v1628, %v1624
          %v1681 = vpack.c.b16 %v1629, %v1625
          %v1682 = vpack.c.b16 %v1630, %v1626
          %v1683 = vpack.c.b16 %v1635, %v1631
          %v1684 = vpack.c.b16 %v1636, %v1632
          %v1685 = vpack.c.b16 %v1637, %v1633
          %v1686 = vpack.c.b16 %v1638, %v1634
          %v1687 = vpack.c.b16 %v1643, %v1639
          %v1688 = vpack.c.b16 %v1644, %v1640
          %v1689 = vpack.c.b16 %v1645, %v1641
          %v1690 = vpack.c.b16 %v1646, %v1642
          %v1691 = vpack.c.b16 %v1651, %v1647
          %v1692 = vpack.c.b16 %v1652, %v1648
          %v1693 = vpack.c.b16 %v1653, %v1649
          %v1694 = vpack.c.b16 %v1654, %v1650
          %v1695 = vpack.c.b16 %v1659, %v1655
          %v1696 = vpack.c.b16 %v1660, %v1656
          %v1697 = vpack.c.b16 %v1661, %v1657
          %v1698 = vpack.c.b16 %v1662, %v1658
          %v1699 = vpack.c.b16 %v1667, %v1663
          %v1700 = vpack.c.b16 %v1668, %v1664
          %v1701 = vpack.c.b16 %v1669, %v1665
          %v1702 = vpack.c.b16 %v1670, %v1666
          %1735 = vmatprep.subr.bf16.mxu0 %v1672
          %1736 = vmatpush1.bf16.msra.mxu0 %v1671
          %1737 = vmatprep.subr.bf16.mxu0 %v1676
          %1738 = vmatpush1.bf16.msra.mxu0 %v1675
          %1739 = vmatprep.subr.bf16.mxu0 %v1680
          %1740 = vmatpush1.bf16.msra.mxu0 %v1679
          %1741 = vmatprep.subr.bf16.mxu0 %v1684
          %1742 = vmatpush1.bf16.msra.mxu0 %v1683
          %1743 = vmatprep.subr.bf16.mxu0 %v1688
          %1744 = vmatpush1.bf16.msra.mxu0 %v1687
          %1745 = vmatprep.subr.bf16.mxu0 %v1692
          %1746 = vmatpush1.bf16.msra.mxu0 %v1691
          %1747 = vmatprep.subr.bf16.mxu0 %v1696
          %1748 = vmatpush1.bf16.msra.mxu0 %v1695
          %1749 = vmatprep.subr.bf16.mxu0 %v1700
          %1750 = vmatpush1.bf16.msra.mxu0 %v1699
          %1751 = vmatprep.subr.bf16.mxu0 0
          %1752 = vmatpush1.bf16.msra.mxu0 0
          %1753 = vmatprep.subr.bf16.mxu0 0
          %1754 = vmatpush1.bf16.msra.mxu0 0
          %1755 = vmatprep.subr.bf16.mxu0 0
          %1756 = vmatpush1.bf16.msra.mxu0 0
          %1757 = vmatprep.subr.bf16.mxu0 0
          %1758 = vmatpush1.bf16.msra.mxu0 0
          %1759 = vmatprep.subr.bf16.mxu0 0
          %1760 = vmatpush1.bf16.msra.mxu0 0
          %1761 = vmatprep.subr.bf16.mxu0 0
          %1762 = vmatpush1.bf16.msra.mxu0 0
          %1763 = vmatprep.subr.bf16.mxu0 0
          %1764 = vmatpush1.bf16.msra.mxu0 0
          %1765 = vmatprep.subr.bf16.mxu0 0
          %1766 = vmatpush1.bf16.msra.mxu0 0
          %1767 = vmatprep.mubr.bf16.mxu0 0
          %1768 = vmatmul.mubr.bf16.gmra.mrb[0].mxu0 %v1520
          %v1769 = vpop.f32.mrb[0].mxu0
          %v1770 = vadd.f32 %v1558, %v1769
          %v1771 = vpop.f32.mrb[0].mxu0
          %v1772 = vadd.f32 %v1562, %v1771
          %v1773 = vpop.f32.mrb[0].mxu0
          %v1774 = vpop.f32.mrb[0].mxu0
          %1775 = vdwg.mxu0
          %1776 = vmatprep.subr.bf16.mxu0 %v1674
          %1777 = vmatpush1.bf16.msra.mxu0 %v1673
          %1778 = vmatprep.subr.bf16.mxu0 %v1678
          %1779 = vmatpush1.bf16.msra.mxu0 %v1677
          %1780 = vmatprep.subr.bf16.mxu0 %v1682
          %1781 = vmatpush1.bf16.msra.mxu0 %v1681
          %1782 = vmatprep.subr.bf16.mxu0 %v1686
          %1783 = vmatpush1.bf16.msra.mxu0 %v1685
          %1784 = vmatprep.subr.bf16.mxu0 %v1690
          %1785 = vmatpush1.bf16.msra.mxu0 %v1689
          %1786 = vmatprep.subr.bf16.mxu0 %v1694
          %1787 = vmatpush1.bf16.msra.mxu0 %v1693
          %1788 = vmatprep.subr.bf16.mxu0 %v1698
          %1789 = vmatpush1.bf16.msra.mxu0 %v1697
          %1790 = vmatprep.subr.bf16.mxu0 %v1702
          %1791 = vmatpush1.bf16.msra.mxu0 %v1701
          %1792 = vmatprep.subr.bf16.mxu0 0
          %1793 = vmatpush1.bf16.msra.mxu0 0
          %1794 = vmatprep.subr.bf16.mxu0 0
          %1795 = vmatpush1.bf16.msra.mxu0 0
          %1796 = vmatprep.subr.bf16.mxu0 0
          %1797 = vmatpush1.bf16.msra.mxu0 0
          %1798 = vmatprep.subr.bf16.mxu0 0
          %1799 = vmatpush1.bf16.msra.mxu0 0
          %1800 = vmatprep.subr.bf16.mxu0 0
          %1801 = vmatpush1.bf16.msra.mxu0 0
          %1802 = vmatprep.subr.bf16.mxu0 0
          %1803 = vmatpush1.bf16.msra.mxu0 0
          %1804 = vmatprep.subr.bf16.mxu0 0
          %1805 = vmatpush1.bf16.msra.mxu0 0
          %1806 = vmatprep.subr.bf16.mxu0 0
          %1807 = vmatpush1.bf16.msra.mxu0 0
          %1808 = vmatprep.mubr.bf16.mxu0 0
          %1809 = vmatmul.mubr.bf16.gmra.mrb[0].mxu0 %v1520
          %v1810 = vpop.f32.mrb[0].mxu0
          %v1811 = vadd.f32 %v1566, %v1810
          %v1812 = vpop.f32.mrb[0].mxu0
          %v1813 = vadd.f32 %v1570, %v1812
          %v1814 = vpop.f32.mrb[0].mxu0
          %v1815 = vpop.f32.mrb[0].mxu0
          %1816 = vdwg.mxu0
          %v1817 = vmul.f32 %v1770, 0.5
          %v1818 = vmul.f32 %v1772, 0.5
          %v1819 = vmul.f32 %v1811, 0.5
          %v1820 = vmul.f32 %v1813, 0.5
          %v1821 = vmul.f32 %v1770, 0.044715
          %v1822 = vmul.f32 %v1772, 0.044715
          %v1823 = vmul.f32 %v1811, 0.044715
          %v1824 = vmul.f32 %v1813, 0.044715
          %v1825 = vmul.f32 %v1821, %v1770
          %v1826 = vmul.f32 %v1822, %v1772
          %v1827 = vmul.f32 %v1823, %v1811
          %v1828 = vmul.f32 %v1824, %v1813
          %v1829 = vmul.f32 %v1825, %v1770
          %v1830 = vmul.f32 %v1826, %v1772
          %v1831 = vmul.f32 %v1827, %v1811
          %v1832 = vmul.f32 %v1828, %v1813
          %v1833 = vadd.f32 %v1770, %v1829
          %v1834 = vadd.f32 %v1772, %v1830
          %v1835 = vadd.f32 %v1811, %v1831
          %v1836 = vadd.f32 %v1813, %v1832
          %v1837 = vmul.f32 %v1833, 0.7978846
          %v1838 = vmul.f32 %v1834, 0.7978846
          %v1839 = vmul.f32 %v1835, 0.7978846
          %v1840 = vmul.f32 %v1836, 0.7978846
          %v1841 = vtanh.pop %v1837
          %v1842 = vtanh.pop %v1838
          %v1843 = vtanh.pop %v1839
          %v1844 = vtanh.pop %v1840
          %v1845 = vadd.f32 %v1841, 1.0
          %v1846 = vadd.f32 %v1842, 1.0
          %v1847 = vadd.f32 %v1843, 1.0
          %v1848 = vadd.f32 %v1844, 1.0
          %v1849 = vmul.f32 %v1817, %v1845
          %v1850 = vmul.f32 %v1818, %v1846
          %v1851 = vmul.f32 %v1819, %v1847
          %v1852 = vmul.f32 %v1820, %v1848
          %v1853 = vpack.c.bf16 %v1849, %v1849
          %v1854 = vpack.c.bf16 %v1850, %v1850
          %v1855 = vpack.c.bf16 %v1851, %v1851
          %v1856 = vpack.c.bf16 %v1852, %v1852
          %v1857 = vld [vmem:[#allocation16] sm:$0xf]
          %v1858 = vld [vmem:[#allocation16 + $0x4] sm:$0xf]
          %v1859 = vld [vmem:[#allocation16 + $0x8] sm:$0xf]
          %v1860 = vld [vmem:[#allocation16 + $0xc] sm:$0xf]
          %v1861 = vld [vmem:[#allocation16 + $0x10] sm:$0xf]
          %v1862 = vld [vmem:[#allocation16 + $0x14] sm:$0xf]
          %v1863 = vld [vmem:[#allocation16 + $0x18] sm:$0xf]
          %v1864 = vld [vmem:[#allocation16 + $0x1c] sm:$0xf]
          %v1865 = vld [vmem:[#allocation16 + $0x20] sm:$0xf]
          %v1866 = vld [vmem:[#allocation16 + $0x24] sm:$0xf]
          %v1867 = vld [vmem:[#allocation16 + $0x28] sm:$0xf]
          %v1868 = vld [vmem:[#allocation16 + $0x2c] sm:$0xf]
          %v1869 = vld [vmem:[#allocation16 + $0x30] sm:$0xf]
          %v1870 = vld [vmem:[#allocation16 + $0x34] sm:$0xf]
          %v1871 = vld [vmem:[#allocation16 + $0x38] sm:$0xf]
          %v1872 = vld [vmem:[#allocation16 + $0x3c] sm:$0xf]
          %v1873 = vld [vmem:[#allocation16 + $0x40] sm:$0xf]
          %v1874 = vld [vmem:[#allocation16 + $0x44] sm:$0xf]
          %v1875 = vld [vmem:[#allocation16 + $0x48] sm:$0xf]
          %v1876 = vld [vmem:[#allocation16 + $0x4c] sm:$0xf]
          %v1877 = vld [vmem:[#allocation16 + $0x50] sm:$0xf]
          %v1878 = vld [vmem:[#allocation16 + $0x54] sm:$0xf]
          %v1879 = vld [vmem:[#allocation16 + $0x58] sm:$0xf]
          %v1880 = vld [vmem:[#allocation16 + $0x5c] sm:$0xf]
          %v1881 = vld [vmem:[#allocation16 + $0x60] sm:$0xf]
          %v1882 = vld [vmem:[#allocation16 + $0x64] sm:$0xf]
          %v1883 = vld [vmem:[#allocation16 + $0x68] sm:$0xf]
          %v1884 = vld [vmem:[#allocation16 + $0x6c] sm:$0xf]
          %v1885 = vld [vmem:[#allocation16 + $0x70] sm:$0xf]
          %v1886 = vld [vmem:[#allocation16 + $0x74] sm:$0xf]
          %v1887 = vld [vmem:[#allocation16 + $0x78] sm:$0xf]
          %v1888 = vld [vmem:[#allocation16 + $0x7c] sm:$0xf]
          %v1889 = vld [vmem:[#allocation16 + $0x80] sm:$0xf]
          %v1890 = vld [vmem:[#allocation16 + $0x84] sm:$0xf]
          %v1891 = vld [vmem:[#allocation16 + $0x88] sm:$0xf]
          %v1892 = vld [vmem:[#allocation16 + $0x8c] sm:$0xf]
          %v1893 = vld [vmem:[#allocation16 + $0x90] sm:$0xf]
          %v1894 = vld [vmem:[#allocation16 + $0x94] sm:$0xf]
          %v1895 = vld [vmem:[#allocation16 + $0x98] sm:$0xf]
          %v1896 = vld [vmem:[#allocation16 + $0x9c] sm:$0xf]
          %v1897 = vld [vmem:[#allocation16 + $0xa0] sm:$0xf]
          %v1898 = vld [vmem:[#allocation16 + $0xa4] sm:$0xf]
          %v1899 = vld [vmem:[#allocation16 + $0xa8] sm:$0xf]
          %v1900 = vld [vmem:[#allocation16 + $0xac] sm:$0xf]
          %v1901 = vld [vmem:[#allocation16 + $0xb0] sm:$0xf]
          %v1902 = vld [vmem:[#allocation16 + $0xb4] sm:$0xf]
          %v1903 = vld [vmem:[#allocation16 + $0xb8] sm:$0xf]
          %v1904 = vld [vmem:[#allocation16 + $0xbc] sm:$0xf]
          %v1905 = vld [vmem:[#allocation16 + $0xc0] sm:$0xf]
          %v1906 = vld [vmem:[#allocation16 + $0xc4] sm:$0xf]
          %v1907 = vld [vmem:[#allocation16 + $0xc8] sm:$0xf]
          %v1908 = vld [vmem:[#allocation16 + $0xcc] sm:$0xf]
          %v1909 = vld [vmem:[#allocation16 + $0xd0] sm:$0xf]
          %v1910 = vld [vmem:[#allocation16 + $0xd4] sm:$0xf]
          %v1911 = vld [vmem:[#allocation16 + $0xd8] sm:$0xf]
          %v1912 = vld [vmem:[#allocation16 + $0xdc] sm:$0xf]
          %v1913 = vld [vmem:[#allocation16 + $0xe0] sm:$0xf]
          %v1914 = vld [vmem:[#allocation16 + $0xe4] sm:$0xf]
          %v1915 = vld [vmem:[#allocation16 + $0xe8] sm:$0xf]
          %v1916 = vld [vmem:[#allocation16 + $0xec] sm:$0xf]
          %v1917 = vld [vmem:[#allocation16 + $0xf0] sm:$0xf]
          %v1918 = vld [vmem:[#allocation16 + $0xf4] sm:$0xf]
          %v1919 = vld [vmem:[#allocation16 + $0xf8] sm:$0xf]
          %v1920 = vld [vmem:[#allocation16 + $0xfc] sm:$0xf]
          %v1985 = vunpack.c.l.b16 %v1857
          %v1986 = vunpack.c.l.b16 %v1858
          %v1987 = vunpack.c.l.b16 %v1859
          %v1988 = vunpack.c.l.b16 %v1860
          %v1989 = vunpack.c.l.b16 %v1861
          %v1990 = vunpack.c.l.b16 %v1862
          %v1991 = vunpack.c.l.b16 %v1863
          %v1992 = vunpack.c.l.b16 %v1864
          %v1993 = vunpack.c.l.b16 %v1865
          %v1994 = vunpack.c.l.b16 %v1866
          %v1995 = vunpack.c.l.b16 %v1867
          %v1996 = vunpack.c.l.b16 %v1868
          %v1997 = vunpack.c.l.b16 %v1869
          %v1998 = vunpack.c.l.b16 %v1870
          %v1999 = vunpack.c.l.b16 %v1871
          %v2000 = vunpack.c.l.b16 %v1872
          %v2001 = vunpack.c.l.b16 %v1873
          %v2002 = vunpack.c.l.b16 %v1874
          %v2003 = vunpack.c.l.b16 %v1875
          %v2004 = vunpack.c.l.b16 %v1876
          %v2005 = vunpack.c.l.b16 %v1877
          %v2006 = vunpack.c.l.b16 %v1878
          %v2007 = vunpack.c.l.b16 %v1879
          %v2008 = vunpack.c.l.b16 %v1880
          %v2009 = vunpack.c.l.b16 %v1881
          %v2010 = vunpack.c.l.b16 %v1882
          %v2011 = vunpack.c.l.b16 %v1883
          %v2012 = vunpack.c.l.b16 %v1884
          %v2013 = vunpack.c.l.b16 %v1885
          %v2014 = vunpack.c.l.b16 %v1886
          %v2015 = vunpack.c.l.b16 %v1887
          %v2016 = vunpack.c.l.b16 %v1888
          %v2017 = vunpack.c.l.b16 %v1889
          %v2018 = vunpack.c.l.b16 %v1890
          %v2019 = vunpack.c.l.b16 %v1891
          %v2020 = vunpack.c.l.b16 %v1892
          %v2021 = vunpack.c.l.b16 %v1893
          %v2022 = vunpack.c.l.b16 %v1894
          %v2023 = vunpack.c.l.b16 %v1895
          %v2024 = vunpack.c.l.b16 %v1896
          %v2025 = vunpack.c.l.b16 %v1897
          %v2026 = vunpack.c.l.b16 %v1898
          %v2027 = vunpack.c.l.b16 %v1899
          %v2028 = vunpack.c.l.b16 %v1900
          %v2029 = vunpack.c.l.b16 %v1901
          %v2030 = vunpack.c.l.b16 %v1902
          %v2031 = vunpack.c.l.b16 %v1903
          %v2032 = vunpack.c.l.b16 %v1904
          %v2033 = vunpack.c.l.b16 %v1905
          %v2034 = vunpack.c.l.b16 %v1906
          %v2035 = vunpack.c.l.b16 %v1907
          %v2036 = vunpack.c.l.b16 %v1908
          %v2037 = vunpack.c.l.b16 %v1909
          %v2038 = vunpack.c.l.b16 %v1910
          %v2039 = vunpack.c.l.b16 %v1911
          %v2040 = vunpack.c.l.b16 %v1912
          %v2041 = vunpack.c.l.b16 %v1913
          %v2042 = vunpack.c.l.b16 %v1914
          %v2043 = vunpack.c.l.b16 %v1915
          %v2044 = vunpack.c.l.b16 %v1916
          %v2045 = vunpack.c.l.b16 %v1917
          %v2046 = vunpack.c.l.b16 %v1918
          %v2047 = vunpack.c.l.b16 %v1919
          %v2048 = vunpack.c.l.b16 %v1920
          %v2049 = vpack.c.b16 %v1986, %v1985
          %v2050 = vpack.c.b16 %v1988, %v1987
          %v2051 = vpack.c.b16 %v1990, %v1989
          %v2052 = vpack.c.b16 %v1992, %v1991
          %v2053 = vpack.c.b16 %v1994, %v1993
          %v2054 = vpack.c.b16 %v1996, %v1995
          %v2055 = vpack.c.b16 %v1998, %v1997
          %v2056 = vpack.c.b16 %v2000, %v1999
          %v2057 = vpack.c.b16 %v2002, %v2001
          %v2058 = vpack.c.b16 %v2004, %v2003
          %v2059 = vpack.c.b16 %v2006, %v2005
          %v2060 = vpack.c.b16 %v2008, %v2007
          %v2061 = vpack.c.b16 %v2010, %v2009
          %v2062 = vpack.c.b16 %v2012, %v2011
          %v2063 = vpack.c.b16 %v2014, %v2013
          %v2064 = vpack.c.b16 %v2016, %v2015
          %v2065 = vpack.c.b16 %v2018, %v2017
          %v2066 = vpack.c.b16 %v2020, %v2019
          %v2067 = vpack.c.b16 %v2022, %v2021
          %v2068 = vpack.c.b16 %v2024, %v2023
          %v2069 = vpack.c.b16 %v2026, %v2025
          %v2070 = vpack.c.b16 %v2028, %v2027
          %v2071 = vpack.c.b16 %v2030, %v2029
          %v2072 = vpack.c.b16 %v2032, %v2031
          %v2073 = vpack.c.b16 %v2034, %v2033
          %v2074 = vpack.c.b16 %v2036, %v2035
          %v2075 = vpack.c.b16 %v2038, %v2037
          %v2076 = vpack.c.b16 %v2040, %v2039
          %v2077 = vpack.c.b16 %v2042, %v2041
          %v2078 = vpack.c.b16 %v2044, %v2043
          %v2079 = vpack.c.b16 %v2046, %v2045
          %v2080 = vpack.c.b16 %v2048, %v2047
          %2113 = vmatprep.subr.bf16.mxu0 0
          %2114 = vmatpush1.bf16.msra.mxu0 %v2049
          %2115 = vmatprep.subr.bf16.mxu0 0
          %2116 = vmatpush1.bf16.msra.mxu0 %v2050
          %2117 = vmatprep.subr.bf16.mxu0 0
          %2118 = vmatpush1.bf16.msra.mxu0 %v2051
          %2119 = vmatprep.subr.bf16.mxu0 0
          %2120 = vmatpush1.bf16.msra.mxu0 %v2052
          %2121 = vmatprep.subr.bf16.mxu0 0
          %2122 = vmatpush1.bf16.msra.mxu0 %v2053
          %2123 = vmatprep.subr.bf16.mxu0 0
          %2124 = vmatpush1.bf16.msra.mxu0 %v2054
          %2125 = vmatprep.subr.bf16.mxu0 0
          %2126 = vmatpush1.bf16.msra.mxu0 %v2055
          %2127 = vmatprep.subr.bf16.mxu0 0
          %2128 = vmatpush1.bf16.msra.mxu0 %v2056
          %2129 = vmatprep.subr.bf16.mxu0 0
          %2130 = vmatpush1.bf16.msra.mxu0 %v2057
          %2131 = vmatprep.subr.bf16.mxu0 0
          %2132 = vmatpush1.bf16.msra.mxu0 %v2058
          %2133 = vmatprep.subr.bf16.mxu0 0
          %2134 = vmatpush1.bf16.msra.mxu0 %v2059
          %2135 = vmatprep.subr.bf16.mxu0 0
          %2136 = vmatpush1.bf16.msra.mxu0 %v2060
          %2137 = vmatprep.subr.bf16.mxu0 0
          %2138 = vmatpush1.bf16.msra.mxu0 %v2061
          %2139 = vmatprep.subr.bf16.mxu0 0
          %2140 = vmatpush1.bf16.msra.mxu0 %v2062
          %2141 = vmatprep.subr.bf16.mxu0 0
          %2142 = vmatpush1.bf16.msra.mxu0 %v2063
          %2143 = vmatprep.subr.bf16.mxu0 0
          %2144 = vmatpush1.bf16.msra.mxu0 %v2064
          %2145 = vmatprep.mubr.bf16.mxu0 %v1854
          %2146 = vmatmul.mubr.bf16.gmra.mrb[0].mxu0 %v1853
          %v2147 = vpop.f32.mrb[0].mxu0
          %v2148 = vadd.f32 0.0, %v2147
          %v2149 = vpop.f32.mrb[0].mxu0
          %v2150 = vpop.f32.mrb[0].mxu0
          %v2151 = vpop.f32.mrb[0].mxu0
          %2152 = vdwg.mxu0
          %2153 = vmatprep.subr.bf16.mxu0 0
          %2154 = vmatpush1.bf16.msra.mxu0 %v2065
          %2155 = vmatprep.subr.bf16.mxu0 0
          %2156 = vmatpush1.bf16.msra.mxu0 %v2066
          %2157 = vmatprep.subr.bf16.mxu0 0
          %2158 = vmatpush1.bf16.msra.mxu0 %v2067
          %2159 = vmatprep.subr.bf16.mxu0 0
          %2160 = vmatpush1.bf16.msra.mxu0 %v2068
          %2161 = vmatprep.subr.bf16.mxu0 0
          %2162 = vmatpush1.bf16.msra.mxu0 %v2069
          %2163 = vmatprep.subr.bf16.mxu0 0
          %2164 = vmatpush1.bf16.msra.mxu0 %v2070
          %2165 = vmatprep.subr.bf16.mxu0 0
          %2166 = vmatpush1.bf16.msra.mxu0 %v2071
          %2167 = vmatprep.subr.bf16.mxu0 0
          %2168 = vmatpush1.bf16.msra.mxu0 %v2072
          %2169 = vmatprep.subr.bf16.mxu0 0
          %2170 = vmatpush1.bf16.msra.mxu0 %v2073
          %2171 = vmatprep.subr.bf16.mxu0 0
          %2172 = vmatpush1.bf16.msra.mxu0 %v2074
          %2173 = vmatprep.subr.bf16.mxu0 0
          %2174 = vmatpush1.bf16.msra.mxu0 %v2075
          %2175 = vmatprep.subr.bf16.mxu0 0
          %2176 = vmatpush1.bf16.msra.mxu0 %v2076
          %2177 = vmatprep.subr.bf16.mxu0 0
          %2178 = vmatpush1.bf16.msra.mxu0 %v2077
          %2179 = vmatprep.subr.bf16.mxu0 0
          %2180 = vmatpush1.bf16.msra.mxu0 %v2078
          %2181 = vmatprep.subr.bf16.mxu0 0
          %2182 = vmatpush1.bf16.msra.mxu0 %v2079
          %2183 = vmatprep.subr.bf16.mxu0 0
          %2184 = vmatpush1.bf16.msra.mxu0 %v2080
          %2185 = vmatprep.mubr.bf16.mxu0 %v1856
          %2186 = vmatmul.mubr.bf16.gmra.mrb[0].mxu0 %v1855
          %v2187 = vpop.f32.mrb[0].mxu0
          %v2188 = vadd.f32 %v2148, %v2187
          %v2189 = vpop.f32.mrb[0].mxu0
          %v2190 = vpop.f32.mrb[0].mxu0
          %v2191 = vpop.f32.mrb[0].mxu0
          %2192 = vdwg.mxu0
          %v2193 = vadd.f32 %v1491, %v2188
          %v2194 = vld [vmem:[%s12] sm:$0x1]
          %v2196 = vlaneseq
          %v2197 = vshrl.u32 %v2196, 7
          %v2198 = vsub.s32 0, %v2197
          %v2199 = vrot.slane %v2194, %v2198
          %v2201 = vadd.f32 %v2193, %v2199
          %2202 = vst [vmem:[%s579] sm:$0xff] %v2201
        $region116: #{tpu_custom_call.1} parent=71 // pred_fallthru
          _
        %s2203 = sand.u32 %s346, 1
        %s2204 = scalar_lea.sflag [#allocation7], %s2203
        %s2205 = sand.u32 %s346, 1
        %s2206 = smul.addr %s2205, 8
        %s2207 = scalar_lea.vmem [#allocation17], %s2206
        // Predicated region
        $region117: #{tpu_custom_call.1} parent=71 // pred_check
          %p2208 = pneg %p356
        $region118: #{tpu_custom_call.1} parent=71 // pred_check_branch
          %2210 = sbr.rel (%p2208) target = $region120
        $region119: #{tpu_custom_call.1} parent=71 // pred_region
          %s2212 = ssub.s32 128, 128
          %2213 = vsyncadd %s2204, %s2212
          %s2214 = smul.addr %s37, 128
          %s2215 = scalar_lea.hbm %s13, %s2214
          %s2217 = sshll.u32 %s2207, 4
          %s2218 = int_to_ptr.vmem [resolvable:$true] %s2217
          %2220 = dma.vmem_to_hbm [thread:$0]  %s2218, 128, %s2215, %s2204
        $region120: #{tpu_custom_call.1} parent=71 // pred_fallthru
          _
      $region72: #{tpu_custom_call.1} parent=5 // pred_fallthru
        _
      %p2221 = scmp.le.s32.totalorder 2, %s28
      // Predicated region
      $region121: #{tpu_custom_call.1} parent=5 // pred_check
        %p2222 = pneg %p2221
      $region122: #{tpu_custom_call.1} parent=5 // pred_check_branch
        %2224 = sbr.rel (%p2222) target = $region124
      $region123: #{tpu_custom_call.1} parent=5 // pred_region
        %s2225 = ssub.s32 %s28, 2
        // Predicated region
        $region125: #{tpu_custom_call.1} parent=123 // pred_check
          %p2226 = pneg %p362
        $region126: #{tpu_custom_call.1} parent=123 // pred_check_branch
          %2228 = sbr.rel (%p2226) target = $region128
        $region127: #{tpu_custom_call.1} parent=123 // pred_region
          %s2229 = sand.u32 %s347, 1
          %s2230 = scalar_lea.sflag [#allocation7], %s2229
          %s2231 = sand.u32 %s347, 1
          %s2232 = smul.addr %s2231, 8
          %s2233 = scalar_lea.vmem [#allocation17], %s2232
          %2234 = dma.done %s2230, 128
        $region128: #{tpu_custom_call.1} parent=123 // pred_fallthru
          _
      $region124: #{tpu_custom_call.1} parent=5 // pred_fallthru
        _
    $region6: #{tpu_custom_call.1} parent=1 // loop_footer
      %s32 = sadd.s32 1, %s28
    $region7: #{tpu_custom_call.1} parent=1 // loop_footer_branch
      %27 = sbr.rel target = $region3
    $region8: #{tpu_custom_call.1} parent=1 // loop_exit
      _
    %2235 = vsyncpa [#allocation6], 1
    %s2236 = scalar_lea.sflag [#allocation6], 1
    %2237 = vsyncpa %s2236, 1
    %2238 = vsyncpa [#allocation9], 1
    %2239 = vsyncpa [#allocation12], 1
    %2240 = vsyncpa [#allocation15], 1
    %2241 = vsyncpa [#allocation7], 1
    %s2242 = scalar_lea.sflag [#allocation7], 1
    %2243 = vsyncpa %s2242, 1

// kernel: tpu_custom_call.1
$region0: #{tpu_custom_call.1}
  #allocation0 [shape = 'u32[]', space=smem, size = 0x4, offset = 0x4, fixed_abs, tag = 'smem constant byte address 0x4 - core index']
  #allocation1 [shape = 'u32[144,128]{1,0:T(1,128)}', space=vmem, size = 0x12000, scoped, tag = 'internal scratch']
  #allocation2 [shape = 'bf16[8,128]{1,0:T(8,128)(2,1)}', space=vmem, size = 0x800, scoped, tag = 'scratch operand']
  #allocation3 [shape = 'f32[8,128]{1,0:T(8,128)}', space=vmem, size = 0x1000, scoped, tag = 'scratch operand']
  #allocation4 [shape = 'bf16[8,128]{1,0:T(8,128)(2,1)}', space=vmem, size = 0x800, scoped, tag = 'scratch operand']
  %s0 = inlined_call_operand.hbm [shape: f32[2,8,128], index: 0, kind: input, shape index: {}]
  %s1 = inlined_call_operand.hbm [shape: f32[1,128], index: 1, kind: input, shape index: {}]
  %s2 = inlined_call_operand.hbm [shape: f32[1,128], index: 2, kind: input, shape index: {}]
  %s3 = inlined_call_operand.hbm [shape: bf16[1,128,384], index: 3, kind: input, shape index: {}]
  %s4 = inlined_call_operand.vmem [shape: f32[1,1,384], index: 4, kind: input, shape index: {}]
  %s5 = inlined_call_operand.hbm [shape: bf16[1,128,128], index: 5, kind: input, shape index: {}]
  %s6 = inlined_call_operand.vmem [shape: f32[1,128], index: 6, kind: input, shape index: {}]
  %s7 = inlined_call_operand.vmem [shape: f32[1,128], index: 7, kind: input, shape index: {}]
  %s8 = inlined_call_operand.vmem [shape: f32[1,128], index: 8, kind: input, shape index: {}]
  %s9 = inlined_call_operand.hbm [shape: bf16[128,512], index: 9, kind: input, shape index: {}]
  %s10 = inlined_call_operand.vmem [shape: f32[1,512], index: 10, kind: input, shape index: {}]
  %s11 = inlined_call_operand.hbm [shape: bf16[512,128], index: 11, kind: input, shape index: {}]
  %s12 = inlined_call_operand.vmem [shape: f32[1,128], index: 12, kind: input, shape index: {}]
  %s13 = inlined_call_operand.hbm [shape: f32[2,8,128], index: 13, kind: output, shape index: {}]
  %s14 = sld [smem:[#allocation0]]
  $region129: #{tpu_custom_call.1} parent=0
    _
  %s16 = ssub.s32 1, %s14
  %s17 = scalar_select 0, %s16, %s14
  $region1: #{tpu_custom_call.1} parent=0
    #allocation5 [shape = 'u8[8192]{0}', space=vmem, size = 0x2000, scoped, tag = 'input window, operand 0']
    #allocation6 [shape = 's32[2]{0}', space=sflag, size = 0x8, scoped, tag = 'scoped memory for tpu_custom_call.1']
    #allocation7 [shape = 's32[2]{0}', space=sflag, size = 0x8, scoped, tag = 'scoped memory for tpu_custom_call.1']
    #allocation8 [shape = 'u8[512]{0}', space=vmem, size = 0x400, scoped, tag = 'input window, operand 1, single buffered']
    #allocation9 [shape = 's32[1]{0}', space=sflag, size = 0x4, scoped, tag = 'scoped memory for tpu_custom_call.1']
    #allocation10 [shape = 'u8[512]{0}', space=vmem, size = 0x400, scoped, tag = 'input window, operand 2, single buffered']
    #allocation11 [shape = 'u8[98304]{0}', space=vmem, size = 0x18000, scoped, tag = 'input window, operand 3, single buffered']
    #allocation12 [shape = 's32[1]{0}', space=sflag, size = 0x4, scoped, tag = 'scoped memory for tpu_custom_call.1']
    #allocation13 [shape = 'u8[32768]{0}', space=vmem, size = 0x8000, scoped, tag = 'input window, operand 5, single buffered']
    #allocation14 [shape = 'u8[131072]{0}', space=vmem, size = 0x20000, scoped, tag = 'input window, operand 9, single buffered']
    #allocation15 [shape = 's32[1]{0}', space=sflag, size = 0x4, scoped, tag = 'scoped memory for tpu_custom_call.1']
    #allocation16 [shape = 'u8[131072]{0}', space=vmem, size = 0x20000, scoped, tag = 'input window, operand 11, single buffered']
    #allocation17 [shape = 'u8[8192]{0}', space=vmem, size = 0x2000, scoped, tag = 'output window, operand 0']
    %18 = vsyncpa [#allocation6], 0
    %s19 = scalar_lea.sflag [#allocation6], 1
    %20 = vsyncpa %s19, 0
    %21 = vsyncpa [#allocation9], 0
    %22 = vsyncpa [#allocation12], 0
    %23 = vsyncpa [#allocation15], 0
    %24 = vsyncpa [#allocation7], 0
    %s25 = scalar_lea.sflag [#allocation7], 1
    %26 = vsyncpa %s25, 0
    loop: start=0, step=1, limit=4
    $region2: #{tpu_custom_call.1} parent=1 // loop_pre_header
      _
    $region3: #{tpu_custom_call.1} parent=1 // loop_header
      %s28 = sphi 0, %s32
      %p29 = scmp.ge.s32.totalorder %s28, 4
      %s35 = sphi 0, %s47
      %s36 = sphi 0, %s43
      %s37 = sphi 0, %s35
      %s38 = sphi 0, %s36
      %s39 = sphi 0, %s37
      %s40 = sphi 0, %s38
      %s50 = sphi 0, %s52
      %s53 = sphi 0, %s50
      %s54 = sphi 0, %s53
      %s70 = sphi 0, %s54
      %s74 = sphi 0, %s74
      %s76 = sphi 0, %s74
      %s77 = sphi 0, %s76
      %s91 = sphi 0, %s77
      %s95 = sphi 0, %s95
      %s97 = sphi 0, %s95
      %s98 = sphi 0, %s97
      %s112 = sphi 0, %s98
      %s118 = sphi 0, %s120
      %s121 = sphi 0, %s118
      %s122 = sphi 0, %s121
      %s138 = sphi 0, %s122
      %s144 = sphi 0, %s146
      %s147 = sphi 0, %s144
      %s148 = sphi 0, %s147
      %s164 = sphi 0, %s148
      %s170 = sphi 0, %s172
      %s173 = sphi 0, %s170
      %s174 = sphi 0, %s173
      %s190 = sphi 0, %s174
      %s194 = sphi 0, %s194
      %s196 = sphi 0, %s194
      %s197 = sphi 0, %s196
      %s211 = sphi 0, %s197
      %s215 = sphi 0, %s215
      %s217 = sphi 0, %s215
      %s218 = sphi 0, %s217
      %s232 = sphi 0, %s218
      %s236 = sphi 0, %s236
      %s238 = sphi 0, %s236
      %s239 = sphi 0, %s238
      %s253 = sphi 0, %s239
      %s257 = sphi 0, %s257
      %s259 = sphi 0, %s257
      %s260 = sphi 0, %s259
      %s274 = sphi 0, %s260
      %s278 = sphi 0, %s278
      %s280 = sphi 0, %s278
      %s281 = sphi 0, %s280
      %s295 = sphi 0, %s281
      %s299 = sphi 0, %s299
      %s301 = sphi 0, %s299
      %s302 = sphi 0, %s301
      %s316 = sphi 0, %s302
      %s320 = sphi 0, %s320
      %s322 = sphi 0, %s320
      %s323 = sphi 0, %s322
      %s337 = sphi 0, %s323
      %s343 = sphi 0, %s345
      %s346 = sphi 0, %s343
      %s347 = sphi 0, %s346
      %s363 = sphi 0, %s347
    $region4: #{tpu_custom_call.1} parent=1 // loop_header_branch
      %31 = sbr.rel (%p29) target = $region8
    $region5: #{tpu_custom_call.1} parent=1 // loop_body
      %s33 = ssub.s32 %s28, 1
      %s34 = ssub.s32 %s28, 2
      %s41 = sadd.s32 1, %s36
      %p42 = scmp.ge.s32.totalorder %s41, 1
      %s43 = scalar_select %p42, 0, %s41
      %s44 = sadd.s32 1, %s35
      %s45 = scalar_select %p42, %s44, %s35
      %p46 = scmp.ge.s32.totalorder %s45, 2
      %s47 = scalar_select %p46, 0, %s45
      %s48 = ssub.s32 %s35, %s47
      %p49 = scmp.eq.s32.totalorder %s48, 0
      %s51 = sadd.s32 %s50, 1
      %s52 = scalar_select %p49, %s50, %s51
      %p55 = pneg %p49
      %p56 = scmp.eq.s32.totalorder %s28, 1
      %p57 = por %p55, %p56
      %p58 = scmp.ne.s32.totalorder %s50, %s53
      %p59 = scmp.eq.s32.totalorder %s28, 0
      %p60 = por %p58, %p59
      %p61 = scmp.ne.s32.totalorder %s50, %s53
      %p62 = scmp.eq.s32.totalorder %s33, 1
      %p63 = por %p61, %p62
      %p64 = scmp.ne.s32.totalorder %s53, %s54
      %p65 = scmp.eq.s32.totalorder %s33, 0
      %p66 = por %p64, %p65
      %p67 = scmp.ne.s32.totalorder %s53, %s54
      %p68 = scmp.eq.s32.totalorder %s34, 1
      %p69 = por %p67, %p68
      %p71 = scmp.ne.s32.totalorder %s54, %s70
      %p72 = scmp.eq.s32.totalorder %s34, 0
      %p73 = por %p71, %p72
      %s75 = sadd.s32 %s74, 1
      %p78 = scmp.eq.s32.totalorder %s28, 1
      %p79 = scmp.ne.s32.totalorder %s74, %s76
      %p80 = scmp.eq.s32.totalorder %s28, 0
      %p81 = por %p79, %p80
      %p82 = scmp.ne.s32.totalorder %s74, %s76
      %p83 = scmp.eq.s32.totalorder %s33, 1
      %p84 = por %p82, %p83
      %p85 = scmp.ne.s32.totalorder %s76, %s77
      %p86 = scmp.eq.s32.totalorder %s33, 0
      %p87 = por %p85, %p86
      %p88 = scmp.ne.s32.totalorder %s76, %s77
      %p89 = scmp.eq.s32.totalorder %s34, 1
      %p90 = por %p88, %p89
      %p92 = scmp.ne.s32.totalorder %s77, %s91
      %p93 = scmp.eq.s32.totalorder %s34, 0
      %p94 = por %p92, %p93
      %s96 = sadd.s32 %s95, 1
      %p99 = scmp.eq.s32.totalorder %s28, 1
      %p100 = scmp.ne.s32.totalorder %s95, %s97
      %p101 = scmp.eq.s32.totalorder %s28, 0
      %p102 = por %p100, %p101
      %p103 = scmp.ne.s32.totalorder %s95, %s97
      %p104 = scmp.eq.s32.totalorder %s33, 1
      %p105 = por %p103, %p104
      %p106 = scmp.ne.s32.totalorder %s97, %s98
      %p107 = scmp.eq.s32.totalorder %s33, 0
      %p108 = por %p106, %p107
      %p109 = scmp.ne.s32.totalorder %s97, %s98
      %p110 = scmp.eq.s32.totalorder %s34, 1
      %p111 = por %p109, %p110
      %p113 = scmp.ne.s32.totalorder %s98, %s112
      %p114 = scmp.eq.s32.totalorder %s34, 0
      %p115 = por %p113, %p114
      %s116 = ssub.s32 %s36, %s43
      %p117 = scmp.eq.s32.totalorder %s116, 0
      %s119 = sadd.s32 %s118, 1
      %s120 = scalar_select %p117, %s118, %s119
      %p123 = pneg %p117
      %p124 = scmp.eq.s32.totalorder %s28, 1
      %p125 = por %p123, %p124
      %p126 = scmp.ne.s32.totalorder %s118, %s121
      %p127 = scmp.eq.s32.totalorder %s28, 0
      %p128 = por %p126, %p127
      %p129 = scmp.ne.s32.totalorder %s118, %s121
      %p130 = scmp.eq.s32.totalorder %s33, 1
      %p131 = por %p129, %p130
      %p132 = scmp.ne.s32.totalorder %s121, %s122
      %p133 = scmp.eq.s32.totalorder %s33, 0
      %p134 = por %p132, %p133
      %p135 = scmp.ne.s32.totalorder %s121, %s122
      %p136 = scmp.eq.s32.totalorder %s34, 1
      %p137 = por %p135, %p136
      %p139 = scmp.ne.s32.totalorder %s122, %s138
      %p140 = scmp.eq.s32.totalorder %s34, 0
      %p141 = por %p139, %p140
      %s142 = ssub.s32 %s36, %s43
      %p143 = scmp.eq.s32.totalorder %s142, 0
      %s145 = sadd.s32 %s144, 1
      %s146 = scalar_select %p143, %s144, %s145
      %p149 = pneg %p143
      %p150 = scmp.eq.s32.totalorder %s28, 1
      %p151 = por %p149, %p150
      %p152 = scmp.ne.s32.totalorder %s144, %s147
      %p153 = scmp.eq.s32.totalorder %s28, 0
      %p154 = por %p152, %p153
      %p155 = scmp.ne.s32.totalorder %s144, %s147
      %p156 = scmp.eq.s32.totalorder %s33, 1
      %p157 = por %p155, %p156
      %p158 = scmp.ne.s32.totalorder %s147, %s148
      %p159 = scmp.eq.s32.totalorder %s33, 0
      %p160 = por %p158, %p159
      %p161 = scmp.ne.s32.totalorder %s147, %s148
      %p162 = scmp.eq.s32.totalorder %s34, 1
      %p163 = por %p161, %p162
      %p165 = scmp.ne.s32.totalorder %s148, %s164
      %p166 = scmp.eq.s32.totalorder %s34, 0
      %p167 = por %p165, %p166
      %s168 = ssub.s32 %s36, %s43
      %p169 = scmp.eq.s32.totalorder %s168, 0
      %s171 = sadd.s32 %s170, 1
      %s172 = scalar_select %p169, %s170, %s171
      %p175 = pneg %p169
      %p176 = scmp.eq.s32.totalorder %s28, 1
      %p177 = por %p175, %p176
      %p178 = scmp.ne.s32.totalorder %s170, %s173
      %p179 = scmp.eq.s32.totalorder %s28, 0
      %p180 = por %p178, %p179
      %p181 = scmp.ne.s32.totalorder %s170, %s173
      %p182 = scmp.eq.s32.totalorder %s33, 1
      %p183 = por %p181, %p182
      %p184 = scmp.ne.s32.totalorder %s173, %s174
      %p185 = scmp.eq.s32.totalorder %s33, 0
      %p186 = por %p184, %p185
      %p187 = scmp.ne.s32.totalorder %s173, %s174
      %p188 = scmp.eq.s32.totalorder %s34, 1
      %p189 = por %p187, %p188
      %p191 = scmp.ne.s32.totalorder %s174, %s190
      %p192 = scmp.eq.s32.totalorder %s34, 0
      %p193 = por %p191, %p192
      %s195 = sadd.s32 %s194, 1
      %p198 = scmp.eq.s32.totalorder %s28, 1
      %p199 = scmp.ne.s32.totalorder %s194, %s196
      %p200 = scmp.eq.s32.totalorder %s28, 0
      %p201 = por %p199, %p200
      %p202 = scmp.ne.s32.totalorder %s194, %s196
      %p203 = scmp.eq.s32.totalorder %s33, 1
      %p204 = por %p202, %p203
      %p205 = scmp.ne.s32.totalorder %s196, %s197
      %p206 = scmp.eq.s32.totalorder %s33, 0
      %p207 = por %p205, %p206
      %p208 = scmp.ne.s32.totalorder %s196, %s197
      %p209 = scmp.eq.s32.totalorder %s34, 1
      %p210 = por %p208, %p209
      %p212 = scmp.ne.s32.totalorder %s197, %s211
      %p213 = scmp.eq.s32.totalorder %s34, 0
      %p214 = por %p212, %p213
      %s216 = sadd.s32 %s215, 1
      %p219 = scmp.eq.s32.totalorder %s28, 1
      %p220 = scmp.ne.s32.totalorder %s215, %s217
      %p221 = scmp.eq.s32.totalorder %s28, 0
      %p222 = por %p220, %p221
      %p223 = scmp.ne.s32.totalorder %s215, %s217
      %p224 = scmp.eq.s32.totalorder %s33, 1
      %p225 = por %p223, %p224
      %p226 = scmp.ne.s32.totalorder %s217, %s218
      %p227 = scmp.eq.s32.totalorder %s33, 0
      %p228 = por %p226, %p227
      %p229 = scmp.ne.s32.totalorder %s217, %s218
      %p230 = scmp.eq.s32.totalorder %s34, 1
      %p231 = por %p229, %p230
      %p233 = scmp.ne.s32.totalorder %s218, %s232
      %p234 = scmp.eq.s32.totalorder %s34, 0
      %p235 = por %p233, %p234
      %s237 = sadd.s32 %s236, 1
      %p240 = scmp.eq.s32.totalorder %s28, 1
      %p241 = scmp.ne.s32.totalorder %s236, %s238
      %p242 = scmp.eq.s32.totalorder %s28, 0
      %p243 = por %p241, %p242
      %p244 = scmp.ne.s32.totalorder %s236, %s238
      %p245 = scmp.eq.s32.totalorder %s33, 1
      %p246 = por %p244, %p245
      %p247 = scmp.ne.s32.totalorder %s238, %s239
      %p248 = scmp.eq.s32.totalorder %s33, 0
      %p249 = por %p247, %p248
      %p250 = scmp.ne.s32.totalorder %s238, %s239
      %p251 = scmp.eq.s32.totalorder %s34, 1
      %p252 = por %p250, %p251
      %p254 = scmp.ne.s32.totalorder %s239, %s253
      %p255 = scmp.eq.s32.totalorder %s34, 0
      %p256 = por %p254, %p255
      %s258 = sadd.s32 %s257, 1
      %p261 = scmp.eq.s32.totalorder %s28, 1
      %p262 = scmp.ne.s32.totalorder %s257, %s259
      %p263 = scmp.eq.s32.totalorder %s28, 0
      %p264 = por %p262, %p263
      %p265 = scmp.ne.s32.totalorder %s257, %s259
      %p266 = scmp.eq.s32.totalorder %s33, 1
      %p267 = por %p265, %p266
      %p268 = scmp.ne.s32.totalorder %s259, %s260
      %p269 = scmp.eq.s32.totalorder %s33, 0
      %p270 = por %p268, %p269
      %p271 = scmp.ne.s32.totalorder %s259, %s260
      %p272 = scmp.eq.s32.totalorder %s34, 1
      %p273 = por %p271, %p272
      %p275 = scmp.ne.s32.totalorder %s260, %s274
      %p276 = scmp.eq.s32.totalorder %s34, 0
      %p277 = por %p275, %p276
      %s279 = sadd.s32 %s278, 1
      %p282 = scmp.eq.s32.totalorder %s28, 1
      %p283 = scmp.ne.s32.totalorder %s278, %s280
      %p284 = scmp.eq.s32.totalorder %s28, 0
      %p285 = por %p283, %p284
      %p286 = scmp.ne.s32.totalorder %s278, %s280
      %p287 = scmp.eq.s32.totalorder %s33, 1
      %p288 = por %p286, %p287
      %p289 = scmp.ne.s32.totalorder %s280, %s281
      %p290 = scmp.eq.s32.totalorder %s33, 0
      %p291 = por %p289, %p290
      %p292 = scmp.ne.s32.totalorder %s280, %s281
      %p293 = scmp.eq.s32.totalorder %s34, 1
      %p294 = por %p292, %p293
      %p296 = scmp.ne.s32.totalorder %s281, %s295
      %p297 = scmp.eq.s32.totalorder %s34, 0
      %p298 = por %p296, %p297
      %s300 = sadd.s32 %s299, 1
      %p303 = scmp.eq.s32.totalorder %s28, 1
      %p304 = scmp.ne.s32.totalorder %s299, %s301
      %p305 = scmp.eq.s32.totalorder %s28, 0
      %p306 = por %p304, %p305
      %p307 = scmp.ne.s32.totalorder %s299, %s301
      %p308 = scmp.eq.s32.totalorder %s33, 1
      %p309 = por %p307, %p308
      %p310 = scmp.ne.s32.totalorder %s301, %s302
      %p311 = scmp.eq.s32.totalorder %s33, 0
      %p312 = por %p310, %p311
      %p313 = scmp.ne.s32.totalorder %s301, %s302
      %p314 = scmp.eq.s32.totalorder %s34, 1
      %p315 = por %p313, %p314
      %p317 = scmp.ne.s32.totalorder %s302, %s316
      %p318 = scmp.eq.s32.totalorder %s34, 0
      %p319 = por %p317, %p318
      %s321 = sadd.s32 %s320, 1
      %p324 = scmp.eq.s32.totalorder %s28, 1
      %p325 = scmp.ne.s32.totalorder %s320, %s322
      %p326 = scmp.eq.s32.totalorder %s28, 0
      %p327 = por %p325, %p326
      %p328 = scmp.ne.s32.totalorder %s320, %s322
      %p329 = scmp.eq.s32.totalorder %s33, 1
      %p330 = por %p328, %p329
      %p331 = scmp.ne.s32.totalorder %s322, %s323
      %p332 = scmp.eq.s32.totalorder %s33, 0
      %p333 = por %p331, %p332
      %p334 = scmp.ne.s32.totalorder %s322, %s323
      %p335 = scmp.eq.s32.totalorder %s34, 1
      %p336 = por %p334, %p335
      %p338 = scmp.ne.s32.totalorder %s323, %s337
      %p339 = scmp.eq.s32.totalorder %s34, 0
      %p340 = por %p338, %p339
      %s341 = ssub.s32 %s35, %s47
      %p342 = scmp.eq.s32.totalorder %s341, 0
      %s344 = sadd.s32 %s343, 1
      %s345 = scalar_select %p342, %s343, %s344
      %p348 = pneg %p342
      %p349 = scmp.eq.s32.totalorder %s28, 1
      %p350 = por %p348, %p349
      %p351 = scmp.ne.s32.totalorder %s343, %s346
      %p352 = scmp.eq.s32.totalorder %s28, 0
      %p353 = por %p351, %p352
      %p354 = scmp.ne.s32.totalorder %s343, %s346
      %p355 = scmp.eq.s32.totalorder %s33, 1
      %p356 = por %p354, %p355
      %p357 = scmp.ne.s32.totalorder %s346, %s347
      %p358 = scmp.eq.s32.totalorder %s33, 0
      %p359 = por %p357, %p358
      %p360 = scmp.ne.s32.totalorder %s346, %s347
      %p361 = scmp.eq.s32.totalorder %s34, 1
      %p362 = por %p360, %p361
      %p364 = scmp.ne.s32.totalorder %s347, %s363
      %p365 = scmp.eq.s32.totalorder %s34, 0
      %p366 = por %p364, %p365
      %p367 = scmp.le.s32.totalorder 1, %s28
      %p368 = scmp.lt.s32.totalorder %s28, 3
      %p369 = pnand %p367, %p368
      %p370 = pneg %p369
      // Predicated region
      $region9: #{tpu_custom_call.1} parent=5 // pred_check
        _
      $region10: #{tpu_custom_call.1} parent=5 // pred_check_branch
        %372 = sbr.rel (%p369) target = $region12
      $region11: #{tpu_custom_call.1} parent=5 // pred_region
        %s373 = ssub.s32 %s28, 1
        // Predicated region
        $region13: #{tpu_custom_call.1} parent=11 // pred_check
          %p374 = pneg %p87
        $region14: #{tpu_custom_call.1} parent=11 // pred_check_branch
          %376 = sbr.rel (%p374) target = $region16
        $region15: #{tpu_custom_call.1} parent=11 // pred_region
          %s378 = ssub.s32 16, 16
          %379 = vsyncadd [#allocation9], %s378
          %s381 = sshll.u32 [#allocation8], 4
          %s382 = int_to_ptr.vmem [resolvable:$true] %s381
          %384 = dma.hbm_to_vmem [thread:$0]  %s1, 16, %s382, [#allocation9]
        $region16: #{tpu_custom_call.1} parent=11 // pred_fallthru
          _
        // Predicated region
        $region17: #{tpu_custom_call.1} parent=11 // pred_check
          %p385 = pneg %p108
        $region18: #{tpu_custom_call.1} parent=11 // pred_check_branch
          %387 = sbr.rel (%p385) target = $region20
        $region19: #{tpu_custom_call.1} parent=11 // pred_region
          %s389 = ssub.s32 16, 16
          %390 = vsyncadd [#allocation9], %s389
          %s392 = sshll.u32 [#allocation10], 4
          %s393 = int_to_ptr.vmem [resolvable:$true] %s392
          %395 = dma.hbm_to_vmem [thread:$0]  %s2, 16, %s393, [#allocation9]
        $region20: #{tpu_custom_call.1} parent=11 // pred_fallthru
          _
        // Predicated region
        $region21: #{tpu_custom_call.1} parent=11 // pred_check
          %p396 = pneg %p134
        $region22: #{tpu_custom_call.1} parent=11 // pred_check_branch
          %398 = sbr.rel (%p396) target = $region24
        $region23: #{tpu_custom_call.1} parent=11 // pred_region
          %s400 = ssub.s32 3072, 3072
          %401 = vsyncadd [#allocation12], %s400
          %s402 = smul.addr %s38, 48
          %s403 = smul.addr %s402, 64
          %s404 = scalar_lea.hbm %s3, %s403
          %s405 = sshll.u32 [#allocation11], 4
          %s406 = int_to_ptr.vmem [resolvable:$true] %s405
          %411 = dma.hbm_to_vmem [thread:$0]  %s404, 3072, %s406, [#allocation12], 192, 192, 12
        $region24: #{tpu_custom_call.1} parent=11 // pred_fallthru
          _
        // Predicated region
        $region25: #{tpu_custom_call.1} parent=11 // pred_check
          %p412 = pneg %p160
        $region26: #{tpu_custom_call.1} parent=11 // pred_check_branch
          %414 = sbr.rel (%p412) target = $region28
        $region27: #{tpu_custom_call.1} parent=11 // pred_region
          %p415 = scmp.lt.s32.totalorder %s38, 0
          %s416 = scalar_select %p415, %s38, 0
          %s417 = smul.addr %s416, 3
          %s418 = scalar_lea.vmem %s4, %s417
        $region28: #{tpu_custom_call.1} parent=11 // pred_fallthru
          _
        // Predicated region
        $region29: #{tpu_custom_call.1} parent=11 // pred_check
          %p419 = pneg %p186
        $region30: #{tpu_custom_call.1} parent=11 // pred_check_branch
          %421 = sbr.rel (%p419) target = $region32
        $region31: #{tpu_custom_call.1} parent=11 // pred_region
          %s423 = ssub.s32 1024, 1024
          %424 = vsyncadd [#allocation12], %s423
          %s425 = smul.addr %s38, 16
          %s426 = smul.addr %s425, 64
          %s427 = scalar_lea.hbm %s5, %s426
          %s428 = sshll.u32 [#allocation13], 4
          %s429 = int_to_ptr.vmem [resolvable:$true] %s428
          %434 = dma.hbm_to_vmem [thread:$0]  %s427, 1024, %s429, [#allocation12], 64, 64, 4
        $region32: #{tpu_custom_call.1} parent=11 // pred_fallthru
          _
        // Predicated region
        $region33: #{tpu_custom_call.1} parent=11 // pred_check
          %p435 = pneg %p207
        $region34: #{tpu_custom_call.1} parent=11 // pred_check_branch
          %437 = sbr.rel (%p435) target = $region36
        $region35: #{tpu_custom_call.1} parent=11 // pred_region
          _
        $region36: #{tpu_custom_call.1} parent=11 // pred_fallthru
          _
        // Predicated region
        $region37: #{tpu_custom_call.1} parent=11 // pred_check
          %p438 = pneg %p228
        $region38: #{tpu_custom_call.1} parent=11 // pred_check_branch
          %440 = sbr.rel (%p438) target = $region40
        $region39: #{tpu_custom_call.1} parent=11 // pred_region
          _
        $region40: #{tpu_custom_call.1} parent=11 // pred_fallthru
          _
        // Predicated region
        $region41: #{tpu_custom_call.1} parent=11 // pred_check
          %p441 = pneg %p249
        $region42: #{tpu_custom_call.1} parent=11 // pred_check_branch
          %443 = sbr.rel (%p441) target = $region44
        $region43: #{tpu_custom_call.1} parent=11 // pred_region
          _
        $region44: #{tpu_custom_call.1} parent=11 // pred_fallthru
          _
        // Predicated region
        $region45: #{tpu_custom_call.1} parent=11 // pred_check
          %p444 = pneg %p270
        $region46: #{tpu_custom_call.1} parent=11 // pred_check_branch
          %446 = sbr.rel (%p444) target = $region48
        $region47: #{tpu_custom_call.1} parent=11 // pred_region
          %s448 = ssub.s32 4096, 4096
          %449 = vsyncadd [#allocation15], %s448
          %s450 = sshll.u32 [#allocation14], 4
          %s451 = int_to_ptr.vmem [resolvable:$true] %s450
          %456 = dma.hbm_to_vmem [thread:$0]  %s9, 4096, %s451, [#allocation15], 256, 256, 16
        $region48: #{tpu_custom_call.1} parent=11 // pred_fallthru
          _
        // Predicated region
        $region49: #{tpu_custom_call.1} parent=11 // pred_check
          %p457 = pneg %p291
        $region50: #{tpu_custom_call.1} parent=11 // pred_check_branch
          %459 = sbr.rel (%p457) target = $region52
        $region51: #{tpu_custom_call.1} parent=11 // pred_region
          _
        $region52: #{tpu_custom_call.1} parent=11 // pred_fallthru
          _
        // Predicated region
        $region53: #{tpu_custom_call.1} parent=11 // pred_check
          %p460 = pneg %p312
        $region54: #{tpu_custom_call.1} parent=11 // pred_check_branch
          %462 = sbr.rel (%p460) target = $region56
        $region55: #{tpu_custom_call.1} parent=11 // pred_region
          %s464 = ssub.s32 4096, 4096
          %465 = vsyncadd [#allocation15], %s464
          %s466 = sshll.u32 [#allocation16], 4
          %s467 = int_to_ptr.vmem [resolvable:$true] %s466
          %472 = dma.hbm_to_vmem [thread:$0]  %s11, 4096, %s467, [#allocation15], 64, 64, 4
        $region56: #{tpu_custom_call.1} parent=11 // pred_fallthru
          _
        // Predicated region
        $region57: #{tpu_custom_call.1} parent=11 // pred_check
          %p473 = pneg %p333
        $region58: #{tpu_custom_call.1} parent=11 // pred_check_branch
          %475 = sbr.rel (%p473) target = $region60
        $region59: #{tpu_custom_call.1} parent=11 // pred_region
          _
        $region60: #{tpu_custom_call.1} parent=11 // pred_fallthru
          _
      $region12: #{tpu_custom_call.1} parent=5 // pred_fallthru
        _
      %p476 = scmp.lt.s32.totalorder %s28, 2
      // Predicated region
      $region61: #{tpu_custom_call.1} parent=5 // pred_check
        %p477 = pneg %p476
      $region62: #{tpu_custom_call.1} parent=5 // pred_check_branch
        %479 = sbr.rel (%p477) target = $region64
      $region63: #{tpu_custom_call.1} parent=5 // pred_region
        // Predicated region
        $region65: #{tpu_custom_call.1} parent=63 // pred_check
          %p480 = pneg %p60
        $region66: #{tpu_custom_call.1} parent=63 // pred_check_branch
          %482 = sbr.rel (%p480) target = $region68
        $region67: #{tpu_custom_call.1} parent=63 // pred_region
          %s483 = sand.u32 %s50, 1
          %s484 = scalar_lea.sflag [#allocation6], %s483
          %s485 = sand.u32 %s50, 1
          %s486 = smul.addr %s485, 8
          %s487 = scalar_lea.vmem [#allocation5], %s486
          %s489 = ssub.s32 128, 128
          %490 = vsyncadd %s484, %s489
          %s491 = smul.addr %s35, 128
          %s492 = scalar_lea.hbm %s0, %s491
          %s494 = sshll.u32 %s487, 4
          %s495 = int_to_ptr.vmem [resolvable:$true] %s494
          %497 = dma.hbm_to_vmem [thread:$0]  %s492, 128, %s495, %s484
        $region68: #{tpu_custom_call.1} parent=63 // pred_fallthru
          _
      $region64: #{tpu_custom_call.1} parent=5 // pred_fallthru
        _
      %p498 = scmp.le.s32.totalorder 1, %s28
      %p499 = scmp.lt.s32.totalorder %s28, 3
      %p500 = pnand %p498, %p499
      %p501 = pneg %p500
      // Predicated region
      $region69: #{tpu_custom_call.1} parent=5 // pred_check
        _
      $region70: #{tpu_custom_call.1} parent=5 // pred_check_branch
        %503 = sbr.rel (%p500) target = $region72
      $region71: #{tpu_custom_call.1} parent=5 // pred_region
        %s504 = ssub.s32 %s28, 1
        %s505 = sand.u32 %s53, 1
        %s506 = scalar_lea.sflag [#allocation6], %s505
        %s507 = sand.u32 %s53, 1
        %s508 = smul.addr %s507, 8
        %s509 = scalar_lea.vmem [#allocation5], %s508
        // Predicated region
        $region73: #{tpu_custom_call.1} parent=71 // pred_check
          %p510 = pneg %p66
        $region74: #{tpu_custom_call.1} parent=71 // pred_check_branch
          %512 = sbr.rel (%p510) target = $region76
        $region75: #{tpu_custom_call.1} parent=71 // pred_region
          %513 = dma.done %s506, 128
        $region76: #{tpu_custom_call.1} parent=71 // pred_fallthru
          _
        // Predicated region
        $region77: #{tpu_custom_call.1} parent=71 // pred_check
          %p514 = pneg %p87
        $region78: #{tpu_custom_call.1} parent=71 // pred_check_branch
          %516 = sbr.rel (%p514) target = $region80
        $region79: #{tpu_custom_call.1} parent=71 // pred_region
          %517 = dma.done [#allocation9], 16
        $region80: #{tpu_custom_call.1} parent=71 // pred_fallthru
          _
        // Predicated region
        $region81: #{tpu_custom_call.1} parent=71 // pred_check
          %p518 = pneg %p108
        $region82: #{tpu_custom_call.1} parent=71 // pred_check_branch
          %520 = sbr.rel (%p518) target = $region84
        $region83: #{tpu_custom_call.1} parent=71 // pred_region
          %521 = dma.done [#allocation9], 16
        $region84: #{tpu_custom_call.1} parent=71 // pred_fallthru
          _
        // Predicated region
        $region85: #{tpu_custom_call.1} parent=71 // pred_check
          %p522 = pneg %p134
        $region86: #{tpu_custom_call.1} parent=71 // pred_check_branch
          %524 = sbr.rel (%p522) target = $region88
        $region87: #{tpu_custom_call.1} parent=71 // pred_region
          %525 = dma.done [#allocation12], 3072
        $region88: #{tpu_custom_call.1} parent=71 // pred_fallthru
          _
        // Predicated region
        $region89: #{tpu_custom_call.1} parent=71 // pred_check
          %p526 = pneg %p186
        $region90: #{tpu_custom_call.1} parent=71 // pred_check_branch
          %528 = sbr.rel (%p526) target = $region92
        $region91: #{tpu_custom_call.1} parent=71 // pred_region
          %529 = dma.done [#allocation12], 1024
        $region92: #{tpu_custom_call.1} parent=71 // pred_fallthru
          _
        // Predicated region
        $region93: #{tpu_custom_call.1} parent=71 // pred_check
          %p530 = pneg %p270
        $region94: #{tpu_custom_call.1} parent=71 // pred_check_branch
          %532 = sbr.rel (%p530) target = $region96
        $region95: #{tpu_custom_call.1} parent=71 // pred_region
          %533 = dma.done [#allocation15], 4096
        $region96: #{tpu_custom_call.1} parent=71 // pred_fallthru
          _
        // Predicated region
        $region97: #{tpu_custom_call.1} parent=71 // pred_check
          %p534 = pneg %p312
        $region98: #{tpu_custom_call.1} parent=71 // pred_check_branch
          %536 = sbr.rel (%p534) target = $region100
        $region99: #{tpu_custom_call.1} parent=71 // pred_region
          %537 = dma.done [#allocation15], 4096
        $region100: #{tpu_custom_call.1} parent=71 // pred_fallthru
          _
        %s538 = sand.u32 %s53, 1
        %s539 = scalar_lea.sflag [#allocation6], %s538
        %s540 = sand.u32 %s53, 1
        %s541 = smul.addr %s540, 8
        %s542 = scalar_lea.vmem [#allocation5], %s541
        %p543 = pneg %p66
        %p544 = pneg %p63
        %p545 = pneg %p87
        %p546 = pneg %p84
        %p547 = pneg %p108
        %p548 = pneg %p105
        %p549 = pneg %p134
        %p550 = pneg %p131
        %p551 = scmp.lt.s32.totalorder %s38, 0
        %s552 = scalar_select %p551, %s38, 0
        %s553 = smul.addr %s552, 3
        %s554 = scalar_lea.vmem %s4, %s553
        %p555 = pneg %p160
        %p556 = pneg %p157
        %p557 = pneg %p186
        %p558 = pneg %p183
        %p559 = pneg %p207
        %p560 = pneg %p204
        %p561 = pneg %p228
        %p562 = pneg %p225
        %p563 = pneg %p249
        %p564 = pneg %p246
        %p565 = pneg %p270
        %p566 = pneg %p267
        %p567 = pneg %p291
        %p568 = pneg %p288
        %p569 = pneg %p312
        %p570 = pneg %p309
        %p571 = pneg %p333
        %p572 = pneg %p330
        %p573 = pneg %p359
        %p574 = pneg %p356
        %s575 = sand.u32 %s346, 1
        %s576 = scalar_lea.sflag [#allocation7], %s575
        %s577 = sand.u32 %s346, 1
        %s578 = smul.addr %s577, 8
        %s579 = scalar_lea.vmem [#allocation17], %s578
        %p580 = scmp.lt.s32.totalorder %s38, 0
        %s581 = scalar_select %p580, %s38, 0
        %s582 = smul.addr %s581, 3
        %s583 = scalar_lea.vmem %s4, %s582
        %p585 = scmp.eq.s32.totalorder %s38, 0
        // Predicated region
        $region101: #{tpu_custom_call.1} parent=71 // pred_check
          %p586 = pneg %p585
        $region102: #{tpu_custom_call.1} parent=71 // pred_check_branch
          %588 = sbr.rel (%p586) target = $region104
        $region103: #{tpu_custom_call.1} parent=71 // pred_region
          %v589 = vld [vmem:[%s509] sm:$0xff]
          %v590 = vld [vmem:[#allocation8] sm:$0x1]
          %v591 = vld [vmem:[#allocation10] sm:$0x1]
          %592 = vadd.xlane.f32.xlu0 %v589
          %v593 = vpop.xlane.xlu0 %592
          %v594 = vrcp.pop 128.0
          %v595 = vmul.f32 %v593, %v594
          %v596 = vsub.f32 %v589, %v595
          %v597 = vmul.f32 %v596, %v596
          %598 = vadd.xlane.f32.xlu0 %v597
          %v599 = vpop.xlane.xlu0 %598
          %v600 = vmul.f32 %v599, %v594
          %v601 = vadd.f32 %v600, 1e-05
          %v602 = vrsqrt.pop %v601
          %v603 = vmul.f32 %v596, %v602
          %v605 = vlaneseq
          %v606 = vshrl.u32 %v605, 7
          %v607 = vsub.s32 0, %v606
          %v608 = vrot.slane %v590, %v607
          %v610 = vmul.f32 %v603, %v608
          %v612 = vlaneseq
          %v613 = vshrl.u32 %v612, 7
          %v614 = vsub.s32 0, %v613
          %v615 = vrot.slane %v591, %v614
          %v617 = vadd.f32 %v610, %v615
          %v618 = vpack.c.bf16 %v617, %v617
          %619 = vst [vmem:[#allocation2] sm:$0xf] %v618
        $region104: #{tpu_custom_call.1} parent=71 // pred_fallthru
          _
        %v620 = vld [vmem:[#allocation2] sm:$0xf]
        %v621 = vld [vmem:[#allocation11] sm:$0xff]
        %v622 = vld [vmem:[#allocation11 + $0x8] sm:$0xf]
        %v623 = vld [vmem:[#allocation11 + $0xc] sm:$0xff]
        %v624 = vld [vmem:[#allocation11 + $0x14] sm:$0xf]
        %v625 = vld [vmem:[#allocation11 + $0x18] sm:$0xff]
        %v626 = vld [vmem:[#allocation11 + $0x20] sm:$0xf]
        %v627 = vld [vmem:[#allocation11 + $0x24] sm:$0xff]
        %v628 = vld [vmem:[#allocation11 + $0x2c] sm:$0xf]
        %v629 = vld [vmem:[#allocation11 + $0x30] sm:$0xff]
        %v630 = vld [vmem:[#allocation11 + $0x38] sm:$0xf]
        %v631 = vld [vmem:[#allocation11 + $0x3c] sm:$0xff]
        %v632 = vld [vmem:[#allocation11 + $0x44] sm:$0xf]
        %v633 = vld [vmem:[#allocation11 + $0x48] sm:$0xff]
        %v634 = vld [vmem:[#allocation11 + $0x50] sm:$0xf]
        %v635 = vld [vmem:[#allocation11 + $0x54] sm:$0xff]
        %v636 = vld [vmem:[#allocation11 + $0x5c] sm:$0xf]
        %v637 = vld [vmem:[#allocation11 + $0x60] sm:$0xff]
        %v638 = vld [vmem:[#allocation11 + $0x68] sm:$0xf]
        %v639 = vld [vmem:[#allocation11 + $0x6c] sm:$0xff]
        %v640 = vld [vmem:[#allocation11 + $0x74] sm:$0xf]
        %v641 = vld [vmem:[#allocation11 + $0x78] sm:$0xff]
        %v642 = vld [vmem:[#allocation11 + $0x80] sm:$0xf]
        %v643 = vld [vmem:[#allocation11 + $0x84] sm:$0xff]
        %v644 = vld [vmem:[#allocation11 + $0x8c] sm:$0xf]
        %v645 = vld [vmem:[#allocation11 + $0x90] sm:$0xff]
        %v646 = vld [vmem:[#allocation11 + $0x98] sm:$0xf]
        %v647 = vld [vmem:[#allocation11 + $0x9c] sm:$0xff]
        %v648 = vld [vmem:[#allocation11 + $0xa4] sm:$0xf]
        %v649 = vld [vmem:[#allocation11 + $0xa8] sm:$0xff]
        %v650 = vld [vmem:[#allocation11 + $0xb0] sm:$0xf]
        %v651 = vld [vmem:[#allocation11 + $0xb4] sm:$0xff]
        %v652 = vld [vmem:[#allocation11 + $0xbc] sm:$0xf]
        %v653 = vld [vmem:[%s583] sm:$0x7]
        %v655 = vlaneseq
        %v656 = vshrl.u32 %v655, 7
        %v657 = vsub.s32 0, %v656
        %v658 = vrot.slane %v653, %v657
        %v659 = vlaneseq
        %v660 = vshrl.u32 %v659, 7
        %v661 = vsub.s32 1, %v660
        %v662 = vrot.slane %v653, %v661
        %v663 = vlaneseq
        %v664 = vshrl.u32 %v663, 7
        %v665 = vsub.s32 2, %v664
        %v666 = vrot.slane %v653, %v665
        %v702 = vunpack.c.l.b16 %v621
        %v703 = vunpack.c.h.b16 %v621
        %v704 = vunpack.c.l.b16 %v622
        %v705 = vunpack.c.l.b16 %v623
        %v706 = vunpack.c.h.b16 %v623
        %v707 = vunpack.c.l.b16 %v624
        %v708 = vunpack.c.l.b16 %v625
        %v709 = vunpack.c.h.b16 %v625
        %v710 = vunpack.c.l.b16 %v626
        %v711 = vunpack.c.l.b16 %v627
        %v712 = vunpack.c.h.b16 %v627
        %v713 = vunpack.c.l.b16 %v628
        %v714 = vunpack.c.l.b16 %v629
        %v715 = vunpack.c.h.b16 %v629
        %v716 = vunpack.c.l.b16 %v630
        %v717 = vunpack.c.l.b16 %v631
        %v718 = vunpack.c.h.b16 %v631
        %v719 = vunpack.c.l.b16 %v632
        %v720 = vunpack.c.l.b16 %v633
        %v721 = vunpack.c.h.b16 %v633
        %v722 = vunpack.c.l.b16 %v634
        %v723 = vunpack.c.l.b16 %v635
        %v724 = vunpack.c.h.b16 %v635
        %v725 = vunpack.c.l.b16 %v636
        %v726 = vunpack.c.l.b16 %v637
        %v727 = vunpack.c.h.b16 %v637
        %v728 = vunpack.c.l.b16 %v638
        %v729 = vunpack.c.l.b16 %v639
        %v730 = vunpack.c.h.b16 %v639
        %v731 = vunpack.c.l.b16 %v640
        %v732 = vunpack.c.l.b16 %v641
        %v733 = vunpack.c.h.b16 %v641
        %v734 = vunpack.c.l.b16 %v642
        %v735 = vunpack.c.l.b16 %v643
        %v736 = vunpack.c.h.b16 %v643
        %v737 = vunpack.c.l.b16 %v644
        %v738 = vunpack.c.l.b16 %v645
        %v739 = vunpack.c.h.b16 %v645
        %v740 = vunpack.c.l.b16 %v646
        %v741 = vunpack.c.l.b16 %v647
        %v742 = vunpack.c.h.b16 %v647
        %v743 = vunpack.c.l.b16 %v648
        %v744 = vunpack.c.l.b16 %v649
        %v745 = vunpack.c.h.b16 %v649
        %v746 = vunpack.c.l.b16 %v650
        %v747 = vunpack.c.l.b16 %v651
        %v748 = vunpack.c.h.b16 %v651
        %v749 = vunpack.c.l.b16 %v652
        %v750 = vpack.c.b16 %v705, %v702
        %v751 = vpack.c.b16 %v706, %v703
        %v752 = vpack.c.b16 %v707, %v704
        %v753 = vpack.c.b16 %v711, %v708
        %v754 = vpack.c.b16 %v712, %v709
        %v755 = vpack.c.b16 %v713, %v710
        %v756 = vpack.c.b16 %v717, %v714
        %v757 = vpack.c.b16 %v718, %v715
        %v758 = vpack.c.b16 %v719, %v716
        %v759 = vpack.c.b16 %v723, %v720
        %v760 = vpack.c.b16 %v724, %v721
        %v761 = vpack.c.b16 %v725, %v722
        %v762 = vpack.c.b16 %v729, %v726
        %v763 = vpack.c.b16 %v730, %v727
        %v764 = vpack.c.b16 %v731, %v728
        %v765 = vpack.c.b16 %v735, %v732
        %v766 = vpack.c.b16 %v736, %v733
        %v767 = vpack.c.b16 %v737, %v734
        %v768 = vpack.c.b16 %v741, %v738
        %v769 = vpack.c.b16 %v742, %v739
        %v770 = vpack.c.b16 %v743, %v740
        %v771 = vpack.c.b16 %v747, %v744
        %v772 = vpack.c.b16 %v748, %v745
        %v773 = vpack.c.b16 %v749, %v746
        %798 = vmatprep.subr.bf16.mxu0 %v751
        %799 = vmatpush1.bf16.msra.mxu0 %v750
        %800 = vmatprep.subr.bf16.mxu0 %v754
        %801 = vmatpush1.bf16.msra.mxu0 %v753
        %802 = vmatprep.subr.bf16.mxu0 %v757
        %803 = vmatpush1.bf16.msra.mxu0 %v756
        %804 = vmatprep.subr.bf16.mxu0 %v760
        %805 = vmatpush1.bf16.msra.mxu0 %v759
        %806 = vmatprep.subr.bf16.mxu0 %v763
        %807 = vmatpush1.bf16.msra.mxu0 %v762
        %808 = vmatprep.subr.bf16.mxu0 %v766
        %809 = vmatpush1.bf16.msra.mxu0 %v765
        %810 = vmatprep.subr.bf16.mxu0 %v769
        %811 = vmatpush1.bf16.msra.mxu0 %v768
        %812 = vmatprep.subr.bf16.mxu0 %v772
        %813 = vmatpush1.bf16.msra.mxu0 %v771
        %814 = vmatprep.subr.bf16.mxu0 0
        %815 = vmatpush1.bf16.msra.mxu0 0
        %816 = vmatprep.subr.bf16.mxu0 0
        %817 = vmatpush1.bf16.msra.mxu0 0
        %818 = vmatprep.subr.bf16.mxu0 0
        %819 = vmatpush1.bf16.msra.mxu0 0
        %820 = vmatprep.subr.bf16.mxu0 0
        %821 = vmatpush1.bf16.msra.mxu0 0
        %822 = vmatprep.subr.bf16.mxu0 0
        %823 = vmatpush1.bf16.msra.mxu0 0
        %824 = vmatprep.subr.bf16.mxu0 0
        %825 = vmatpush1.bf16.msra.mxu0 0
        %826 = vmatprep.subr.bf16.mxu0 0
        %827 = vmatpush1.bf16.msra.mxu0 0
        %828 = vmatprep.subr.bf16.mxu0 0
        %829 = vmatpush1.bf16.msra.mxu0 0
        %830 = vmatprep.mubr.bf16.mxu0 0
        %831 = vmatmul.mubr.bf16.gmra.mrb[0].mxu0 %v620
        %v832 = vpop.f32.mrb[0].mxu0
        %v833 = vadd.f32 %v658, %v832
        %v834 = vpop.f32.mrb[0].mxu0
        %v835 = vadd.f32 %v662, %v834
        %v836 = vpop.f32.mrb[0].mxu0
        %v837 = vpop.f32.mrb[0].mxu0
        %838 = vdwg.mxu0
        %839 = vmatprep.subr.bf16.mxu0 0
        %840 = vmatpush1.bf16.msra.mxu0 %v752
        %841 = vmatprep.subr.bf16.mxu0 0
        %842 = vmatpush1.bf16.msra.mxu0 %v755
        %843 = vmatprep.subr.bf16.mxu0 0
        %844 = vmatpush1.bf16.msra.mxu0 %v758
        %845 = vmatprep.subr.bf16.mxu0 0
        %846 = vmatpush1.bf16.msra.mxu0 %v761
        %847 = vmatprep.subr.bf16.mxu0 0
        %848 = vmatpush1.bf16.msra.mxu0 %v764
        %849 = vmatprep.subr.bf16.mxu0 0
        %850 = vmatpush1.bf16.msra.mxu0 %v767
        %851 = vmatprep.subr.bf16.mxu0 0
        %852 = vmatpush1.bf16.msra.mxu0 %v770
        %853 = vmatprep.subr.bf16.mxu0 0
        %854 = vmatpush1.bf16.msra.mxu0 %v773
        %855 = vmatprep.subr.bf16.mxu0 0
        %856 = vmatpush1.bf16.msra.mxu0 0
        %857 = vmatprep.subr.bf16.mxu0 0
        %858 = vmatpush1.bf16.msra.mxu0 0
        %859 = vmatprep.subr.bf16.mxu0 0
        %860 = vmatpush1.bf16.msra.mxu0 0
        %861 = vmatprep.subr.bf16.mxu0 0
        %862 = vmatpush1.bf16.msra.mxu0 0
        %863 = vmatprep.subr.bf16.mxu0 0
        %864 = vmatpush1.bf16.msra.mxu0 0
        %865 = vmatprep.subr.bf16.mxu0 0
        %866 = vmatpush1.bf16.msra.mxu0 0
        %867 = vmatprep.subr.bf16.mxu0 0
        %868 = vmatpush1.bf16.msra.mxu0 0
        %869 = vmatprep.subr.bf16.mxu0 0
        %870 = vmatpush1.bf16.msra.mxu0 0
        %871 = vmatprep.mubr.bf16.mxu0 0
        %872 = vmatmul.mubr.bf16.gmra.mrb[0].mxu0 %v620
        %v873 = vpop.f32.mrb[0].mxu0
        %v874 = vadd.f32 %v666, %v873
        %v875 = vpop.f32.mrb[0].mxu0
        %v876 = vpop.f32.mrb[0].mxu0
        %v877 = vpop.f32.mrb[0].mxu0
        %878 = vdwg.mxu0
        %v879 = vmul.f32 %v833, 0.17677669
        %v880 = vlaneseq
        %v881 = vshrl.u32 %v880, 7
        %v882 = vlaneseq
        %v883 = vand.u32 %v882, 127
        %vm884 = vcmp.le.s32.totalorder %v883, %v881
        %v885 = vpack.c.bf16 %v879, %v879
        %v886 = vpack.c.bf16 %v835, %v835
        %v887 = vpack.c.bf16 %v874, %v874
        %vm888 = vcmask 261120
        %v890 = vsel %vm888, %v885, 0
        %v893 = vsel %vm888, %v886, 0
        %895 = vmatprep.subr.bf16.mxu0 0
        %896 = vmatpush1.bf16.xpose.msra.mxu0 %v893
        %897 = vmatprep.subr.bf16.mxu0 0
        %898 = vmatpush1.bf16.xpose.msra.mxu0 0
        %899 = vmatprep.subr.bf16.mxu0 0
        %900 = vmatpush1.bf16.xpose.msra.mxu0 0
        %901 = vmatprep.subr.bf16.mxu0 0
        %902 = vmatpush1.bf16.xpose.msra.mxu0 0
        %903 = vmatprep.subr.bf16.mxu0 0
        %904 = vmatpush1.bf16.xpose.msra.mxu0 0
        %905 = vmatprep.subr.bf16.mxu0 0
        %906 = vmatpush1.bf16.xpose.msra.mxu0 0
        %907 = vmatprep.subr.bf16.mxu0 0
        %908 = vmatpush1.bf16.xpose.msra.mxu0 0
        %909 = vmatprep.subr.bf16.mxu0 0
        %910 = vmatpush1.bf16.xpose.msra.mxu0 0
        %911 = vmatprep.subr.bf16.mxu0 0
        %912 = vmatpush1.bf16.xpose.msra.mxu0 0
        %913 = vmatprep.subr.bf16.mxu0 0
        %914 = vmatpush1.bf16.xpose.msra.mxu0 0
        %915 = vmatprep.subr.bf16.mxu0 0
        %916 = vmatpush1.bf16.xpose.msra.mxu0 0
        %917 = vmatprep.subr.bf16.mxu0 0
        %918 = vmatpush1.bf16.xpose.msra.mxu0 0
        %919 = vmatprep.subr.bf16.mxu0 0
        %920 = vmatpush1.bf16.xpose.msra.mxu0 0
        %921 = vmatprep.subr.bf16.mxu0 0
        %922 = vmatpush1.bf16.xpose.msra.mxu0 0
        %923 = vmatprep.subr.bf16.mxu0 0
        %924 = vmatpush1.bf16.xpose.msra.mxu0 0
        %925 = vmatprep.subr.bf16.mxu0 0
        %926 = vmatpush1.bf16.xpose.msra.mxu0 0
        %927 = vmatprep.mubr.bf16.mxu0 0
        %928 = vmatmul.mubr.bf16.gmra.mrb[0].mxu0 %v890
        %v929 = vpop.f32.mrb[0].mxu0
        %v930 = vadd.f32 0.0, %v929
        %v931 = vpop.f32.mrb[0].mxu0
        %v932 = vpop.f32.mrb[0].mxu0
        %v933 = vpop.f32.mrb[0].mxu0
        %934 = vdwg.mxu0
        %v935 = vsel %vm884, %v930, -1e+30
        %vm936 = vcmask 64512
        %v937 = vsel %vm936, %v935, -inf
        %938 = vmax.xlane.f32.xlu0 %v937
        %v939 = vpop.xlane.xlu0 %938
        %v940 = vsub.f32 %v935, %v939
        %v941 = vmul.f32 %v940, 1.442695
        %v942 = vpow.pop %v941
        %v943 = vsel %vm936, %v942, 0.0
        %944 = vadd.xlane.f32.xlu0 %v943
        %v945 = vpop.xlane.xlu0 %944
        %v946 = vrcp.pop %v945
        %v947 = vmul.f32 %v942, %v946
        %v948 = vpack.c.bf16 %v947, %v947
        %v950 = vsel %vm936, %v948, 0
        %vm952 = vcmask 1043456
        %v954 = vsel %vm952, %v887, 0
        %956 = vmatprep.subr.bf16.mxu0 0
        %957 = vmatpush1.bf16.msra.mxu0 %v954
        %958 = vmatprep.subr.bf16.mxu0 0
        %959 = vmatpush1.bf16.msra.mxu0 0
        %960 = vmatprep.subr.bf16.mxu0 0
        %961 = vmatpush1.bf16.msra.mxu0 0
        %962 = vmatprep.subr.bf16.mxu0 0
        %963 = vmatpush1.bf16.msra.mxu0 0
        %964 = vmatprep.subr.bf16.mxu0 0
        %965 = vmatpush1.bf16.msra.mxu0 0
        %966 = vmatprep.subr.bf16.mxu0 0
        %967 = vmatpush1.bf16.msra.mxu0 0
        %968 = vmatprep.subr.bf16.mxu0 0
        %969 = vmatpush1.bf16.msra.mxu0 0
        %970 = vmatprep.subr.bf16.mxu0 0
        %971 = vmatpush1.bf16.msra.mxu0 0
        %972 = vmatprep.subr.bf16.mxu0 0
        %973 = vmatpush1.bf16.msra.mxu0 0
        %974 = vmatprep.subr.bf16.mxu0 0
        %975 = vmatpush1.bf16.msra.mxu0 0
        %976 = vmatprep.subr.bf16.mxu0 0
        %977 = vmatpush1.bf16.msra.mxu0 0
        %978 = vmatprep.subr.bf16.mxu0 0
        %979 = vmatpush1.bf16.msra.mxu0 0
        %980 = vmatprep.subr.bf16.mxu0 0
        %981 = vmatpush1.bf16.msra.mxu0 0
        %982 = vmatprep.subr.bf16.mxu0 0
        %983 = vmatpush1.bf16.msra.mxu0 0
        %984 = vmatprep.subr.bf16.mxu0 0
        %985 = vmatpush1.bf16.msra.mxu0 0
        %986 = vmatprep.subr.bf16.mxu0 0
        %987 = vmatpush1.bf16.msra.mxu0 0
        %988 = vmatprep.mubr.bf16.mxu0 0
        %989 = vmatmul.mubr.bf16.gmra.mrb[0].mxu0 %v950
        %v990 = vpop.f32.mrb[0].mxu0
        %v991 = vadd.f32 0.0, %v990
        %v992 = vpop.f32.mrb[0].mxu0
        %v993 = vpop.f32.mrb[0].mxu0
        %v994 = vpop.f32.mrb[0].mxu0
        %995 = vdwg.mxu0
        %v996 = vpack.c.bf16 %v991, %v991
        %vm997 = vcmask 257024
        %998 = vst.msk [vmem:[#allocation4] sm:$0xf] %vm997, %v996
        %1000 = vrot.lane.b32.xlu0 %v885, 96
        %v1001 = vpop.permute.xlu0 %1000
        %1003 = vrot.lane.b32.xlu0 %v886, 96
        %v1004 = vpop.permute.xlu0 %1003
        %v1006 = vsel %vm888, %v1001, 0
        %v1009 = vsel %vm888, %v1004, 0
        %1011 = vmatprep.subr.bf16.mxu0 0
        %1012 = vmatpush1.bf16.xpose.msra.mxu0 %v1009
        %1013 = vmatprep.subr.bf16.mxu0 0
        %1014 = vmatpush1.bf16.xpose.msra.mxu0 0
        %1015 = vmatprep.subr.bf16.mxu0 0
        %1016 = vmatpush1.bf16.xpose.msra.mxu0 0
        %1017 = vmatprep.subr.bf16.mxu0 0
        %1018 = vmatpush1.bf16.xpose.msra.mxu0 0
        %1019 = vmatprep.subr.bf16.mxu0 0
        %1020 = vmatpush1.bf16.xpose.msra.mxu0 0
        %1021 = vmatprep.subr.bf16.mxu0 0
        %1022 = vmatpush1.bf16.xpose.msra.mxu0 0
        %1023 = vmatprep.subr.bf16.mxu0 0
        %1024 = vmatpush1.bf16.xpose.msra.mxu0 0
        %1025 = vmatprep.subr.bf16.mxu0 0
        %1026 = vmatpush1.bf16.xpose.msra.mxu0 0
        %1027 = vmatprep.subr.bf16.mxu0 0
        %1028 = vmatpush1.bf16.xpose.msra.mxu0 0
        %1029 = vmatprep.subr.bf16.mxu0 0
        %1030 = vmatpush1.bf16.xpose.msra.mxu0 0
        %1031 = vmatprep.subr.bf16.mxu0 0
        %1032 = vmatpush1.bf16.xpose.msra.mxu0 0
        %1033 = vmatprep.subr.bf16.mxu0 0
        %1034 = vmatpush1.bf16.xpose.msra.mxu0 0
        %1035 = vmatprep.subr.bf16.mxu0 0
        %1036 = vmatpush1.bf16.xpose.msra.mxu0 0
        %1037 = vmatprep.subr.bf16.mxu0 0
        %1038 = vmatpush1.bf16.xpose.msra.mxu0 0
        %1039 = vmatprep.subr.bf16.mxu0 0
        %1040 = vmatpush1.bf16.xpose.msra.mxu0 0
        %1041 = vmatprep.subr.bf16.mxu0 0
        %1042 = vmatpush1.bf16.xpose.msra.mxu0 0
        %1043 = vmatprep.mubr.bf16.mxu0 0
        %1044 = vmatmul.mubr.bf16.gmra.mrb[0].mxu0 %v1006
        %v1045 = vpop.f32.mrb[0].mxu0
        %v1046 = vadd.f32 0.0, %v1045
        %v1047 = vpop.f32.mrb[0].mxu0
        %v1048 = vpop.f32.mrb[0].mxu0
        %v1049 = vpop.f32.mrb[0].mxu0
        %1050 = vdwg.mxu0
        %v1051 = vsel %vm884, %v1046, -1e+30
        %v1052 = vsel %vm936, %v1051, -inf
        %1053 = vmax.xlane.f32.xlu0 %v1052
        %v1054 = vpop.xlane.xlu0 %1053
        %v1055 = vsub.f32 %v1051, %v1054
        %v1056 = vmul.f32 %v1055, 1.442695
        %v1057 = vpow.pop %v1056
        %v1058 = vsel %vm936, %v1057, 0.0
        %1059 = vadd.xlane.f32.xlu0 %v1058
        %v1060 = vpop.xlane.xlu0 %1059
        %v1061 = vrcp.pop %v1060
        %v1062 = vmul.f32 %v1057, %v1061
        %v1063 = vpack.c.bf16 %v1062, %v1062
        %1065 = vrot.lane.b32.xlu0 %v887, 96
        %v1066 = vpop.permute.xlu0 %1065
        %v1068 = vsel %vm936, %v1063, 0
        %v1071 = vsel %vm952, %v1066, 0
        %1073 = vmatprep.subr.bf16.mxu0 0
        %1074 = vmatpush1.bf16.msra.mxu0 %v1071
        %1075 = vmatprep.subr.bf16.mxu0 0
        %1076 = vmatpush1.bf16.msra.mxu0 0
        %1077 = vmatprep.subr.bf16.mxu0 0
        %1078 = vmatpush1.bf16.msra.mxu0 0
        %1079 = vmatprep.subr.bf16.mxu0 0
        %1080 = vmatpush1.bf16.msra.mxu0 0
        %1081 = vmatprep.subr.bf16.mxu0 0
        %1082 = vmatpush1.bf16.msra.mxu0 0
        %1083 = vmatprep.subr.bf16.mxu0 0
        %1084 = vmatpush1.bf16.msra.mxu0 0
        %1085 = vmatprep.subr.bf16.mxu0 0
        %1086 = vmatpush1.bf16.msra.mxu0 0
        %1087 = vmatprep.subr.bf16.mxu0 0
        %1088 = vmatpush1.bf16.msra.mxu0 0
        %1089 = vmatprep.subr.bf16.mxu0 0
        %1090 = vmatpush1.bf16.msra.mxu0 0
        %1091 = vmatprep.subr.bf16.mxu0 0
        %1092 = vmatpush1.bf16.msra.mxu0 0
        %1093 = vmatprep.subr.bf16.mxu0 0
        %1094 = vmatpush1.bf16.msra.mxu0 0
        %1095 = vmatprep.subr.bf16.mxu0 0
        %1096 = vmatpush1.bf16.msra.mxu0 0
        %1097 = vmatprep.subr.bf16.mxu0 0
        %1098 = vmatpush1.bf16.msra.mxu0 0
        %1099 = vmatprep.subr.bf16.mxu0 0
        %1100 = vmatpush1.bf16.msra.mxu0 0
        %1101 = vmatprep.subr.bf16.mxu0 0
        %1102 = vmatpush1.bf16.msra.mxu0 0
        %1103 = vmatprep.subr.bf16.mxu0 0
        %1104 = vmatpush1.bf16.msra.mxu0 0
        %1105 = vmatprep.mubr.bf16.mxu0 0
        %1106 = vmatmul.mubr.bf16.gmra.mrb[0].mxu0 %v1068
        %v1107 = vpop.f32.mrb[0].mxu0
        %v1108 = vadd.f32 0.0, %v1107
        %v1109 = vpop.f32.mrb[0].mxu0
        %v1110 = vpop.f32.mrb[0].mxu0
        %v1111 = vpop.f32.mrb[0].mxu0
        %1112 = vdwg.mxu0
        %v1113 = vpack.c.bf16 %v1108, %v1108
        %v1115 = vunpack.c.l.b16 %v1113
        %v1116 = vpack.c.b16 %v1115, %v1115
        %1117 = vrot.lane.b32.xlu0 %v1116, 32
        %v1118 = vpop.permute.xlu0 %1117
        %vm1120 = vcmask 519424
        %1121 = vst.msk [vmem:[#allocation4] sm:$0xf] %vm1120, %v1118
        %1122 = vrot.lane.b32.xlu0 %v885, 64
        %v1123 = vpop.permute.xlu0 %1122
        %1124 = vrot.lane.b32.xlu0 %v886, 64
        %v1125 = vpop.permute.xlu0 %1124
        %v1127 = vsel %vm888, %v1123, 0
        %v1130 = vsel %vm888, %v1125, 0
        %1132 = vmatprep.subr.bf16.mxu0 0
        %1133 = vmatpush1.bf16.xpose.msra.mxu0 %v1130
        %1134 = vmatprep.subr.bf16.mxu0 0
        %1135 = vmatpush1.bf16.xpose.msra.mxu0 0
        %1136 = vmatprep.subr.bf16.mxu0 0
        %1137 = vmatpush1.bf16.xpose.msra.mxu0 0
        %1138 = vmatprep.subr.bf16.mxu0 0
        %1139 = vmatpush1.bf16.xpose.msra.mxu0 0
        %1140 = vmatprep.subr.bf16.mxu0 0
        %1141 = vmatpush1.bf16.xpose.msra.mxu0 0
        %1142 = vmatprep.subr.bf16.mxu0 0
        %1143 = vmatpush1.bf16.xpose.msra.mxu0 0
        %1144 = vmatprep.subr.bf16.mxu0 0
        %1145 = vmatpush1.bf16.xpose.msra.mxu0 0
        %1146 = vmatprep.subr.bf16.mxu0 0
        %1147 = vmatpush1.bf16.xpose.msra.mxu0 0
        %1148 = vmatprep.subr.bf16.mxu0 0
        %1149 = vmatpush1.bf16.xpose.msra.mxu0 0
        %1150 = vmatprep.subr.bf16.mxu0 0
        %1151 = vmatpush1.bf16.xpose.msra.mxu0 0
        %1152 = vmatprep.subr.bf16.mxu0 0
        %1153 = vmatpush1.bf16.xpose.msra.mxu0 0
        %1154 = vmatprep.subr.bf16.mxu0 0
        %1155 = vmatpush1.bf16.xpose.msra.mxu0 0
        %1156 = vmatprep.subr.bf16.mxu0 0
        %1157 = vmatpush1.bf16.xpose.msra.mxu0 0
        %1158 = vmatprep.subr.bf16.mxu0 0
        %1159 = vmatpush1.bf16.xpose.msra.mxu0 0
        %1160 = vmatprep.subr.bf16.mxu0 0
        %1161 = vmatpush1.bf16.xpose.msra.mxu0 0
        %1162 = vmatprep.subr.bf16.mxu0 0
        %1163 = vmatpush1.bf16.xpose.msra.mxu0 0
        %1164 = vmatprep.mubr.bf16.mxu0 0
        %1165 = vmatmul.mubr.bf16.gmra.mrb[0].mxu0 %v1127
        %v1166 = vpop.f32.mrb[0].mxu0
        %v1167 = vadd.f32 0.0, %v1166
        %v1168 = vpop.f32.mrb[0].mxu0
        %v1169 = vpop.f32.mrb[0].mxu0
        %v1170 = vpop.f32.mrb[0].mxu0
        %1171 = vdwg.mxu0
        %v1172 = vsel %vm884, %v1167, -1e+30
        %v1173 = vsel %vm936, %v1172, -inf
        %1174 = vmax.xlane.f32.xlu0 %v1173
        %v1175 = vpop.xlane.xlu0 %1174
        %v1176 = vsub.f32 %v1172, %v1175
        %v1177 = vmul.f32 %v1176, 1.442695
        %v1178 = vpow.pop %v1177
        %v1179 = vsel %vm936, %v1178, 0.0
        %1180 = vadd.xlane.f32.xlu0 %v1179
        %v1181 = vpop.xlane.xlu0 %1180
        %v1182 = vrcp.pop %v1181
        %v1183 = vmul.f32 %v1178, %v1182
        %v1184 = vpack.c.bf16 %v1183, %v1183
        %1185 = vrot.lane.b32.xlu0 %v887, 64
        %v1186 = vpop.permute.xlu0 %1185
        %v1188 = vsel %vm936, %v1184, 0
        %v1191 = vsel %vm952, %v1186, 0
        %1193 = vmatprep.subr.bf16.mxu0 0
        %1194 = vmatpush1.bf16.msra.mxu0 %v1191
        %1195 = vmatprep.subr.bf16.mxu0 0
        %1196 = vmatpush1.bf16.msra.mxu0 0
        %1197 = vmatprep.subr.bf16.mxu0 0
        %1198 = vmatpush1.bf16.msra.mxu0 0
        %1199 = vmatprep.subr.bf16.mxu0 0
        %1200 = vmatpush1.bf16.msra.mxu0 0
        %1201 = vmatprep.subr.bf16.mxu0 0
        %1202 = vmatpush1.bf16.msra.mxu0 0
        %1203 = vmatprep.subr.bf16.mxu0 0
        %1204 = vmatpush1.bf16.msra.mxu0 0
        %1205 = vmatprep.subr.bf16.mxu0 0
        %1206 = vmatpush1.bf16.msra.mxu0 0
        %1207 = vmatprep.subr.bf16.mxu0 0
        %1208 = vmatpush1.bf16.msra.mxu0 0
        %1209 = vmatprep.subr.bf16.mxu0 0
        %1210 = vmatpush1.bf16.msra.mxu0 0
        %1211 = vmatprep.subr.bf16.mxu0 0
        %1212 = vmatpush1.bf16.msra.mxu0 0
        %1213 = vmatprep.subr.bf16.mxu0 0
        %1214 = vmatpush1.bf16.msra.mxu0 0
        %1215 = vmatprep.subr.bf16.mxu0 0
        %1216 = vmatpush1.bf16.msra.mxu0 0
        %1217 = vmatprep.subr.bf16.mxu0 0
        %1218 = vmatpush1.bf16.msra.mxu0 0
        %1219 = vmatprep.subr.bf16.mxu0 0
        %1220 = vmatpush1.bf16.msra.mxu0 0
        %1221 = vmatprep.subr.bf16.mxu0 0
        %1222 = vmatpush1.bf16.msra.mxu0 0
        %1223 = vmatprep.subr.bf16.mxu0 0
        %1224 = vmatpush1.bf16.msra.mxu0 0
        %1225 = vmatprep.mubr.bf16.mxu0 0
        %1226 = vmatmul.mubr.bf16.gmra.mrb[0].mxu0 %v1188
        %v1227 = vpop.f32.mrb[0].mxu0
        %v1228 = vadd.f32 0.0, %v1227
        %v1229 = vpop.f32.mrb[0].mxu0
        %v1230 = vpop.f32.mrb[0].mxu0
        %v1231 = vpop.f32.mrb[0].mxu0
        %1232 = vdwg.mxu0
        %v1233 = vpack.c.bf16 %v1228, %v1228
        %v1235 = vunpack.c.l.b16 %v1233
        %v1236 = vpack.c.b16 %v1235, %v1235
        %1237 = vrot.lane.b32.xlu0 %v1236, 64
        %v1238 = vpop.permute.xlu0 %1237
        %vm1240 = vcmask 781824
        %1241 = vst.msk [vmem:[#allocation4] sm:$0xf] %vm1240, %v1238
        %1242 = vrot.lane.b32.xlu0 %v885, 32
        %v1243 = vpop.permute.xlu0 %1242
        %1244 = vrot.lane.b32.xlu0 %v886, 32
        %v1245 = vpop.permute.xlu0 %1244
        %v1247 = vsel %vm888, %v1243, 0
        %v1250 = vsel %vm888, %v1245, 0
        %1252 = vmatprep.subr.bf16.mxu0 0
        %1253 = vmatpush1.bf16.xpose.msra.mxu0 %v1250
        %1254 = vmatprep.subr.bf16.mxu0 0
        %1255 = vmatpush1.bf16.xpose.msra.mxu0 0
        %1256 = vmatprep.subr.bf16.mxu0 0
        %1257 = vmatpush1.bf16.xpose.msra.mxu0 0
        %1258 = vmatprep.subr.bf16.mxu0 0
        %1259 = vmatpush1.bf16.xpose.msra.mxu0 0
        %1260 = vmatprep.subr.bf16.mxu0 0
        %1261 = vmatpush1.bf16.xpose.msra.mxu0 0
        %1262 = vmatprep.subr.bf16.mxu0 0
        %1263 = vmatpush1.bf16.xpose.msra.mxu0 0
        %1264 = vmatprep.subr.bf16.mxu0 0
        %1265 = vmatpush1.bf16.xpose.msra.mxu0 0
        %1266 = vmatprep.subr.bf16.mxu0 0
        %1267 = vmatpush1.bf16.xpose.msra.mxu0 0
        %1268 = vmatprep.subr.bf16.mxu0 0
        %1269 = vmatpush1.bf16.xpose.msra.mxu0 0
        %1270 = vmatprep.subr.bf16.mxu0 0
        %1271 = vmatpush1.bf16.xpose.msra.mxu0 0
        %1272 = vmatprep.subr.bf16.mxu0 0
        %1273 = vmatpush1.bf16.xpose.msra.mxu0 0
        %1274 = vmatprep.subr.bf16.mxu0 0
        %1275 = vmatpush1.bf16.xpose.msra.mxu0 0
        %1276 = vmatprep.subr.bf16.mxu0 0
        %1277 = vmatpush1.bf16.xpose.msra.mxu0 0
        %1278 = vmatprep.subr.bf16.mxu0 0
        %1279 = vmatpush1.bf16.xpose.msra.mxu0 0
        %1280 = vmatprep.subr.bf16.mxu0 0
        %1281 = vmatpush1.bf16.xpose.msra.mxu0 0
        %1282 = vmatprep.subr.bf16.mxu0 0
        %1283 = vmatpush1.bf16.xpose.msra.mxu0 0
        %1284 = vmatprep.mubr.bf16.mxu0 0
        %1285 = vmatmul.mubr.bf16.gmra.mrb[0].mxu0 %v1247
        %v1286 = vpop.f32.mrb[0].mxu0
        %v1287 = vadd.f32 0.0, %v1286
        %v1288 = vpop.f32.mrb[0].mxu0
        %v1289 = vpop.f32.mrb[0].mxu0
        %v1290 = vpop.f32.mrb[0].mxu0
        %1291 = vdwg.mxu0
        %v1292 = vsel %vm884, %v1287, -1e+30
        %v1293 = vsel %vm936, %v1292, -inf
        %1294 = vmax.xlane.f32.xlu0 %v1293
        %v1295 = vpop.xlane.xlu0 %1294
        %v1296 = vsub.f32 %v1292, %v1295
        %v1297 = vmul.f32 %v1296, 1.442695
        %v1298 = vpow.pop %v1297
        %v1299 = vsel %vm936, %v1298, 0.0
        %1300 = vadd.xlane.f32.xlu0 %v1299
        %v1301 = vpop.xlane.xlu0 %1300
        %v1302 = vrcp.pop %v1301
        %v1303 = vmul.f32 %v1298, %v1302
        %v1304 = vpack.c.bf16 %v1303, %v1303
        %1305 = vrot.lane.b32.xlu0 %v887, 32
        %v1306 = vpop.permute.xlu0 %1305
        %v1308 = vsel %vm936, %v1304, 0
        %v1311 = vsel %vm952, %v1306, 0
        %1313 = vmatprep.subr.bf16.mxu0 0
        %1314 = vmatpush1.bf16.msra.mxu0 %v1311
        %1315 = vmatprep.subr.bf16.mxu0 0
        %1316 = vmatpush1.bf16.msra.mxu0 0
        %1317 = vmatprep.subr.bf16.mxu0 0
        %1318 = vmatpush1.bf16.msra.mxu0 0
        %1319 = vmatprep.subr.bf16.mxu0 0
        %1320 = vmatpush1.bf16.msra.mxu0 0
        %1321 = vmatprep.subr.bf16.mxu0 0
        %1322 = vmatpush1.bf16.msra.mxu0 0
        %1323 = vmatprep.subr.bf16.mxu0 0
        %1324 = vmatpush1.bf16.msra.mxu0 0
        %1325 = vmatprep.subr.bf16.mxu0 0
        %1326 = vmatpush1.bf16.msra.mxu0 0
        %1327 = vmatprep.subr.bf16.mxu0 0
        %1328 = vmatpush1.bf16.msra.mxu0 0
        %1329 = vmatprep.subr.bf16.mxu0 0
        %1330 = vmatpush1.bf16.msra.mxu0 0
        %1331 = vmatprep.subr.bf16.mxu0 0
        %1332 = vmatpush1.bf16.msra.mxu0 0
        %1333 = vmatprep.subr.bf16.mxu0 0
        %1334 = vmatpush1.bf16.msra.mxu0 0
        %1335 = vmatprep.subr.bf16.mxu0 0
        %1336 = vmatpush1.bf16.msra.mxu0 0
        %1337 = vmatprep.subr.bf16.mxu0 0
        %1338 = vmatpush1.bf16.msra.mxu0 0
        %1339 = vmatprep.subr.bf16.mxu0 0
        %1340 = vmatpush1.bf16.msra.mxu0 0
        %1341 = vmatprep.subr.bf16.mxu0 0
        %1342 = vmatpush1.bf16.msra.mxu0 0
        %1343 = vmatprep.subr.bf16.mxu0 0
        %1344 = vmatpush1.bf16.msra.mxu0 0
        %1345 = vmatprep.mubr.bf16.mxu0 0
        %1346 = vmatmul.mubr.bf16.gmra.mrb[0].mxu0 %v1308
        %v1347 = vpop.f32.mrb[0].mxu0
        %v1348 = vadd.f32 0.0, %v1347
        %v1349 = vpop.f32.mrb[0].mxu0
        %v1350 = vpop.f32.mrb[0].mxu0
        %v1351 = vpop.f32.mrb[0].mxu0
        %1352 = vdwg.mxu0
        %v1353 = vpack.c.bf16 %v1348, %v1348
        %v1355 = vunpack.c.l.b16 %v1353
        %v1356 = vpack.c.b16 %v1355, %v1355
        %1357 = vrot.lane.b32.xlu0 %v1356, 96
        %v1358 = vpop.permute.xlu0 %1357
        %vm1360 = vcmask 1044224
        %1361 = vst.msk [vmem:[#allocation4] sm:$0xf] %vm1360, %v1358
        %v1362 = vld [vmem:[#allocation4] sm:$0xf]
        %v1363 = vld [vmem:[#allocation13] sm:$0xf]
        %v1364 = vld [vmem:[#allocation13 + $0x4] sm:$0xf]
        %v1365 = vld [vmem:[#allocation13 + $0x8] sm:$0xf]
        %v1366 = vld [vmem:[#allocation13 + $0xc] sm:$0xf]
        %v1367 = vld [vmem:[#allocation13 + $0x10] sm:$0xf]
        %v1368 = vld [vmem:[#allocation13 + $0x14] sm:$0xf]
        %v1369 = vld [vmem:[#allocation13 + $0x18] sm:$0xf]
        %v1370 = vld [vmem:[#allocation13 + $0x1c] sm:$0xf]
        %v1371 = vld [vmem:[#allocation13 + $0x20] sm:$0xf]
        %v1372 = vld [vmem:[#allocation13 + $0x24] sm:$0xf]
        %v1373 = vld [vmem:[#allocation13 + $0x28] sm:$0xf]
        %v1374 = vld [vmem:[#allocation13 + $0x2c] sm:$0xf]
        %v1375 = vld [vmem:[#allocation13 + $0x30] sm:$0xf]
        %v1376 = vld [vmem:[#allocation13 + $0x34] sm:$0xf]
        %v1377 = vld [vmem:[#allocation13 + $0x38] sm:$0xf]
        %v1378 = vld [vmem:[#allocation13 + $0x3c] sm:$0xf]
        %v1395 = vunpack.c.l.b16 %v1363
        %v1396 = vunpack.c.l.b16 %v1364
        %v1397 = vunpack.c.l.b16 %v1365
        %v1398 = vunpack.c.l.b16 %v1366
        %v1399 = vunpack.c.l.b16 %v1367
        %v1400 = vunpack.c.l.b16 %v1368
        %v1401 = vunpack.c.l.b16 %v1369
        %v1402 = vunpack.c.l.b16 %v1370
        %v1403 = vunpack.c.l.b16 %v1371
        %v1404 = vunpack.c.l.b16 %v1372
        %v1405 = vunpack.c.l.b16 %v1373
        %v1406 = vunpack.c.l.b16 %v1374
        %v1407 = vunpack.c.l.b16 %v1375
        %v1408 = vunpack.c.l.b16 %v1376
        %v1409 = vunpack.c.l.b16 %v1377
        %v1410 = vunpack.c.l.b16 %v1378
        %v1411 = vpack.c.b16 %v1396, %v1395
        %v1412 = vpack.c.b16 %v1398, %v1397
        %v1413 = vpack.c.b16 %v1400, %v1399
        %v1414 = vpack.c.b16 %v1402, %v1401
        %v1415 = vpack.c.b16 %v1404, %v1403
        %v1416 = vpack.c.b16 %v1406, %v1405
        %v1417 = vpack.c.b16 %v1408, %v1407
        %v1418 = vpack.c.b16 %v1410, %v1409
        %1427 = vmatprep.subr.bf16.mxu0 0
        %1428 = vmatpush1.bf16.msra.mxu0 %v1411
        %1429 = vmatprep.subr.bf16.mxu0 0
        %1430 = vmatpush1.bf16.msra.mxu0 %v1412
        %1431 = vmatprep.subr.bf16.mxu0 0
        %1432 = vmatpush1.bf16.msra.mxu0 %v1413
        %1433 = vmatprep.subr.bf16.mxu0 0
        %1434 = vmatpush1.bf16.msra.mxu0 %v1414
        %1435 = vmatprep.subr.bf16.mxu0 0
        %1436 = vmatpush1.bf16.msra.mxu0 %v1415
        %1437 = vmatprep.subr.bf16.mxu0 0
        %1438 = vmatpush1.bf16.msra.mxu0 %v1416
        %1439 = vmatprep.subr.bf16.mxu0 0
        %1440 = vmatpush1.bf16.msra.mxu0 %v1417
        %1441 = vmatprep.subr.bf16.mxu0 0
        %1442 = vmatpush1.bf16.msra.mxu0 %v1418
        %1443 = vmatprep.subr.bf16.mxu0 0
        %1444 = vmatpush1.bf16.msra.mxu0 0
        %1445 = vmatprep.subr.bf16.mxu0 0
        %1446 = vmatpush1.bf16.msra.mxu0 0
        %1447 = vmatprep.subr.bf16.mxu0 0
        %1448 = vmatpush1.bf16.msra.mxu0 0
        %1449 = vmatprep.subr.bf16.mxu0 0
        %1450 = vmatpush1.bf16.msra.mxu0 0
        %1451 = vmatprep.subr.bf16.mxu0 0
        %1452 = vmatpush1.bf16.msra.mxu0 0
        %1453 = vmatprep.subr.bf16.mxu0 0
        %1454 = vmatpush1.bf16.msra.mxu0 0
        %1455 = vmatprep.subr.bf16.mxu0 0
        %1456 = vmatpush1.bf16.msra.mxu0 0
        %1457 = vmatprep.subr.bf16.mxu0 0
        %1458 = vmatpush1.bf16.msra.mxu0 0
        %1459 = vmatprep.mubr.bf16.mxu0 0
        %1460 = vmatmul.mubr.bf16.gmra.mrb[0].mxu0 %v1362
        %v1461 = vpop.f32.mrb[0].mxu0
        %v1462 = vadd.f32 0.0, %v1461
        %v1463 = vpop.f32.mrb[0].mxu0
        %v1464 = vpop.f32.mrb[0].mxu0
        %v1465 = vpop.f32.mrb[0].mxu0
        %1466 = vdwg.mxu0
        // Predicated region
        $region105: #{tpu_custom_call.1} parent=71 // pred_check
          %p1467 = pneg %p585
        $region106: #{tpu_custom_call.1} parent=71 // pred_check_branch
          %1469 = sbr.rel (%p1467) target = $region108
        $region107: #{tpu_custom_call.1} parent=71 // pred_region
          %v1470 = vld [vmem:[%s6] sm:$0x1]
          %v1472 = vlaneseq
          %v1473 = vshrl.u32 %v1472, 7
          %v1474 = vsub.s32 0, %v1473
          %v1475 = vrot.slane %v1470, %v1474
          %v1477 = vadd.f32 %v1462, %v1475
          %1478 = vst [vmem:[#allocation3] sm:$0xff] %v1477
        $region108: #{tpu_custom_call.1} parent=71 // pred_fallthru
          _
        %p1479 = scmp.gt.s32.totalorder %s38, 0
        // Predicated region
        $region109: #{tpu_custom_call.1} parent=71 // pred_check
          %p1480 = pneg %p1479
        $region110: #{tpu_custom_call.1} parent=71 // pred_check_branch
          %1482 = sbr.rel (%p1480) target = $region112
        $region111: #{tpu_custom_call.1} parent=71 // pred_region
          %v1483 = vld [vmem:[#allocation3] sm:$0xff]
          %v1484 = vadd.f32 %v1483, %v1462
          %1485 = vst [vmem:[#allocation3] sm:$0xff] %v1484
        $region112: #{tpu_custom_call.1} parent=71 // pred_fallthru
          _
        // Predicated region
        $region113: #{tpu_custom_call.1} parent=71 // pred_check
          %p1486 = pneg %p585
        $region114: #{tpu_custom_call.1} parent=71 // pred_check_branch
          %1488 = sbr.rel (%p1486) target = $region116
        $region115: #{tpu_custom_call.1} parent=71 // pred_region
          %v1489 = vld [vmem:[%s509] sm:$0xff]
          %v1490 = vld [vmem:[#allocation3] sm:$0xff]
          %v1491 = vadd.f32 %v1489, %v1490
          %v1492 = vld [vmem:[%s7] sm:$0x1]
          %v1493 = vld [vmem:[%s8] sm:$0x1]
          %1494 = vadd.xlane.f32.xlu0 %v1491
          %v1495 = vpop.xlane.xlu0 %1494
          %v1496 = vrcp.pop 128.0
          %v1497 = vmul.f32 %v1495, %v1496
          %v1498 = vsub.f32 %v1491, %v1497
          %v1499 = vmul.f32 %v1498, %v1498
          %1500 = vadd.xlane.f32.xlu0 %v1499
          %v1501 = vpop.xlane.xlu0 %1500
          %v1502 = vmul.f32 %v1501, %v1496
          %v1503 = vadd.f32 %v1502, 1e-05
          %v1504 = vrsqrt.pop %v1503
          %v1505 = vmul.f32 %v1498, %v1504
          %v1507 = vlaneseq
          %v1508 = vshrl.u32 %v1507, 7
          %v1509 = vsub.s32 0, %v1508
          %v1510 = vrot.slane %v1492, %v1509
          %v1512 = vmul.f32 %v1505, %v1510
          %v1514 = vlaneseq
          %v1515 = vshrl.u32 %v1514, 7
          %v1516 = vsub.s32 0, %v1515
          %v1517 = vrot.slane %v1493, %v1516
          %v1519 = vadd.f32 %v1512, %v1517
          %v1520 = vpack.c.bf16 %v1519, %v1519
          %v1521 = vld [vmem:[#allocation14] sm:$0xff]
          %v1522 = vld [vmem:[#allocation14 + $0x8] sm:$0xff]
          %v1523 = vld [vmem:[#allocation14 + $0x10] sm:$0xff]
          %v1524 = vld [vmem:[#allocation14 + $0x18] sm:$0xff]
          %v1525 = vld [vmem:[#allocation14 + $0x20] sm:$0xff]
          %v1526 = vld [vmem:[#allocation14 + $0x28] sm:$0xff]
          %v1527 = vld [vmem:[#allocation14 + $0x30] sm:$0xff]
          %v1528 = vld [vmem:[#allocation14 + $0x38] sm:$0xff]
          %v1529 = vld [vmem:[#allocation14 + $0x40] sm:$0xff]
          %v1530 = vld [vmem:[#allocation14 + $0x48] sm:$0xff]
          %v1531 = vld [vmem:[#allocation14 + $0x50] sm:$0xff]
          %v1532 = vld [vmem:[#allocation14 + $0x58] sm:$0xff]
          %v1533 = vld [vmem:[#allocation14 + $0x60] sm:$0xff]
          %v1534 = vld [vmem:[#allocation14 + $0x68] sm:$0xff]
          %v1535 = vld [vmem:[#allocation14 + $0x70] sm:$0xff]
          %v1536 = vld [vmem:[#allocation14 + $0x78] sm:$0xff]
          %v1537 = vld [vmem:[#allocation14 + $0x80] sm:$0xff]
          %v1538 = vld [vmem:[#allocation14 + $0x88] sm:$0xff]
          %v1539 = vld [vmem:[#allocation14 + $0x90] sm:$0xff]
          %v1540 = vld [vmem:[#allocation14 + $0x98] sm:$0xff]
          %v1541 = vld [vmem:[#allocation14 + $0xa0] sm:$0xff]
          %v1542 = vld [vmem:[#allocation14 + $0xa8] sm:$0xff]
          %v1543 = vld [vmem:[#allocation14 + $0xb0] sm:$0xff]
          %v1544 = vld [vmem:[#allocation14 + $0xb8] sm:$0xff]
          %v1545 = vld [vmem:[#allocation14 + $0xc0] sm:$0xff]
          %v1546 = vld [vmem:[#allocation14 + $0xc8] sm:$0xff]
          %v1547 = vld [vmem:[#allocation14 + $0xd0] sm:$0xff]
          %v1548 = vld [vmem:[#allocation14 + $0xd8] sm:$0xff]
          %v1549 = vld [vmem:[#allocation14 + $0xe0] sm:$0xff]
          %v1550 = vld [vmem:[#allocation14 + $0xe8] sm:$0xff]
          %v1551 = vld [vmem:[#allocation14 + $0xf0] sm:$0xff]
          %v1552 = vld [vmem:[#allocation14 + $0xf8] sm:$0xff]
          %v1553 = vld [vmem:[%s10] sm:$0xf]
          %v1555 = vlaneseq
          %v1556 = vshrl.u32 %v1555, 7
          %v1557 = vsub.s32 0, %v1556
          %v1558 = vrot.slane %v1553, %v1557
          %v1559 = vlaneseq
          %v1560 = vshrl.u32 %v1559, 7
          %v1561 = vsub.s32 1, %v1560
          %v1562 = vrot.slane %v1553, %v1561
          %v1563 = vlaneseq
          %v1564 = vshrl.u32 %v1563, 7
          %v1565 = vsub.s32 2, %v1564
          %v1566 = vrot.slane %v1553, %v1565
          %v1567 = vlaneseq
          %v1568 = vshrl.u32 %v1567, 7
          %v1569 = vsub.s32 3, %v1568
          %v1570 = vrot.slane %v1553, %v1569
          %v1607 = vunpack.c.l.b16 %v1521
          %v1608 = vunpack.c.h.b16 %v1521
          %v1609 = vunpack.c.l.b16 %v1522
          %v1610 = vunpack.c.h.b16 %v1522
          %v1611 = vunpack.c.l.b16 %v1523
          %v1612 = vunpack.c.h.b16 %v1523
          %v1613 = vunpack.c.l.b16 %v1524
          %v1614 = vunpack.c.h.b16 %v1524
          %v1615 = vunpack.c.l.b16 %v1525
          %v1616 = vunpack.c.h.b16 %v1525
          %v1617 = vunpack.c.l.b16 %v1526
          %v1618 = vunpack.c.h.b16 %v1526
          %v1619 = vunpack.c.l.b16 %v1527
          %v1620 = vunpack.c.h.b16 %v1527
          %v1621 = vunpack.c.l.b16 %v1528
          %v1622 = vunpack.c.h.b16 %v1528
          %v1623 = vunpack.c.l.b16 %v1529
          %v1624 = vunpack.c.h.b16 %v1529
          %v1625 = vunpack.c.l.b16 %v1530
          %v1626 = vunpack.c.h.b16 %v1530
          %v1627 = vunpack.c.l.b16 %v1531
          %v1628 = vunpack.c.h.b16 %v1531
          %v1629 = vunpack.c.l.b16 %v1532
          %v1630 = vunpack.c.h.b16 %v1532
          %v1631 = vunpack.c.l.b16 %v1533
          %v1632 = vunpack.c.h.b16 %v1533
          %v1633 = vunpack.c.l.b16 %v1534
          %v1634 = vunpack.c.h.b16 %v1534
          %v1635 = vunpack.c.l.b16 %v1535
          %v1636 = vunpack.c.h.b16 %v1535
          %v1637 = vunpack.c.l.b16 %v1536
          %v1638 = vunpack.c.h.b16 %v1536
          %v1639 = vunpack.c.l.b16 %v1537
          %v1640 = vunpack.c.h.b16 %v1537
          %v1641 = vunpack.c.l.b16 %v1538
          %v1642 = vunpack.c.h.b16 %v1538
          %v1643 = vunpack.c.l.b16 %v1539
          %v1644 = vunpack.c.h.b16 %v1539
          %v1645 = vunpack.c.l.b16 %v1540
          %v1646 = vunpack.c.h.b16 %v1540
          %v1647 = vunpack.c.l.b16 %v1541
          %v1648 = vunpack.c.h.b16 %v1541
          %v1649 = vunpack.c.l.b16 %v1542
          %v1650 = vunpack.c.h.b16 %v1542
          %v1651 = vunpack.c.l.b16 %v1543
          %v1652 = vunpack.c.h.b16 %v1543
          %v1653 = vunpack.c.l.b16 %v1544
          %v1654 = vunpack.c.h.b16 %v1544
          %v1655 = vunpack.c.l.b16 %v1545
          %v1656 = vunpack.c.h.b16 %v1545
          %v1657 = vunpack.c.l.b16 %v1546
          %v1658 = vunpack.c.h.b16 %v1546
          %v1659 = vunpack.c.l.b16 %v1547
          %v1660 = vunpack.c.h.b16 %v1547
          %v1661 = vunpack.c.l.b16 %v1548
          %v1662 = vunpack.c.h.b16 %v1548
          %v1663 = vunpack.c.l.b16 %v1549
          %v1664 = vunpack.c.h.b16 %v1549
          %v1665 = vunpack.c.l.b16 %v1550
          %v1666 = vunpack.c.h.b16 %v1550
          %v1667 = vunpack.c.l.b16 %v1551
          %v1668 = vunpack.c.h.b16 %v1551
          %v1669 = vunpack.c.l.b16 %v1552
          %v1670 = vunpack.c.h.b16 %v1552
          %v1671 = vpack.c.b16 %v1611, %v1607
          %v1672 = vpack.c.b16 %v1612, %v1608
          %v1673 = vpack.c.b16 %v1613, %v1609
          %v1674 = vpack.c.b16 %v1614, %v1610
          %v1675 = vpack.c.b16 %v1619, %v1615
          %v1676 = vpack.c.b16 %v1620, %v1616
          %v1677 = vpack.c.b16 %v1621, %v1617
          %v1678 = vpack.c.b16 %v1622, %v1618
          %v1679 = vpack.c.b16 %v1627, %v1623
          %v1680 = vpack.c.b16 %v1628, %v1624
          %v1681 = vpack.c.b16 %v1629, %v1625
          %v1682 = vpack.c.b16 %v1630, %v1626
          %v1683 = vpack.c.b16 %v1635, %v1631
          %v1684 = vpack.c.b16 %v1636, %v1632
          %v1685 = vpack.c.b16 %v1637, %v1633
          %v1686 = vpack.c.b16 %v1638, %v1634
          %v1687 = vpack.c.b16 %v1643, %v1639
          %v1688 = vpack.c.b16 %v1644, %v1640
          %v1689 = vpack.c.b16 %v1645, %v1641
          %v1690 = vpack.c.b16 %v1646, %v1642
          %v1691 = vpack.c.b16 %v1651, %v1647
          %v1692 = vpack.c.b16 %v1652, %v1648
          %v1693 = vpack.c.b16 %v1653, %v1649
          %v1694 = vpack.c.b16 %v1654, %v1650
          %v1695 = vpack.c.b16 %v1659, %v1655
          %v1696 = vpack.c.b16 %v1660, %v1656
          %v1697 = vpack.c.b16 %v1661, %v1657
          %v1698 = vpack.c.b16 %v1662, %v1658
          %v1699 = vpack.c.b16 %v1667, %v1663
          %v1700 = vpack.c.b16 %v1668, %v1664
          %v1701 = vpack.c.b16 %v1669, %v1665
          %v1702 = vpack.c.b16 %v1670, %v1666
          %1735 = vmatprep.subr.bf16.mxu0 %v1672
          %1736 = vmatpush1.bf16.msra.mxu0 %v1671
          %1737 = vmatprep.subr.bf16.mxu0 %v1676
          %1738 = vmatpush1.bf16.msra.mxu0 %v1675
          %1739 = vmatprep.subr.bf16.mxu0 %v1680
          %1740 = vmatpush1.bf16.msra.mxu0 %v1679
          %1741 = vmatprep.subr.bf16.mxu0 %v1684
          %1742 = vmatpush1.bf16.msra.mxu0 %v1683
          %1743 = vmatprep.subr.bf16.mxu0 %v1688
          %1744 = vmatpush1.bf16.msra.mxu0 %v1687
          %1745 = vmatprep.subr.bf16.mxu0 %v1692
          %1746 = vmatpush1.bf16.msra.mxu0 %v1691
          %1747 = vmatprep.subr.bf16.mxu0 %v1696
          %1748 = vmatpush1.bf16.msra.mxu0 %v1695
          %1749 = vmatprep.subr.bf16.mxu0 %v1700
          %1750 = vmatpush1.bf16.msra.mxu0 %v1699
          %1751 = vmatprep.subr.bf16.mxu0 0
          %1752 = vmatpush1.bf16.msra.mxu0 0
          %1753 = vmatprep.subr.bf16.mxu0 0
          %1754 = vmatpush1.bf16.msra.mxu0 0
          %1755 = vmatprep.subr.bf16.mxu0 0
          %1756 = vmatpush1.bf16.msra.mxu0 0
          %1757 = vmatprep.subr.bf16.mxu0 0
          %1758 = vmatpush1.bf16.msra.mxu0 0
          %1759 = vmatprep.subr.bf16.mxu0 0
          %1760 = vmatpush1.bf16.msra.mxu0 0
          %1761 = vmatprep.subr.bf16.mxu0 0
          %1762 = vmatpush1.bf16.msra.mxu0 0
          %1763 = vmatprep.subr.bf16.mxu0 0
          %1764 = vmatpush1.bf16.msra.mxu0 0
          %1765 = vmatprep.subr.bf16.mxu0 0
          %1766 = vmatpush1.bf16.msra.mxu0 0
          %1767 = vmatprep.mubr.bf16.mxu0 0
          %1768 = vmatmul.mubr.bf16.gmra.mrb[0].mxu0 %v1520
          %v1769 = vpop.f32.mrb[0].mxu0
          %v1770 = vadd.f32 %v1558, %v1769
          %v1771 = vpop.f32.mrb[0].mxu0
          %v1772 = vadd.f32 %v1562, %v1771
          %v1773 = vpop.f32.mrb[0].mxu0
          %v1774 = vpop.f32.mrb[0].mxu0
          %1775 = vdwg.mxu0
          %1776 = vmatprep.subr.bf16.mxu0 %v1674
          %1777 = vmatpush1.bf16.msra.mxu0 %v1673
          %1778 = vmatprep.subr.bf16.mxu0 %v1678
          %1779 = vmatpush1.bf16.msra.mxu0 %v1677
          %1780 = vmatprep.subr.bf16.mxu0 %v1682
          %1781 = vmatpush1.bf16.msra.mxu0 %v1681
          %1782 = vmatprep.subr.bf16.mxu0 %v1686
          %1783 = vmatpush1.bf16.msra.mxu0 %v1685
          %1784 = vmatprep.subr.bf16.mxu0 %v1690
          %1785 = vmatpush1.bf16.msra.mxu0 %v1689
          %1786 = vmatprep.subr.bf16.mxu0 %v1694
          %1787 = vmatpush1.bf16.msra.mxu0 %v1693
          %1788 = vmatprep.subr.bf16.mxu0 %v1698
          %1789 = vmatpush1.bf16.msra.mxu0 %v1697
          %1790 = vmatprep.subr.bf16.mxu0 %v1702
          %1791 = vmatpush1.bf16.msra.mxu0 %v1701
          %1792 = vmatprep.subr.bf16.mxu0 0
          %1793 = vmatpush1.bf16.msra.mxu0 0
          %1794 = vmatprep.subr.bf16.mxu0 0
          %1795 = vmatpush1.bf16.msra.mxu0 0
          %1796 = vmatprep.subr.bf16.mxu0 0
          %1797 = vmatpush1.bf16.msra.mxu0 0
          %1798 = vmatprep.subr.bf16.mxu0 0
          %1799 = vmatpush1.bf16.msra.mxu0 0
          %1800 = vmatprep.subr.bf16.mxu0 0
          %1801 = vmatpush1.bf16.msra.mxu0 0
          %1802 = vmatprep.subr.bf16.mxu0 0
          %1803 = vmatpush1.bf16.msra.mxu0 0
          %1804 = vmatprep.subr.bf16.mxu0 0
          %1805 = vmatpush1.bf16.msra.mxu0 0
          %1806 = vmatprep.subr.bf16.mxu0 0
          %1807 = vmatpush1.bf16.msra.mxu0 0
          %1808 = vmatprep.mubr.bf16.mxu0 0
          %1809 = vmatmul.mubr.bf16.gmra.mrb[0].mxu0 %v1520
          %v1810 = vpop.f32.mrb[0].mxu0
          %v1811 = vadd.f32 %v1566, %v1810
          %v1812 = vpop.f32.mrb[0].mxu0
          %v1813 = vadd.f32 %v1570, %v1812
          %v1814 = vpop.f32.mrb[0].mxu0
          %v1815 = vpop.f32.mrb[0].mxu0
          %1816 = vdwg.mxu0
          %v1817 = vmul.f32 %v1770, 0.5
          %v1818 = vmul.f32 %v1772, 0.5
          %v1819 = vmul.f32 %v1811, 0.5
          %v1820 = vmul.f32 %v1813, 0.5
          %v1821 = vmul.f32 %v1770, 0.044715
          %v1822 = vmul.f32 %v1772, 0.044715
          %v1823 = vmul.f32 %v1811, 0.044715
          %v1824 = vmul.f32 %v1813, 0.044715
          %v1825 = vmul.f32 %v1821, %v1770
          %v1826 = vmul.f32 %v1822, %v1772
          %v1827 = vmul.f32 %v1823, %v1811
          %v1828 = vmul.f32 %v1824, %v1813
          %v1829 = vmul.f32 %v1825, %v1770
          %v1830 = vmul.f32 %v1826, %v1772
          %v1831 = vmul.f32 %v1827, %v1811
          %v1832 = vmul.f32 %v1828, %v1813
          %v1833 = vadd.f32 %v1770, %v1829
          %v1834 = vadd.f32 %v1772, %v1830
          %v1835 = vadd.f32 %v1811, %v1831
          %v1836 = vadd.f32 %v1813, %v1832
          %v1837 = vmul.f32 %v1833, 0.7978846
          %v1838 = vmul.f32 %v1834, 0.7978846
          %v1839 = vmul.f32 %v1835, 0.7978846
          %v1840 = vmul.f32 %v1836, 0.7978846
          %v1841 = vtanh.pop %v1837
          %v1842 = vtanh.pop %v1838
          %v1843 = vtanh.pop %v1839
          %v1844 = vtanh.pop %v1840
          %v1845 = vadd.f32 %v1841, 1.0
          %v1846 = vadd.f32 %v1842, 1.0
          %v1847 = vadd.f32 %v1843, 1.0
          %v1848 = vadd.f32 %v1844, 1.0
          %v1849 = vmul.f32 %v1817, %v1845
          %v1850 = vmul.f32 %v1818, %v1846
          %v1851 = vmul.f32 %v1819, %v1847
          %v1852 = vmul.f32 %v1820, %v1848
          %v1853 = vpack.c.bf16 %v1849, %v1849
          %v1854 = vpack.c.bf16 %v1850, %v1850
          %v1855 = vpack.c.bf16 %v1851, %v1851
          %v1856 = vpack.c.bf16 %v1852, %v1852
          %v1857 = vld [vmem:[#allocation16] sm:$0xf]
          %v1858 = vld [vmem:[#allocation16 + $0x4] sm:$0xf]
          %v1859 = vld [vmem:[#allocation16 + $0x8] sm:$0xf]
          %v1860 = vld [vmem:[#allocation16 + $0xc] sm:$0xf]
          %v1861 = vld [vmem:[#allocation16 + $0x10] sm:$0xf]
          %v1862 = vld [vmem:[#allocation16 + $0x14] sm:$0xf]
          %v1863 = vld [vmem:[#allocation16 + $0x18] sm:$0xf]
          %v1864 = vld [vmem:[#allocation16 + $0x1c] sm:$0xf]
          %v1865 = vld [vmem:[#allocation16 + $0x20] sm:$0xf]
          %v1866 = vld [vmem:[#allocation16 + $0x24] sm:$0xf]
          %v1867 = vld [vmem:[#allocation16 + $0x28] sm:$0xf]
          %v1868 = vld [vmem:[#allocation16 + $0x2c] sm:$0xf]
          %v1869 = vld [vmem:[#allocation16 + $0x30] sm:$0xf]
          %v1870 = vld [vmem:[#allocation16 + $0x34] sm:$0xf]
          %v1871 = vld [vmem:[#allocation16 + $0x38] sm:$0xf]
          %v1872 = vld [vmem:[#allocation16 + $0x3c] sm:$0xf]
          %v1873 = vld [vmem:[#allocation16 + $0x40] sm:$0xf]
          %v1874 = vld [vmem:[#allocation16 + $0x44] sm:$0xf]
          %v1875 = vld [vmem:[#allocation16 + $0x48] sm:$0xf]
          %v1876 = vld [vmem:[#allocation16 + $0x4c] sm:$0xf]
          %v1877 = vld [vmem:[#allocation16 + $0x50] sm:$0xf]
          %v1878 = vld [vmem:[#allocation16 + $0x54] sm:$0xf]
          %v1879 = vld [vmem:[#allocation16 + $0x58] sm:$0xf]
          %v1880 = vld [vmem:[#allocation16 + $0x5c] sm:$0xf]
          %v1881 = vld [vmem:[#allocation16 + $0x60] sm:$0xf]
          %v1882 = vld [vmem:[#allocation16 + $0x64] sm:$0xf]
          %v1883 = vld [vmem:[#allocation16 + $0x68] sm:$0xf]
          %v1884 = vld [vmem:[#allocation16 + $0x6c] sm:$0xf]
          %v1885 = vld [vmem:[#allocation16 + $0x70] sm:$0xf]
          %v1886 = vld [vmem:[#allocation16 + $0x74] sm:$0xf]
          %v1887 = vld [vmem:[#allocation16 + $0x78] sm:$0xf]
          %v1888 = vld [vmem:[#allocation16 + $0x7c] sm:$0xf]
          %v1889 = vld [vmem:[#allocation16 + $0x80] sm:$0xf]
          %v1890 = vld [vmem:[#allocation16 + $0x84] sm:$0xf]
          %v1891 = vld [vmem:[#allocation16 + $0x88] sm:$0xf]
          %v1892 = vld [vmem:[#allocation16 + $0x8c] sm:$0xf]
          %v1893 = vld [vmem:[#allocation16 + $0x90] sm:$0xf]
          %v1894 = vld [vmem:[#allocation16 + $0x94] sm:$0xf]
          %v1895 = vld [vmem:[#allocation16 + $0x98] sm:$0xf]
          %v1896 = vld [vmem:[#allocation16 + $0x9c] sm:$0xf]
          %v1897 = vld [vmem:[#allocation16 + $0xa0] sm:$0xf]
          %v1898 = vld [vmem:[#allocation16 + $0xa4] sm:$0xf]
          %v1899 = vld [vmem:[#allocation16 + $0xa8] sm:$0xf]
          %v1900 = vld [vmem:[#allocation16 + $0xac] sm:$0xf]
          %v1901 = vld [vmem:[#allocation16 + $0xb0] sm:$0xf]
          %v1902 = vld [vmem:[#allocation16 + $0xb4] sm:$0xf]
          %v1903 = vld [vmem:[#allocation16 + $0xb8] sm:$0xf]
          %v1904 = vld [vmem:[#allocation16 + $0xbc] sm:$0xf]
          %v1905 = vld [vmem:[#allocation16 + $0xc0] sm:$0xf]
          %v1906 = vld [vmem:[#allocation16 + $0xc4] sm:$0xf]
          %v1907 = vld [vmem:[#allocation16 + $0xc8] sm:$0xf]
          %v1908 = vld [vmem:[#allocation16 + $0xcc] sm:$0xf]
          %v1909 = vld [vmem:[#allocation16 + $0xd0] sm:$0xf]
          %v1910 = vld [vmem:[#allocation16 + $0xd4] sm:$0xf]
          %v1911 = vld [vmem:[#allocation16 + $0xd8] sm:$0xf]
          %v1912 = vld [vmem:[#allocation16 + $0xdc] sm:$0xf]
          %v1913 = vld [vmem:[#allocation16 + $0xe0] sm:$0xf]
          %v1914 = vld [vmem:[#allocation16 + $0xe4] sm:$0xf]
          %v1915 = vld [vmem:[#allocation16 + $0xe8] sm:$0xf]
          %v1916 = vld [vmem:[#allocation16 + $0xec] sm:$0xf]
          %v1917 = vld [vmem:[#allocation16 + $0xf0] sm:$0xf]
          %v1918 = vld [vmem:[#allocation16 + $0xf4] sm:$0xf]
          %v1919 = vld [vmem:[#allocation16 + $0xf8] sm:$0xf]
          %v1920 = vld [vmem:[#allocation16 + $0xfc] sm:$0xf]
          %v1985 = vunpack.c.l.b16 %v1857
          %v1986 = vunpack.c.l.b16 %v1858
          %v1987 = vunpack.c.l.b16 %v1859
          %v1988 = vunpack.c.l.b16 %v1860
          %v1989 = vunpack.c.l.b16 %v1861
          %v1990 = vunpack.c.l.b16 %v1862
          %v1991 = vunpack.c.l.b16 %v1863
          %v1992 = vunpack.c.l.b16 %v1864
          %v1993 = vunpack.c.l.b16 %v1865
          %v1994 = vunpack.c.l.b16 %v1866
          %v1995 = vunpack.c.l.b16 %v1867
          %v1996 = vunpack.c.l.b16 %v1868
          %v1997 = vunpack.c.l.b16 %v1869
          %v1998 = vunpack.c.l.b16 %v1870
          %v1999 = vunpack.c.l.b16 %v1871
          %v2000 = vunpack.c.l.b16 %v1872
          %v2001 = vunpack.c.l.b16 %v1873
          %v2002 = vunpack.c.l.b16 %v1874
          %v2003 = vunpack.c.l.b16 %v1875
          %v2004 = vunpack.c.l.b16 %v1876
          %v2005 = vunpack.c.l.b16 %v1877
          %v2006 = vunpack.c.l.b16 %v1878
          %v2007 = vunpack.c.l.b16 %v1879
          %v2008 = vunpack.c.l.b16 %v1880
          %v2009 = vunpack.c.l.b16 %v1881
          %v2010 = vunpack.c.l.b16 %v1882
          %v2011 = vunpack.c.l.b16 %v1883
          %v2012 = vunpack.c.l.b16 %v1884
          %v2013 = vunpack.c.l.b16 %v1885
          %v2014 = vunpack.c.l.b16 %v1886
          %v2015 = vunpack.c.l.b16 %v1887
          %v2016 = vunpack.c.l.b16 %v1888
          %v2017 = vunpack.c.l.b16 %v1889
          %v2018 = vunpack.c.l.b16 %v1890
          %v2019 = vunpack.c.l.b16 %v1891
          %v2020 = vunpack.c.l.b16 %v1892
          %v2021 = vunpack.c.l.b16 %v1893
          %v2022 = vunpack.c.l.b16 %v1894
          %v2023 = vunpack.c.l.b16 %v1895
          %v2024 = vunpack.c.l.b16 %v1896
          %v2025 = vunpack.c.l.b16 %v1897
          %v2026 = vunpack.c.l.b16 %v1898
          %v2027 = vunpack.c.l.b16 %v1899
          %v2028 = vunpack.c.l.b16 %v1900
          %v2029 = vunpack.c.l.b16 %v1901
          %v2030 = vunpack.c.l.b16 %v1902
          %v2031 = vunpack.c.l.b16 %v1903
          %v2032 = vunpack.c.l.b16 %v1904
          %v2033 = vunpack.c.l.b16 %v1905
          %v2034 = vunpack.c.l.b16 %v1906
          %v2035 = vunpack.c.l.b16 %v1907
          %v2036 = vunpack.c.l.b16 %v1908
          %v2037 = vunpack.c.l.b16 %v1909
          %v2038 = vunpack.c.l.b16 %v1910
          %v2039 = vunpack.c.l.b16 %v1911
          %v2040 = vunpack.c.l.b16 %v1912
          %v2041 = vunpack.c.l.b16 %v1913
          %v2042 = vunpack.c.l.b16 %v1914
          %v2043 = vunpack.c.l.b16 %v1915
          %v2044 = vunpack.c.l.b16 %v1916
          %v2045 = vunpack.c.l.b16 %v1917
          %v2046 = vunpack.c.l.b16 %v1918
          %v2047 = vunpack.c.l.b16 %v1919
          %v2048 = vunpack.c.l.b16 %v1920
          %v2049 = vpack.c.b16 %v1986, %v1985
          %v2050 = vpack.c.b16 %v1988, %v1987
          %v2051 = vpack.c.b16 %v1990, %v1989
          %v2052 = vpack.c.b16 %v1992, %v1991
          %v2053 = vpack.c.b16 %v1994, %v1993
          %v2054 = vpack.c.b16 %v1996, %v1995
          %v2055 = vpack.c.b16 %v1998, %v1997
          %v2056 = vpack.c.b16 %v2000, %v1999
          %v2057 = vpack.c.b16 %v2002, %v2001
          %v2058 = vpack.c.b16 %v2004, %v2003
          %v2059 = vpack.c.b16 %v2006, %v2005
          %v2060 = vpack.c.b16 %v2008, %v2007
          %v2061 = vpack.c.b16 %v2010, %v2009
          %v2062 = vpack.c.b16 %v2012, %v2011
          %v2063 = vpack.c.b16 %v2014, %v2013
          %v2064 = vpack.c.b16 %v2016, %v2015
          %v2065 = vpack.c.b16 %v2018, %v2017
          %v2066 = vpack.c.b16 %v2020, %v2019
          %v2067 = vpack.c.b16 %v2022, %v2021
          %v2068 = vpack.c.b16 %v2024, %v2023
          %v2069 = vpack.c.b16 %v2026, %v2025
          %v2070 = vpack.c.b16 %v2028, %v2027
          %v2071 = vpack.c.b16 %v2030, %v2029
          %v2072 = vpack.c.b16 %v2032, %v2031
          %v2073 = vpack.c.b16 %v2034, %v2033
          %v2074 = vpack.c.b16 %v2036, %v2035
          %v2075 = vpack.c.b16 %v2038, %v2037
          %v2076 = vpack.c.b16 %v2040, %v2039
          %v2077 = vpack.c.b16 %v2042, %v2041
          %v2078 = vpack.c.b16 %v2044, %v2043
          %v2079 = vpack.c.b16 %v2046, %v2045
          %v2080 = vpack.c.b16 %v2048, %v2047
          %2113 = vmatprep.subr.bf16.mxu0 0
          %2114 = vmatpush1.bf16.msra.mxu0 %v2049
          %2115 = vmatprep.subr.bf16.mxu0 0
          %2116 = vmatpush1.bf16.msra.mxu0 %v2050
          %2117 = vmatprep.subr.bf16.mxu0 0
          %2118 = vmatpush1.bf16.msra.mxu0 %v2051
          %2119 = vmatprep.subr.bf16.mxu0 0
          %2120 = vmatpush1.bf16.msra.mxu0 %v2052
          %2121 = vmatprep.subr.bf16.mxu0 0
          %2122 = vmatpush1.bf16.msra.mxu0 %v2053
          %2123 = vmatprep.subr.bf16.mxu0 0
          %2124 = vmatpush1.bf16.msra.mxu0 %v2054
          %2125 = vmatprep.subr.bf16.mxu0 0
          %2126 = vmatpush1.bf16.msra.mxu0 %v2055
          %2127 = vmatprep.subr.bf16.mxu0 0
          %2128 = vmatpush1.bf16.msra.mxu0 %v2056
          %2129 = vmatprep.subr.bf16.mxu0 0
          %2130 = vmatpush1.bf16.msra.mxu0 %v2057
          %2131 = vmatprep.subr.bf16.mxu0 0
          %2132 = vmatpush1.bf16.msra.mxu0 %v2058
          %2133 = vmatprep.subr.bf16.mxu0 0
          %2134 = vmatpush1.bf16.msra.mxu0 %v2059
          %2135 = vmatprep.subr.bf16.mxu0 0
          %2136 = vmatpush1.bf16.msra.mxu0 %v2060
          %2137 = vmatprep.subr.bf16.mxu0 0
          %2138 = vmatpush1.bf16.msra.mxu0 %v2061
          %2139 = vmatprep.subr.bf16.mxu0 0
          %2140 = vmatpush1.bf16.msra.mxu0 %v2062
          %2141 = vmatprep.subr.bf16.mxu0 0
          %2142 = vmatpush1.bf16.msra.mxu0 %v2063
          %2143 = vmatprep.subr.bf16.mxu0 0
          %2144 = vmatpush1.bf16.msra.mxu0 %v2064
          %2145 = vmatprep.mubr.bf16.mxu0 %v1854
          %2146 = vmatmul.mubr.bf16.gmra.mrb[0].mxu0 %v1853
          %v2147 = vpop.f32.mrb[0].mxu0
          %v2148 = vadd.f32 0.0, %v2147
          %v2149 = vpop.f32.mrb[0].mxu0
          %v2150 = vpop.f32.mrb[0].mxu0
          %v2151 = vpop.f32.mrb[0].mxu0
          %2152 = vdwg.mxu0
          %2153 = vmatprep.subr.bf16.mxu0 0
          %2154 = vmatpush1.bf16.msra.mxu0 %v2065
          %2155 = vmatprep.subr.bf16.mxu0 0
          %2156 = vmatpush1.bf16.msra.mxu0 %v2066
          %2157 = vmatprep.subr.bf16.mxu0 0
          %2158 = vmatpush1.bf16.msra.mxu0 %v2067
          %2159 = vmatprep.subr.bf16.mxu0 0
          %2160 = vmatpush1.bf16.msra.mxu0 %v2068
          %2161 = vmatprep.subr.bf16.mxu0 0
          %2162 = vmatpush1.bf16.msra.mxu0 %v2069
          %2163 = vmatprep.subr.bf16.mxu0 0
          %2164 = vmatpush1.bf16.msra.mxu0 %v2070
          %2165 = vmatprep.subr.bf16.mxu0 0
          %2166 = vmatpush1.bf16.msra.mxu0 %v2071
          %2167 = vmatprep.subr.bf16.mxu0 0
          %2168 = vmatpush1.bf16.msra.mxu0 %v2072
          %2169 = vmatprep.subr.bf16.mxu0 0
          %2170 = vmatpush1.bf16.msra.mxu0 %v2073
          %2171 = vmatprep.subr.bf16.mxu0 0
          %2172 = vmatpush1.bf16.msra.mxu0 %v2074
          %2173 = vmatprep.subr.bf16.mxu0 0
          %2174 = vmatpush1.bf16.msra.mxu0 %v2075
          %2175 = vmatprep.subr.bf16.mxu0 0
          %2176 = vmatpush1.bf16.msra.mxu0 %v2076
          %2177 = vmatprep.subr.bf16.mxu0 0
          %2178 = vmatpush1.bf16.msra.mxu0 %v2077
          %2179 = vmatprep.subr.bf16.mxu0 0
          %2180 = vmatpush1.bf16.msra.mxu0 %v2078
          %2181 = vmatprep.subr.bf16.mxu0 0
          %2182 = vmatpush1.bf16.msra.mxu0 %v2079
          %2183 = vmatprep.subr.bf16.mxu0 0
          %2184 = vmatpush1.bf16.msra.mxu0 %v2080
          %2185 = vmatprep.mubr.bf16.mxu0 %v1856
          %2186 = vmatmul.mubr.bf16.gmra.mrb[0].mxu0 %v1855
          %v2187 = vpop.f32.mrb[0].mxu0
          %v2188 = vadd.f32 %v2148, %v2187
          %v2189 = vpop.f32.mrb[0].mxu0
          %v2190 = vpop.f32.mrb[0].mxu0
          %v2191 = vpop.f32.mrb[0].mxu0
          %2192 = vdwg.mxu0
          %v2193 = vadd.f32 %v1491, %v2188
          %v2194 = vld [vmem:[%s12] sm:$0x1]
          %v2196 = vlaneseq
          %v2197 = vshrl.u32 %v2196, 7
          %v2198 = vsub.s32 0, %v2197
          %v2199 = vrot.slane %v2194, %v2198
          %v2201 = vadd.f32 %v2193, %v2199
          %2202 = vst [vmem:[%s579] sm:$0xff] %v2201
        $region116: #{tpu_custom_call.1} parent=71 // pred_fallthru
          _
        %s2203 = sand.u32 %s346, 1
        %s2204 = scalar_lea.sflag [#allocation7], %s2203
        %s2205 = sand.u32 %s346, 1
        %s2206 = smul.addr %s2205, 8
        %s2207 = scalar_lea.vmem [#allocation17], %s2206
        // Predicated region
        $region117: #{tpu_custom_call.1} parent=71 // pred_check
          %p2208 = pneg %p356
        $region118: #{tpu_custom_call.1} parent=71 // pred_check_branch
          %2210 = sbr.rel (%p2208) target = $region120
        $region119: #{tpu_custom_call.1} parent=71 // pred_region
          %s2212 = ssub.s32 128, 128
          %2213 = vsyncadd %s2204, %s2212
          %s2214 = smul.addr %s37, 128
          %s2215 = scalar_lea.hbm %s13, %s2214
          %s2217 = sshll.u32 %s2207, 4
          %s2218 = int_to_ptr.vmem [resolvable:$true] %s2217
          %2220 = dma.vmem_to_hbm [thread:$0]  %s2218, 128, %s2215, %s2204
        $region120: #{tpu_custom_call.1} parent=71 // pred_fallthru
          _
      $region72: #{tpu_custom_call.1} parent=5 // pred_fallthru
        _
      %p2221 = scmp.le.s32.totalorder 2, %s28
      // Predicated region
      $region121: #{tpu_custom_call.1} parent=5 // pred_check
        %p2222 = pneg %p2221
      $region122: #{tpu_custom_call.1} parent=5 // pred_check_branch
        %2224 = sbr.rel (%p2222) target = $region124
      $region123: #{tpu_custom_call.1} parent=5 // pred_region
        %s2225 = ssub.s32 %s28, 2
        // Predicated region
        $region125: #{tpu_custom_call.1} parent=123 // pred_check
          %p2226 = pneg %p362
        $region126: #{tpu_custom_call.1} parent=123 // pred_check_branch
          %2228 = sbr.rel (%p2226) target = $region128
        $region127: #{tpu_custom_call.1} parent=123 // pred_region
          %s2229 = sand.u32 %s347, 1
          %s2230 = scalar_lea.sflag [#allocation7], %s2229
          %s2231 = sand.u32 %s347, 1
          %s2232 = smul.addr %s2231, 8
          %s2233 = scalar_lea.vmem [#allocation17], %s2232
          %2234 = dma.done %s2230, 128
        $region128: #{tpu_custom_call.1} parent=123 // pred_fallthru
          _
      $region124: #{tpu_custom_call.1} parent=5 // pred_fallthru
        _
    $region6: #{tpu_custom_call.1} parent=1 // loop_footer
      %s32 = sadd.s32 1, %s28
    $region7: #{tpu_custom_call.1} parent=1 // loop_footer_branch
      %27 = sbr.rel target = $region3
    $region8: #{tpu_custom_call.1} parent=1 // loop_exit
      _
    %2235 = vsyncpa [#allocation6], 1
    %s2236 = scalar_lea.sflag [#allocation6], 1
    %2237 = vsyncpa %s2236, 1
    %2238 = vsyncpa [#allocation9], 1
    %2239 = vsyncpa [#allocation12], 1
    %2240 = vsyncpa [#allocation15], 1
    %2241 = vsyncpa [#allocation7], 1
    %s2242 = scalar_lea.sflag [#allocation7], 1
    %2243 = vsyncpa %s2242, 1

</llo_original>
